<compile_context>
chip_gen: v6e
topology: v6e:2x2x1
jax: 0.10.0
libtpu: 0.0.40
codegen_flags: <defaults>
</compile_context>

<pallas_src>
import functools
import math

import jax
import jax.numpy as jnp
from jax.experimental import pallas as pl
from jax.experimental.pallas import tpu as pltpu

# ----------------------------- configuration -----------------------------
IN_CHANNELS = 32          # GroupNorm(32, C) => C must be a multiple of 32
N_HEADS = 2
D_HEAD = 16
INNER = N_HEADS * D_HEAD  # 32
NUM_GROUPS = 32
FF_MULT = 4               # FeedForward inner dim = INNER * 4 (GEGLU)
GN_EPS = 1e-6
LN_EPS = 1e-5

MATMUL_DT = jnp.bfloat16  # MXU-native input dtype; accumulation stays f32.

# Rows of the packed small-vector parameter array (gamma/beta/bias), each padded
# to max(C, INNER) lanes.
(VEC_GN_G, VEC_GN_B, VEC_B_IN,
 VEC_LN1_G, VEC_LN1_B, VEC_BO1,
 VEC_LN2_G, VEC_LN2_B, VEC_BO2,
 VEC_LN3_G, VEC_LN3_B, VEC_B_FF2, VEC_B_OUT, N_VEC_ROWS) = range(14)


# ------------------------------- helpers ----------------------------------
def _gelu(x):
    # exact (erf) GELU, matching torch.nn.functional.gelu default
    return 0.5 * x * (1.0 + jax.lax.erf(x * (1.0 / math.sqrt(2.0))))


def _layer_norm(x, g, b):
    mu = jnp.mean(x, axis=-1, keepdims=True)
    var = jnp.mean((x - mu) ** 2, axis=-1, keepdims=True)
    return (x - mu) * jax.lax.rsqrt(var + LN_EPS) * g + b


def _attention(hx, bt, hw, w_qkv, w_o, b_o, n_heads, d_head):
    """Multi-head self-attention, computed independently per image.

    hx:    (R, inner) f32 (already layer-normed), R = bt*hw
    w_qkv: (inner, 3*inner) bf16 fused Q|K|V projection
    w_o:   (inner, inner)   bf16 output projection
    """
    inner = n_heads * d_head
    r = bt * hw
    # Fused Q|K|V: one wide MXU pass instead of three narrow (N=inner) ones.
    qkv = jnp.dot(hx.astype(MATMUL_DT), w_qkv,
                  preferred_element_type=jnp.float32)          # (R, 3*inner) f32
    qkv = qkv.reshape(bt, hw, 3 * inner)
    scale = d_head ** -0.5
    out = jnp.zeros((r, inner), jnp.float32)
    # TODO(synk): for HW >~ 2k (v7x, 64 MiB VMEM) tile this over KV blocks with an
    # online softmax instead of materializing the full (hw, hw) score matrix.
    for h in range(n_heads):
        qh = qkv[:, :, h * d_head:(h + 1) * d_head]
        kh = qkv[:, :, inner + h * d_head:inner + (h + 1) * d_head]
        vh = qkv[:, :, 2 * inner + h * d_head:2 * inner + (h + 1) * d_head]
        # Batched contraction over d: no explicit kh.T transpose.
        sim = jnp.einsum("bqd,bkd->bqk",
                         qh.astype(MATMUL_DT), kh.astype(MATMUL_DT),
                         preferred_element_type=jnp.float32) * scale
        sim = sim - jnp.max(sim, axis=-1, keepdims=True)
        p = jnp.exp(sim)
        # EUP approximate reciprocal (otherwise-idle slot) instead of a VPU divide.
        p = p * pl.reciprocal(jnp.sum(p, axis=-1, keepdims=True), approx=True)
        oh = jnp.einsum("bqk,bkd->bqd",
                        p.astype(MATMUL_DT), vh.astype(MATMUL_DT),
                        preferred_element_type=jnp.float32)    # (bt, hw, d_head)
        # Accumulate through the per-head rows of the output projection; this
        # removes the lane-axis concat of head outputs entirely.
        w_o_h = w_o[h * d_head:(h + 1) * d_head, :]
        out = out + jnp.dot(oh.reshape(r, d_head).astype(MATMUL_DT), w_o_h,
                            preferred_element_type=jnp.float32)
    return out + b_o


# ------------------------------- kernel ----------------------------------
def spatial_transformer_kernel(
    x_ref, vec_ref, b_geglu_ref,
    w_in_ref, w_qkv_ref, w_attn_out_ref, w_geglu_ref, w_ff2_ref, w_out_ref,
    o_ref, *, n_heads, d_head, num_groups,
):
    x_in = x_ref[...]                            # (Bt, HW, C) f32
    bt, hw, c = x_in.shape
    inner = n_heads * d_head
    r = bt * hw
    cg = c // num_groups

    vecs = vec_ref[...]                          # (N_VEC_ROWS, max(C, inner)) f32

    def vec2(i, w):                              # (1, w) row for 2-D broadcasts
        return vecs[i:i + 1, :w]

    # ---- GroupNorm(num_groups, C, eps=1e-6), statistics per batch element ----
    if cg == 1:
        # channels == groups: group stats are plain per-channel stats; skip the
        # one-hot membership matmuls entirely.
        mean_c = jnp.mean(x_in, axis=1, keepdims=True)                    # (Bt,1,C)
        ex2 = jnp.mean(x_in * x_in, axis=1, keepdims=True)
        var_c = jnp.maximum(ex2 - mean_c * mean_c, 0.0)
    else:
        # General case: pool per-channel sums into groups via one-hot matmuls.
        ch = jax.lax.broadcasted_iota(jnp.int32, (c, num_groups), 0) // cg
        gi = jax.lax.broadcasted_iota(jnp.int32, (c, num_groups), 1)
        member = (ch == gi).astype(jnp.float32)                           # (C, G)
        ch_t = jax.lax.broadcasted_iota(jnp.int32, (num_groups, c), 1) // cg
        gi_t = jax.lax.broadcasted_iota(jnp.int32, (num_groups, c), 0)
        member_t = (ch_t == gi_t).astype(jnp.float32)                     # (G, C)
        n_elem = float(cg * hw)
        ch_sum = jnp.sum(x_in, axis=1)                                    # (Bt, C)
        ch_sq = jnp.sum(x_in * x_in, axis=1)
        g_mean = jnp.dot(ch_sum, member, preferred_element_type=jnp.float32) / n_elem
        g_ex2 = jnp.dot(ch_sq, member, preferred_element_type=jnp.float32) / n_elem
        g_var = jnp.maximum(g_ex2 - g_mean * g_mean, 0.0)
        mean_c = jnp.dot(g_mean, member_t,
                         preferred_element_type=jnp.float32).reshape(bt, 1, c)
        var_c = jnp.dot(g_var, member_t,
                        preferred_element_type=jnp.float32).reshape(bt, 1, c)

    xn = (x_in - mean_c) * jax.lax.rsqrt(var_c + GN_EPS)
    xn = xn.reshape(r, c) * vec2(VEC_GN_G, c) + vec2(VEC_GN_B, c)

    # ---- proj_in : 1x1 conv C -> inner (per-pixel linear) ----
    h = jnp.dot(xn.astype(MATMUL_DT), w_in_ref[...],
                preferred_element_type=jnp.float32) + vec2(VEC_B_IN, inner)

    # ---- BasicTransformerBlock (depth = 1) ----
    # attn1 (self-attention) + residual
    h = h + _attention(
        _layer_norm(h, vec2(VEC_LN1_G, inner), vec2(VEC_LN1_B, inner)),
        bt, hw, w_qkv_ref[0], w_attn_out_ref[0], vec2(VEC_BO1, inner),
        n_heads, d_head)
    # attn2 (context=None -> self-attention) + residual
    h = h + _attention(
        _layer_norm(h, vec2(VEC_LN2_G, inner), vec2(VEC_LN2_B, inner)),
        bt, hw, w_qkv_ref[1], w_attn_out_ref[1], vec2(VEC_BO2, inner),
        n_heads, d_head)

    # FeedForward with GEGLU + residual (vector math in f32, matmul inputs bf16)
    hn = _layer_norm(h, vec2(VEC_LN3_G, inner), vec2(VEC_LN3_B, inner))
    proj = jnp.dot(hn.astype(MATMUL_DT), w_geglu_ref[...],
                   preferred_element_type=jnp.float32) + b_geglu_ref[...]
    ffi = proj.shape[-1] // 2
    xa, gate = proj[:, :ffi], proj[:, ffi:]
    ff = jnp.dot((xa * _gelu(gate)).astype(MATMUL_DT), w_ff2_ref[...],
                 preferred_element_type=jnp.float32) + vec2(VEC_B_FF2, inner)
    h = h + ff

    # ---- proj_out : 1x1 conv inner -> C (zero_module) + residual ----
    y = jnp.dot(h.astype(MATMUL_DT), w_out_ref[...],
                preferred_element_type=jnp.float32) + vec2(VEC_B_OUT, c)
    # NOTE: output stays (Bt, HW, C); a lane-dense (.., 128) store would require an
    # in-kernel sublane->lane relayout of comparable cost for this tiny epilogue.
    o_ref[...] = (y + x_in.reshape(r, c)).reshape(bt, hw, c)


# ------------------------------- wrapper ----------------------------------
def _choose_block_batch(batch, hw):
    """Batch elements folded into one grid step.

    Amortizes per-grid-step overhead and grows the MXU M dimension, while
    (a) keeping the per-step VMEM footprint bounded and (b) keeping >= 2 grid
    steps whenever batch >= 2 so both v7x TensorCores get work.
    """
    max_rows = 2048                      # Bt * HW rows per step
    best = 1
    for cand in range(1, batch + 1):
        if batch % cand:
            continue
        if cand * hw > max_rows:
            continue
        if batch >= 2 and batch // cand < 2:
            continue
        best = cand
    return best


def _whole_array_spec(p):
    nd = p.ndim
    return pl.BlockSpec(p.shape, lambda b: (0,) * nd)


def spatial_transformer(x_nchw, params, *, n_heads=N_HEADS, d_head=D_HEAD,
                        num_groups=NUM_GROUPS, block_batch=None):
    """x_nchw: (B, C, H, W) float32.  Returns (B, C, H, W) float32."""
    B, C, H, W = x_nchw.shape
    HW = H * W
    # TODO(synk): accept NHWC at the API boundary (or fuse these transposes into
    # adjacent ops) to avoid two extra XLA HBM round trips around the kernel.
    x_seq = jnp.transpose(x_nchw, (0, 2, 3, 1)).reshape(B, HW, C)

    bt = _choose_block_batch(B, HW) if block_batch is None else block_batch
    assert B % bt == 0

    kernel = functools.partial(
        spatial_transformer_kernel,
        n_heads=n_heads, d_head=d_head, num_groups=num_groups)

    ordered = [params["vecs"], params["b_geglu"], params["w_in"], params["w_qkv"],
               params["w_attn_out"], params["w_geglu"], params["w_ff2"],
               params["w_out"]]

    out = pl.pallas_call(
        kernel,
        grid=(B // bt,),
        in_specs=[pl.BlockSpec((bt, HW, C), lambda b: (b, 0, 0))]
                 + [_whole_array_spec(p) for p in ordered],
        out_specs=pl.BlockSpec((bt, HW, C), lambda b: (b, 0, 0)),
        out_shape=jax.ShapeDtypeStruct((B, HW, C), jnp.float32),
        compiler_params=pltpu.CompilerParams(
            dimension_semantics=("parallel",),
            # Safe on v5e/v6e/v7x for these block sizes; re-derive for
            # deployment-sized spatial dims.
            vmem_limit_bytes=32 * 1024 * 1024),
    )(x_seq, *ordered)

    return jnp.transpose(out.reshape(B, H, W, C), (0, 3, 1, 2))


# --------------------------- parameter init --------------------------------
def init_params(key, *, in_channels=IN_CHANNELS, n_heads=N_HEADS, d_head=D_HEAD,
                ff_mult=FF_MULT, zero_proj_out=True):
    """Synthetic init.  Linear/conv weights stored as (in_dim, out_dim) so the
    kernel computes x @ W (== PyTorch x @ W_pt.T).  Matrices are stored in bf16
    (MXU input dtype), small vectors packed into one f32 array.  proj_out is
    zero (zero_module) unless zero_proj_out=False (used for the numeric check)."""
    c = in_channels
    inner = n_heads * d_head
    ffi = inner * ff_mult
    vw = max(c, inner)
    keys = jax.random.split(key, 16)

    def lin(k, din, dout):
        return jax.random.normal(k, (din, dout), jnp.float32) / math.sqrt(din)

    def small(k, n):
        return 0.1 * jax.random.normal(k, (n,), jnp.float32)

    kv = jax.random.split(keys[15], N_VEC_ROWS)
    rows = {
        VEC_GN_G: 1.0 + small(kv[VEC_GN_G], c),
        VEC_GN_B: small(kv[VEC_GN_B], c),
        VEC_B_IN: small(kv[VEC_B_IN], inner),
        VEC_LN1_G: 1.0 + small(kv[VEC_LN1_G], inner),
        VEC_LN1_B: small(kv[VEC_LN1_B], inner),
        VEC_BO1: small(kv[VEC_BO1], inner),
        VEC_LN2_G: 1.0 + small(kv[VEC_LN2_G], inner),
        VEC_LN2_B: small(kv[VEC_LN2_B], inner),
        VEC_BO2: small(kv[VEC_BO2], inner),
        VEC_LN3_G: 1.0 + small(kv[VEC_LN3_G], inner),
        VEC_LN3_B: small(kv[VEC_LN3_B], inner),
        VEC_B_FF2: small(kv[VEC_B_FF2], inner),
        VEC_B_OUT: (jnp.zeros((c,), jnp.float32) if zero_proj_out
                    else small(kv[VEC_B_OUT], c)),
    }
    vecs = jnp.zeros((N_VEC_ROWS, vw), jnp.float32)
    for i, vals in rows.items():
        vecs = vecs.at[i, :vals.shape[0]].set(vals)

    w_out = (jnp.zeros((inner, c), jnp.float32) if zero_proj_out
             else lin(keys[11], inner, c))

    return {
        "vecs": vecs,                                                  # f32
        "b_geglu": 0.1 * jax.random.normal(keys[12], (1, 2 * ffi), jnp.float32),
        "w_in": lin(keys[8], c, inner).astype(MATMUL_DT),
        "w_qkv": jnp.stack([
            jnp.concatenate([lin(keys[0], inner, inner),
                             lin(keys[1], inner, inner),
                             lin(keys[2], inner, inner)], axis=1),
            jnp.concatenate([lin(keys[4], inner, inner),
                             lin(keys[5], inner, inner),
                             lin(keys[6], inner, inner)], axis=1),
        ]).astype(MATMUL_DT),                                          # (2, inner, 3*inner)
        "w_attn_out": jnp.stack([lin(keys[3], inner, inner),
                                 lin(keys[7], inner, inner)]).astype(MATMUL_DT),
        "w_geglu": lin(keys[9], inner, 2 * ffi).astype(MATMUL_DT),
        "w_ff2": lin(keys[10], ffi, inner).astype(MATMUL_DT),
        "w_out": w_out.astype(MATMUL_DT),
    }


# --------------------------- pure-JAX reference -----------------------------
def reference_forward(x_nchw, params, *, n_heads=N_HEADS, d_head=D_HEAD,
                      num_groups=NUM_GROUPS):
    """f32 reference of the PyTorch SpatialTransformer forward (same packed params)."""
    f32 = jnp.float32
    b, c, hh, ww = x_nchw.shape
    hw = hh * ww
    inner = n_heads * d_head
    cg = c // num_groups
    vecs = params["vecs"].astype(f32)

    def row(i, w):
        return vecs[i, :w]

    x_in = jnp.transpose(x_nchw, (0, 2, 3, 1)).reshape(b, hw, c).astype(f32)

    xg = x_in.reshape(b, hw, num_groups, cg)
    mu = jnp.mean(xg, axis=(1, 3), keepdims=True)
    var = jnp.mean((xg - mu) ** 2, axis=(1, 3), keepdims=True)
    xn = ((xg - mu) / jnp.sqrt(var + GN_EPS)).reshape(b, hw, c)
    xn = xn * row(VEC_GN_G, c) + row(VEC_GN_B, c)

    h = xn @ params["w_in"].astype(f32) + row(VEC_B_IN, inner)

    def ln(x, gi, bi):
        m = jnp.mean(x, axis=-1, keepdims=True)
        v = jnp.mean((x - m) ** 2, axis=-1, keepdims=True)
        return (x - m) / jnp.sqrt(v + LN_EPS) * row(gi, inner) + row(bi, inner)

    def attn(xq, w_qkv, w_o, bo_i):
        qkv = xq @ w_qkv.astype(f32)
        q, k, v = jnp.split(qkv, 3, axis=-1)
        q = q.reshape(b, hw, n_heads, d_head)
        k = k.reshape(b, hw, n_heads, d_head)
        v = v.reshape(b, hw, n_heads, d_head)
        sim = jnp.einsum("bqhd,bkhd->bhqk", q, k) * (d_head ** -0.5)
        att = jax.nn.softmax(sim, axis=-1)
        o = jnp.einsum("bhqk,bkhd->bqhd", att, v).reshape(b, hw, inner)
        return o @ w_o.astype(f32) + row(bo_i, inner)

    h = h + attn(ln(h, VEC_LN1_G, VEC_LN1_B),
                 params["w_qkv"][0], params["w_attn_out"][0], VEC_BO1)
    h = h + attn(ln(h, VEC_LN2_G, VEC_LN2_B),
                 params["w_qkv"][1], params["w_attn_out"][1], VEC_BO2)

    hn = ln(h, VEC_LN3_G, VEC_LN3_B)
    proj = hn @ params["w_geglu"].astype(f32) + params["b_geglu"].astype(f32)
    ffi = proj.shape[-1] // 2
    xa, gate = proj[..., :ffi], proj[..., ffi:]
    ff = (xa * _gelu(gate)) @ params["w_ff2"].astype(f32) + row(VEC_B_FF2, inner)
    h = h + ff

    y = h @ params["w_out"].astype(f32) + row(VEC_B_OUT, c)
    out = y + x_in
    return jnp.transpose(out.reshape(b, hh, ww, c), (0, 3, 1, 2))


# --------------------------------- main ------------------------------------
if __name__ == "__main__":
    key = jax.random.PRNGKey(0)
    kx, kp1, kp2 = jax.random.split(key, 3)

    B, C, H, W = 4, IN_CHANNELS, 8, 8     # GroupNorm(32, C) requires C multiple of 32
    x = jax.random.normal(kx, (B, C, H, W), jnp.float32)

    fwd = jax.jit(lambda xi, pi: spatial_transformer(xi, pi))

    # 1) True module init (zero_module proj_out): forward must be exactly identity.
    params0 = init_params(kp1, zero_proj_out=True)
    out0 = jax.block_until_ready(fwd(x, params0))
    assert out0.shape == x.shape and out0.dtype == x.dtype
    assert bool(jnp.all(jnp.isfinite(out0)))
    assert bool(jnp.allclose(out0, x, atol=1e-5)), "zero-init proj_out must be identity"

    # 2) Non-zero proj_out: compare the full transformer path against a pure-JAX
    #    f32 reference (kernel uses bf16 matmul inputs + approx softmax reciprocal).
    params1 = init_params(kp2, zero_proj_out=False)
    out1 = jax.block_until_ready(fwd(x, params1))
    ref1 = reference_forward(x, params1)
    assert bool(jnp.all(jnp.isfinite(out1)))
    err = float(jnp.max(jnp.abs(out1 - ref1)))
    scale = float(jnp.max(jnp.abs(ref1))) + 1e-6
    assert err / scale < 0.08, f"kernel deviates from reference: err={err}, scale={scale}"

    print("KERNEL_OK")
</pallas_src>

<mosaic_0001>
module attributes {stable_mosaic.version = 11 : i64} {
  func.func @spatial_transformer_kernel(%arg0: i32, %arg1: memref<2x64x32xf32, #tpu.memory_space<vmem>>, %arg2: memref<13x32xf32, #tpu.memory_space<vmem>>, %arg3: memref<1x256xf32, #tpu.memory_space<vmem>>, %arg4: memref<32x32xbf16, #tpu.memory_space<vmem>>, %arg5: memref<2x32x96xbf16, #tpu.memory_space<vmem>>, %arg6: memref<2x32x32xbf16, #tpu.memory_space<vmem>>, %arg7: memref<32x256xbf16, #tpu.memory_space<vmem>>, %arg8: memref<128x32xbf16, #tpu.memory_space<vmem>>, %arg9: memref<32x32xbf16, #tpu.memory_space<vmem>>, %arg10: memref<2x64x32xf32, #tpu.memory_space<vmem>>) attributes {dimension_semantics = [#tpu.dimension_semantics<parallel>], iteration_bounds = array<i64: 2>, scalar_prefetch = 0 : i64, scratch_operands = 0 : i64, tpu.core_type = #tpu.core_type<tc>, window_params = [{transform_indices = @transform_0, window_bounds = array<i64: 2, 64, 32>}, {pipeline_mode = #tpu.pipeline_mode<synchronous>, transform_indices = @transform_1, window_bounds = array<i64: 13, 32>}, {pipeline_mode = #tpu.pipeline_mode<synchronous>, transform_indices = @transform_2, window_bounds = array<i64: 1, 256>}, {pipeline_mode = #tpu.pipeline_mode<synchronous>, transform_indices = @transform_3, window_bounds = array<i64: 32, 32>}, {pipeline_mode = #tpu.pipeline_mode<synchronous>, transform_indices = @transform_4, window_bounds = array<i64: 2, 32, 96>}, {pipeline_mode = #tpu.pipeline_mode<synchronous>, transform_indices = @transform_5, window_bounds = array<i64: 2, 32, 32>}, {pipeline_mode = #tpu.pipeline_mode<synchronous>, transform_indices = @transform_6, window_bounds = array<i64: 32, 256>}, {pipeline_mode = #tpu.pipeline_mode<synchronous>, transform_indices = @transform_7, window_bounds = array<i64: 128, 32>}, {pipeline_mode = #tpu.pipeline_mode<synchronous>, transform_indices = @transform_8, window_bounds = array<i64: 32, 32>}, {transform_indices = @transform_9, window_bounds = array<i64: 2, 64, 32>}]} {
    %c0 = arith.constant 0 : index
    %c0_0 = arith.constant 0 : index
    %c0_1 = arith.constant 0 : index
    %0 = vector.load %arg1[%c0, %c0_0, %c0_1] : memref<2x64x32xf32, #tpu.memory_space<vmem>>, vector<2x64x32xf32>
    %c0_2 = arith.constant 0 : index
    %c0_3 = arith.constant 0 : index
    %1 = vector.load %arg2[%c0_2, %c0_3] : memref<13x32xf32, #tpu.memory_space<vmem>>, vector<13x32xf32>
    %cst = arith.constant dense<0.000000e+00> : vector<2x32xf32>
    %2 = vector.multi_reduction <add>, %0, %cst [1] : vector<2x64x32xf32> to vector<2x32xf32>
    %3 = vector.shape_cast %2 : vector<2x32xf32> to vector<2x1x32xf32>
    %cst_4 = arith.constant 6.400000e+01 : f32
    %4 = vector.broadcast %cst_4 : f32 to vector<2x1x32xf32>
    %5 = arith.divf %3, %4 : vector<2x1x32xf32>
    %6 = arith.mulf %0, %0 : vector<2x64x32xf32>
    %cst_5 = arith.constant dense<0.000000e+00> : vector<2x32xf32>
    %7 = vector.multi_reduction <add>, %6, %cst_5 [1] : vector<2x64x32xf32> to vector<2x32xf32>
    %8 = vector.shape_cast %7 : vector<2x32xf32> to vector<2x1x32xf32>
    %cst_6 = arith.constant 6.400000e+01 : f32
    %9 = vector.broadcast %cst_6 : f32 to vector<2x1x32xf32>
    %10 = arith.divf %8, %9 : vector<2x1x32xf32>
    %11 = arith.mulf %5, %5 : vector<2x1x32xf32>
    %12 = arith.subf %10, %11 : vector<2x1x32xf32>
    %cst_7 = arith.constant 0.000000e+00 : f32
    %13 = vector.broadcast %cst_7 : f32 to vector<2x1x32xf32>
    %14 = arith.maximumf %12, %13 : vector<2x1x32xf32>
    %15 = vector.broadcast %5 : vector<2x1x32xf32> to vector<2x64x32xf32>
    %16 = arith.subf %0, %15 : vector<2x64x32xf32>
    %cst_8 = arith.constant 9.99999997E-7 : f32
    %17 = vector.broadcast %cst_8 : f32 to vector<2x1x32xf32>
    %18 = arith.addf %14, %17 : vector<2x1x32xf32>
    %19 = math.rsqrt %18 : vector<2x1x32xf32>
    %20 = vector.broadcast %19 : vector<2x1x32xf32> to vector<2x64x32xf32>
    %21 = arith.mulf %16, %20 : vector<2x64x32xf32>
    %22 = vector.shape_cast %21 : vector<2x64x32xf32> to vector<128x32xf32>
    %23 = vector.extract_strided_slice %1 {offsets = [0, 0], sizes = [1, 32], strides = [1, 1]} : vector<13x32xf32> to vector<1x32xf32>
    %24 = vector.broadcast %23 : vector<1x32xf32> to vector<128x32xf32>
    %25 = arith.mulf %22, %24 : vector<128x32xf32>
    %26 = vector.extract_strided_slice %1 {offsets = [1, 0], sizes = [1, 32], strides = [1, 1]} : vector<13x32xf32> to vector<1x32xf32>
    %27 = vector.broadcast %26 : vector<1x32xf32> to vector<128x32xf32>
    %28 = arith.addf %25, %27 : vector<128x32xf32>
    %29 = arith.truncf %28 : vector<128x32xf32> to vector<128x32xbf16>
    %c0_9 = arith.constant 0 : index
    %c0_10 = arith.constant 0 : index
    %30 = vector.load %arg4[%c0_9, %c0_10] : memref<32x32xbf16, #tpu.memory_space<vmem>>, vector<32x32xbf16>
    %cst_11 = arith.constant dense<0.000000e+00> : vector<128x32xf32>
    %31 = tpu.matmul %29, %30, %cst_11 {dimension_numbers = #tpu.dot_dimension_numbers<[1], [0], [0], [1], [0, 0, 1, 1], [], []>} : vector<128x32xbf16>, vector<32x32xbf16>, vector<128x32xf32> -> vector<128x32xf32>
    %32 = vector.extract_strided_slice %1 {offsets = [2, 0], sizes = [1, 32], strides = [1, 1]} : vector<13x32xf32> to vector<1x32xf32>
    %33 = vector.broadcast %32 : vector<1x32xf32> to vector<128x32xf32>
    %34 = arith.addf %31, %33 : vector<128x32xf32>
    %35 = vector.extract_strided_slice %1 {offsets = [3, 0], sizes = [1, 32], strides = [1, 1]} : vector<13x32xf32> to vector<1x32xf32>
    %36 = vector.extract_strided_slice %1 {offsets = [4, 0], sizes = [1, 32], strides = [1, 1]} : vector<13x32xf32> to vector<1x32xf32>
    %cst_12 = arith.constant dense<0.000000e+00> : vector<128xf32>
    %37 = vector.multi_reduction <add>, %34, %cst_12 [1] : vector<128x32xf32> to vector<128xf32>
    %38 = vector.shape_cast %37 : vector<128xf32> to vector<128x1xf32>
    %cst_13 = arith.constant 3.200000e+01 : f32
    %39 = vector.broadcast %cst_13 : f32 to vector<128x1xf32>
    %40 = arith.divf %38, %39 : vector<128x1xf32>
    %41 = vector.broadcast %40 : vector<128x1xf32> to vector<128x32xf32>
    %42 = arith.subf %34, %41 : vector<128x32xf32>
    %43 = arith.mulf %42, %42 : vector<128x32xf32>
    %cst_14 = arith.constant dense<0.000000e+00> : vector<128xf32>
    %44 = vector.multi_reduction <add>, %43, %cst_14 [1] : vector<128x32xf32> to vector<128xf32>
    %45 = vector.shape_cast %44 : vector<128xf32> to vector<128x1xf32>
    %cst_15 = arith.constant 3.200000e+01 : f32
    %46 = vector.broadcast %cst_15 : f32 to vector<128x1xf32>
    %47 = arith.divf %45, %46 : vector<128x1xf32>
    %48 = vector.broadcast %40 : vector<128x1xf32> to vector<128x32xf32>
    %49 = arith.subf %34, %48 : vector<128x32xf32>
    %cst_16 = arith.constant 9.99999974E-6 : f32
    %50 = vector.broadcast %cst_16 : f32 to vector<128x1xf32>
    %51 = arith.addf %47, %50 : vector<128x1xf32>
    %52 = math.rsqrt %51 : vector<128x1xf32>
    %53 = vector.broadcast %52 : vector<128x1xf32> to vector<128x32xf32>
    %54 = arith.mulf %49, %53 : vector<128x32xf32>
    %55 = vector.broadcast %35 : vector<1x32xf32> to vector<128x32xf32>
    %56 = arith.mulf %54, %55 : vector<128x32xf32>
    %57 = vector.broadcast %36 : vector<1x32xf32> to vector<128x32xf32>
    %58 = arith.addf %56, %57 : vector<128x32xf32>
    %c0_17 = arith.constant 0 : index
    %c0_18 = arith.constant 0 : index
    %c0_19 = arith.constant 0 : index
    %59 = vector.load %arg5[%c0_17, %c0_18, %c0_19] : memref<2x32x96xbf16, #tpu.memory_space<vmem>>, vector<1x32x96xbf16>
    %60 = vector.shape_cast %59 : vector<1x32x96xbf16> to vector<32x96xbf16>
    %c0_20 = arith.constant 0 : index
    %c0_21 = arith.constant 0 : index
    %c0_22 = arith.constant 0 : index
    %61 = vector.load %arg6[%c0_20, %c0_21, %c0_22] : memref<2x32x32xbf16, #tpu.memory_space<vmem>>, vector<1x32x32xbf16>
    %62 = vector.shape_cast %61 : vector<1x32x32xbf16> to vector<32x32xbf16>
    %63 = vector.extract_strided_slice %1 {offsets = [5, 0], sizes = [1, 32], strides = [1, 1]} : vector<13x32xf32> to vector<1x32xf32>
    %64 = arith.truncf %58 : vector<128x32xf32> to vector<128x32xbf16>
    %cst_23 = arith.constant dense<0.000000e+00> : vector<128x96xf32>
    %65 = tpu.matmul %64, %60, %cst_23 {dimension_numbers = #tpu.dot_dimension_numbers<[1], [0], [0], [1], [0, 0, 1, 1], [], []>} : vector<128x32xbf16>, vector<32x96xbf16>, vector<128x96xf32> -> vector<128x96xf32>
    %66 = vector.shape_cast %65 : vector<128x96xf32> to vector<2x64x96xf32>
    %cst_24 = arith.constant 0.000000e+00 : f32
    %67 = vector.broadcast %cst_24 : f32 to vector<128x32xf32>
    %68 = vector.extract_strided_slice %66 {offsets = [0, 0, 0], sizes = [2, 64, 16], strides = [1, 1, 1]} : vector<2x64x96xf32> to vector<2x64x16xf32>
    %69 = vector.extract_strided_slice %66 {offsets = [0, 0, 32], sizes = [2, 64, 16], strides = [1, 1, 1]} : vector<2x64x96xf32> to vector<2x64x16xf32>
    %70 = vector.extract_strided_slice %66 {offsets = [0, 0, 64], sizes = [2, 64, 16], strides = [1, 1, 1]} : vector<2x64x96xf32> to vector<2x64x16xf32>
    %71 = arith.truncf %68 : vector<2x64x16xf32> to vector<2x64x16xbf16>
    %72 = arith.truncf %69 : vector<2x64x16xf32> to vector<2x64x16xbf16>
    "tpu.trace_start"() <{level = 10 : i32, message = "bqd,bkd->bqk"}> : () -> ()
    %cst_25 = arith.constant dense<0.000000e+00> : vector<2x64x64xf32>
    %73 = tpu.matmul %71, %72, %cst_25 {dimension_numbers = #tpu.dot_dimension_numbers<[2], [2], [1], [1], [0, 0, 0, 1, 1, 1], [0], [0]>} : vector<2x64x16xbf16>, vector<2x64x16xbf16>, vector<2x64x64xf32> -> vector<2x64x64xf32>
    "tpu.trace_stop"() : () -> ()
    %cst_26 = arith.constant 2.500000e-01 : f32
    %74 = vector.broadcast %cst_26 : f32 to vector<2x64x64xf32>
    %75 = arith.mulf %73, %74 : vector<2x64x64xf32>
    %cst_27 = arith.constant dense<0xFF800000> : vector<2x64xf32>
    %76 = vector.multi_reduction <maximumf>, %75, %cst_27 [2] : vector<2x64x64xf32> to vector<2x64xf32>
    %77 = vector.shape_cast %76 : vector<2x64xf32> to vector<2x64x1xf32>
    %78 = vector.broadcast %77 : vector<2x64x1xf32> to vector<2x64x64xf32>
    %79 = arith.subf %75, %78 : vector<2x64x64xf32>
    %80 = math.exp %79 : vector<2x64x64xf32>
    %cst_28 = arith.constant dense<0.000000e+00> : vector<2x64xf32>
    %81 = vector.multi_reduction <add>, %80, %cst_28 [2] : vector<2x64x64xf32> to vector<2x64xf32>
    %82 = vector.shape_cast %81 : vector<2x64xf32> to vector<2x64x1xf32>
    %83 = tpu.reciprocal %82 {approx = true} : vector<2x64x1xf32> -> vector<2x64x1xf32>
    %84 = vector.broadcast %83 : vector<2x64x1xf32> to vector<2x64x64xf32>
    %85 = arith.mulf %80, %84 : vector<2x64x64xf32>
    %86 = arith.truncf %85 : vector<2x64x64xf32> to vector<2x64x64xbf16>
    %87 = arith.truncf %70 : vector<2x64x16xf32> to vector<2x64x16xbf16>
    "tpu.trace_start"() <{level = 10 : i32, message = "bqk,bkd->bqd"}> : () -> ()
    %cst_29 = arith.constant dense<0.000000e+00> : vector<2x64x16xf32>
    %88 = tpu.matmul %86, %87, %cst_29 {dimension_numbers = #tpu.dot_dimension_numbers<[2], [1], [1], [2], [0, 0, 0, 1, 1, 2], [0], [0]>} : vector<2x64x64xbf16>, vector<2x64x16xbf16>, vector<2x64x16xf32> -> vector<2x64x16xf32>
    "tpu.trace_stop"() : () -> ()
    %89 = vector.extract_strided_slice %62 {offsets = [0, 0], sizes = [16, 32], strides = [1, 1]} : vector<32x32xbf16> to vector<16x32xbf16>
    %90 = vector.shape_cast %88 : vector<2x64x16xf32> to vector<128x16xf32>
    %91 = arith.truncf %90 : vector<128x16xf32> to vector<128x16xbf16>
    %cst_30 = arith.constant dense<0.000000e+00> : vector<128x32xf32>
    %92 = tpu.matmul %91, %89, %cst_30 {dimension_numbers = #tpu.dot_dimension_numbers<[1], [0], [0], [1], [0, 0, 1, 1], [], []>} : vector<128x16xbf16>, vector<16x32xbf16>, vector<128x32xf32> -> vector<128x32xf32>
    %93 = arith.addf %67, %92 : vector<128x32xf32>
    %94 = vector.extract_strided_slice %66 {offsets = [0, 0, 16], sizes = [2, 64, 16], strides = [1, 1, 1]} : vector<2x64x96xf32> to vector<2x64x16xf32>
    %95 = vector.extract_strided_slice %66 {offsets = [0, 0, 48], sizes = [2, 64, 16], strides = [1, 1, 1]} : vector<2x64x96xf32> to vector<2x64x16xf32>
    %96 = vector.extract_strided_slice %66 {offsets = [0, 0, 80], sizes = [2, 64, 16], strides = [1, 1, 1]} : vector<2x64x96xf32> to vector<2x64x16xf32>
    %97 = arith.truncf %94 : vector<2x64x16xf32> to vector<2x64x16xbf16>
    %98 = arith.truncf %95 : vector<2x64x16xf32> to vector<2x64x16xbf16>
    "tpu.trace_start"() <{level = 10 : i32, message = "bqd,bkd->bqk"}> : () -> ()
    %cst_31 = arith.constant dense<0.000000e+00> : vector<2x64x64xf32>
    %99 = tpu.matmul %97, %98, %cst_31 {dimension_numbers = #tpu.dot_dimension_numbers<[2], [2], [1], [1], [0, 0, 0, 1, 1, 1], [0], [0]>} : vector<2x64x16xbf16>, vector<2x64x16xbf16>, vector<2x64x64xf32> -> vector<2x64x64xf32>
    "tpu.trace_stop"() : () -> ()
    %cst_32 = arith.constant 2.500000e-01 : f32
    %100 = vector.broadcast %cst_32 : f32 to vector<2x64x64xf32>
    %101 = arith.mulf %99, %100 : vector<2x64x64xf32>
    %cst_33 = arith.constant dense<0xFF800000> : vector<2x64xf32>
    %102 = vector.multi_reduction <maximumf>, %101, %cst_33 [2] : vector<2x64x64xf32> to vector<2x64xf32>
    %103 = vector.shape_cast %102 : vector<2x64xf32> to vector<2x64x1xf32>
    %104 = vector.broadcast %103 : vector<2x64x1xf32> to vector<2x64x64xf32>
    %105 = arith.subf %101, %104 : vector<2x64x64xf32>
    %106 = math.exp %105 : vector<2x64x64xf32>
    %cst_34 = arith.constant dense<0.000000e+00> : vector<2x64xf32>
    %107 = vector.multi_reduction <add>, %106, %cst_34 [2] : vector<2x64x64xf32> to vector<2x64xf32>
    %108 = vector.shape_cast %107 : vector<2x64xf32> to vector<2x64x1xf32>
    %109 = tpu.reciprocal %108 {approx = true} : vector<2x64x1xf32> -> vector<2x64x1xf32>
    %110 = vector.broadcast %109 : vector<2x64x1xf32> to vector<2x64x64xf32>
    %111 = arith.mulf %106, %110 : vector<2x64x64xf32>
    %112 = arith.truncf %111 : vector<2x64x64xf32> to vector<2x64x64xbf16>
    %113 = arith.truncf %96 : vector<2x64x16xf32> to vector<2x64x16xbf16>
    "tpu.trace_start"() <{level = 10 : i32, message = "bqk,bkd->bqd"}> : () -> ()
    %cst_35 = arith.constant dense<0.000000e+00> : vector<2x64x16xf32>
    %114 = tpu.matmul %112, %113, %cst_35 {dimension_numbers = #tpu.dot_dimension_numbers<[2], [1], [1], [2], [0, 0, 0, 1, 1, 2], [0], [0]>} : vector<2x64x64xbf16>, vector<2x64x16xbf16>, vector<2x64x16xf32> -> vector<2x64x16xf32>
    "tpu.trace_stop"() : () -> ()
    %115 = vector.extract_strided_slice %62 {offsets = [16, 0], sizes = [16, 32], strides = [1, 1]} : vector<32x32xbf16> to vector<16x32xbf16>
    %116 = vector.shape_cast %114 : vector<2x64x16xf32> to vector<128x16xf32>
    %117 = arith.truncf %116 : vector<128x16xf32> to vector<128x16xbf16>
    %cst_36 = arith.constant dense<0.000000e+00> : vector<128x32xf32>
    %118 = tpu.matmul %117, %115, %cst_36 {dimension_numbers = #tpu.dot_dimension_numbers<[1], [0], [0], [1], [0, 0, 1, 1], [], []>} : vector<128x16xbf16>, vector<16x32xbf16>, vector<128x32xf32> -> vector<128x32xf32>
    %119 = arith.addf %93, %118 : vector<128x32xf32>
    %120 = vector.broadcast %63 : vector<1x32xf32> to vector<128x32xf32>
    %121 = arith.addf %119, %120 : vector<128x32xf32>
    %122 = arith.addf %34, %121 : vector<128x32xf32>
    %123 = vector.extract_strided_slice %1 {offsets = [6, 0], sizes = [1, 32], strides = [1, 1]} : vector<13x32xf32> to vector<1x32xf32>
    %124 = vector.extract_strided_slice %1 {offsets = [7, 0], sizes = [1, 32], strides = [1, 1]} : vector<13x32xf32> to vector<1x32xf32>
    %cst_37 = arith.constant dense<0.000000e+00> : vector<128xf32>
    %125 = vector.multi_reduction <add>, %122, %cst_37 [1] : vector<128x32xf32> to vector<128xf32>
    %126 = vector.shape_cast %125 : vector<128xf32> to vector<128x1xf32>
    %cst_38 = arith.constant 3.200000e+01 : f32
    %127 = vector.broadcast %cst_38 : f32 to vector<128x1xf32>
    %128 = arith.divf %126, %127 : vector<128x1xf32>
    %129 = vector.broadcast %128 : vector<128x1xf32> to vector<128x32xf32>
    %130 = arith.subf %122, %129 : vector<128x32xf32>
    %131 = arith.mulf %130, %130 : vector<128x32xf32>
    %cst_39 = arith.constant dense<0.000000e+00> : vector<128xf32>
    %132 = vector.multi_reduction <add>, %131, %cst_39 [1] : vector<128x32xf32> to vector<128xf32>
    %133 = vector.shape_cast %132 : vector<128xf32> to vector<128x1xf32>
    %cst_40 = arith.constant 3.200000e+01 : f32
    %134 = vector.broadcast %cst_40 : f32 to vector<128x1xf32>
    %135 = arith.divf %133, %134 : vector<128x1xf32>
    %136 = vector.broadcast %128 : vector<128x1xf32> to vector<128x32xf32>
    %137 = arith.subf %122, %136 : vector<128x32xf32>
    %cst_41 = arith.constant 9.99999974E-6 : f32
    %138 = vector.broadcast %cst_41 : f32 to vector<128x1xf32>
    %139 = arith.addf %135, %138 : vector<128x1xf32>
    %140 = math.rsqrt %139 : vector<128x1xf32>
    %141 = vector.broadcast %140 : vector<128x1xf32> to vector<128x32xf32>
    %142 = arith.mulf %137, %141 : vector<128x32xf32>
    %143 = vector.broadcast %123 : vector<1x32xf32> to vector<128x32xf32>
    %144 = arith.mulf %142, %143 : vector<128x32xf32>
    %145 = vector.broadcast %124 : vector<1x32xf32> to vector<128x32xf32>
    %146 = arith.addf %144, %145 : vector<128x32xf32>
    %c1 = arith.constant 1 : index
    %c0_42 = arith.constant 0 : index
    %c0_43 = arith.constant 0 : index
    %147 = vector.load %arg5[%c1, %c0_42, %c0_43] : memref<2x32x96xbf16, #tpu.memory_space<vmem>>, vector<1x32x96xbf16>
    %148 = vector.shape_cast %147 : vector<1x32x96xbf16> to vector<32x96xbf16>
    %c1_44 = arith.constant 1 : index
    %c0_45 = arith.constant 0 : index
    %c0_46 = arith.constant 0 : index
    %149 = vector.load %arg6[%c1_44, %c0_45, %c0_46] : memref<2x32x32xbf16, #tpu.memory_space<vmem>>, vector<1x32x32xbf16>
    %150 = vector.shape_cast %149 : vector<1x32x32xbf16> to vector<32x32xbf16>
    %151 = vector.extract_strided_slice %1 {offsets = [8, 0], sizes = [1, 32], strides = [1, 1]} : vector<13x32xf32> to vector<1x32xf32>
    %152 = arith.truncf %146 : vector<128x32xf32> to vector<128x32xbf16>
    %cst_47 = arith.constant dense<0.000000e+00> : vector<128x96xf32>
    %153 = tpu.matmul %152, %148, %cst_47 {dimension_numbers = #tpu.dot_dimension_numbers<[1], [0], [0], [1], [0, 0, 1, 1], [], []>} : vector<128x32xbf16>, vector<32x96xbf16>, vector<128x96xf32> -> vector<128x96xf32>
    %154 = vector.shape_cast %153 : vector<128x96xf32> to vector<2x64x96xf32>
    %cst_48 = arith.constant 0.000000e+00 : f32
    %155 = vector.broadcast %cst_48 : f32 to vector<128x32xf32>
    %156 = vector.extract_strided_slice %154 {offsets = [0, 0, 0], sizes = [2, 64, 16], strides = [1, 1, 1]} : vector<2x64x96xf32> to vector<2x64x16xf32>
    %157 = vector.extract_strided_slice %154 {offsets = [0, 0, 32], sizes = [2, 64, 16], strides = [1, 1, 1]} : vector<2x64x96xf32> to vector<2x64x16xf32>
    %158 = vector.extract_strided_slice %154 {offsets = [0, 0, 64], sizes = [2, 64, 16], strides = [1, 1, 1]} : vector<2x64x96xf32> to vector<2x64x16xf32>
    %159 = arith.truncf %156 : vector<2x64x16xf32> to vector<2x64x16xbf16>
    %160 = arith.truncf %157 : vector<2x64x16xf32> to vector<2x64x16xbf16>
    "tpu.trace_start"() <{level = 10 : i32, message = "bqd,bkd->bqk"}> : () -> ()
    %cst_49 = arith.constant dense<0.000000e+00> : vector<2x64x64xf32>
    %161 = tpu.matmul %159, %160, %cst_49 {dimension_numbers = #tpu.dot_dimension_numbers<[2], [2], [1], [1], [0, 0, 0, 1, 1, 1], [0], [0]>} : vector<2x64x16xbf16>, vector<2x64x16xbf16>, vector<2x64x64xf32> -> vector<2x64x64xf32>
    "tpu.trace_stop"() : () -> ()
    %cst_50 = arith.constant 2.500000e-01 : f32
    %162 = vector.broadcast %cst_50 : f32 to vector<2x64x64xf32>
    %163 = arith.mulf %161, %162 : vector<2x64x64xf32>
    %cst_51 = arith.constant dense<0xFF800000> : vector<2x64xf32>
    %164 = vector.multi_reduction <maximumf>, %163, %cst_51 [2] : vector<2x64x64xf32> to vector<2x64xf32>
    %165 = vector.shape_cast %164 : vector<2x64xf32> to vector<2x64x1xf32>
    %166 = vector.broadcast %165 : vector<2x64x1xf32> to vector<2x64x64xf32>
    %167 = arith.subf %163, %166 : vector<2x64x64xf32>
    %168 = math.exp %167 : vector<2x64x64xf32>
    %cst_52 = arith.constant dense<0.000000e+00> : vector<2x64xf32>
    %169 = vector.multi_reduction <add>, %168, %cst_52 [2] : vector<2x64x64xf32> to vector<2x64xf32>
    %170 = vector.shape_cast %169 : vector<2x64xf32> to vector<2x64x1xf32>
    %171 = tpu.reciprocal %170 {approx = true} : vector<2x64x1xf32> -> vector<2x64x1xf32>
    %172 = vector.broadcast %171 : vector<2x64x1xf32> to vector<2x64x64xf32>
    %173 = arith.mulf %168, %172 : vector<2x64x64xf32>
    %174 = arith.truncf %173 : vector<2x64x64xf32> to vector<2x64x64xbf16>
    %175 = arith.truncf %158 : vector<2x64x16xf32> to vector<2x64x16xbf16>
    "tpu.trace_start"() <{level = 10 : i32, message = "bqk,bkd->bqd"}> : () -> ()
    %cst_53 = arith.constant dense<0.000000e+00> : vector<2x64x16xf32>
    %176 = tpu.matmul %174, %175, %cst_53 {dimension_numbers = #tpu.dot_dimension_numbers<[2], [1], [1], [2], [0, 0, 0, 1, 1, 2], [0], [0]>} : vector<2x64x64xbf16>, vector<2x64x16xbf16>, vector<2x64x16xf32> -> vector<2x64x16xf32>
    "tpu.trace_stop"() : () -> ()
    %177 = vector.extract_strided_slice %150 {offsets = [0, 0], sizes = [16, 32], strides = [1, 1]} : vector<32x32xbf16> to vector<16x32xbf16>
    %178 = vector.shape_cast %176 : vector<2x64x16xf32> to vector<128x16xf32>
    %179 = arith.truncf %178 : vector<128x16xf32> to vector<128x16xbf16>
    %cst_54 = arith.constant dense<0.000000e+00> : vector<128x32xf32>
    %180 = tpu.matmul %179, %177, %cst_54 {dimension_numbers = #tpu.dot_dimension_numbers<[1], [0], [0], [1], [0, 0, 1, 1], [], []>} : vector<128x16xbf16>, vector<16x32xbf16>, vector<128x32xf32> -> vector<128x32xf32>
    %181 = arith.addf %155, %180 : vector<128x32xf32>
    %182 = vector.extract_strided_slice %154 {offsets = [0, 0, 16], sizes = [2, 64, 16], strides = [1, 1, 1]} : vector<2x64x96xf32> to vector<2x64x16xf32>
    %183 = vector.extract_strided_slice %154 {offsets = [0, 0, 48], sizes = [2, 64, 16], strides = [1, 1, 1]} : vector<2x64x96xf32> to vector<2x64x16xf32>
    %184 = vector.extract_strided_slice %154 {offsets = [0, 0, 80], sizes = [2, 64, 16], strides = [1, 1, 1]} : vector<2x64x96xf32> to vector<2x64x16xf32>
    %185 = arith.truncf %182 : vector<2x64x16xf32> to vector<2x64x16xbf16>
    %186 = arith.truncf %183 : vector<2x64x16xf32> to vector<2x64x16xbf16>
    "tpu.trace_start"() <{level = 10 : i32, message = "bqd,bkd->bqk"}> : () -> ()
    %cst_55 = arith.constant dense<0.000000e+00> : vector<2x64x64xf32>
    %187 = tpu.matmul %185, %186, %cst_55 {dimension_numbers = #tpu.dot_dimension_numbers<[2], [2], [1], [1], [0, 0, 0, 1, 1, 1], [0], [0]>} : vector<2x64x16xbf16>, vector<2x64x16xbf16>, vector<2x64x64xf32> -> vector<2x64x64xf32>
    "tpu.trace_stop"() : () -> ()
    %cst_56 = arith.constant 2.500000e-01 : f32
    %188 = vector.broadcast %cst_56 : f32 to vector<2x64x64xf32>
    %189 = arith.mulf %187, %188 : vector<2x64x64xf32>
    %cst_57 = arith.constant dense<0xFF800000> : vector<2x64xf32>
    %190 = vector.multi_reduction <maximumf>, %189, %cst_57 [2] : vector<2x64x64xf32> to vector<2x64xf32>
    %191 = vector.shape_cast %190 : vector<2x64xf32> to vector<2x64x1xf32>
    %192 = vector.broadcast %191 : vector<2x64x1xf32> to vector<2x64x64xf32>
    %193 = arith.subf %189, %192 : vector<2x64x64xf32>
    %194 = math.exp %193 : vector<2x64x64xf32>
    %cst_58 = arith.constant dense<0.000000e+00> : vector<2x64xf32>
    %195 = vector.multi_reduction <add>, %194, %cst_58 [2] : vector<2x64x64xf32> to vector<2x64xf32>
    %196 = vector.shape_cast %195 : vector<2x64xf32> to vector<2x64x1xf32>
    %197 = tpu.reciprocal %196 {approx = true} : vector<2x64x1xf32> -> vector<2x64x1xf32>
    %198 = vector.broadcast %197 : vector<2x64x1xf32> to vector<2x64x64xf32>
    %199 = arith.mulf %194, %198 : vector<2x64x64xf32>
    %200 = arith.truncf %199 : vector<2x64x64xf32> to vector<2x64x64xbf16>
    %201 = arith.truncf %184 : vector<2x64x16xf32> to vector<2x64x16xbf16>
    "tpu.trace_start"() <{level = 10 : i32, message = "bqk,bkd->bqd"}> : () -> ()
    %cst_59 = arith.constant dense<0.000000e+00> : vector<2x64x16xf32>
    %202 = tpu.matmul %200, %201, %cst_59 {dimension_numbers = #tpu.dot_dimension_numbers<[2], [1], [1], [2], [0, 0, 0, 1, 1, 2], [0], [0]>} : vector<2x64x64xbf16>, vector<2x64x16xbf16>, vector<2x64x16xf32> -> vector<2x64x16xf32>
    "tpu.trace_stop"() : () -> ()
    %203 = vector.extract_strided_slice %150 {offsets = [16, 0], sizes = [16, 32], strides = [1, 1]} : vector<32x32xbf16> to vector<16x32xbf16>
    %204 = vector.shape_cast %202 : vector<2x64x16xf32> to vector<128x16xf32>
    %205 = arith.truncf %204 : vector<128x16xf32> to vector<128x16xbf16>
    %cst_60 = arith.constant dense<0.000000e+00> : vector<128x32xf32>
    %206 = tpu.matmul %205, %203, %cst_60 {dimension_numbers = #tpu.dot_dimension_numbers<[1], [0], [0], [1], [0, 0, 1, 1], [], []>} : vector<128x16xbf16>, vector<16x32xbf16>, vector<128x32xf32> -> vector<128x32xf32>
    %207 = arith.addf %181, %206 : vector<128x32xf32>
    %208 = vector.broadcast %151 : vector<1x32xf32> to vector<128x32xf32>
    %209 = arith.addf %207, %208 : vector<128x32xf32>
    %210 = arith.addf %122, %209 : vector<128x32xf32>
    %211 = vector.extract_strided_slice %1 {offsets = [9, 0], sizes = [1, 32], strides = [1, 1]} : vector<13x32xf32> to vector<1x32xf32>
    %212 = vector.extract_strided_slice %1 {offsets = [10, 0], sizes = [1, 32], strides = [1, 1]} : vector<13x32xf32> to vector<1x32xf32>
    %cst_61 = arith.constant dense<0.000000e+00> : vector<128xf32>
    %213 = vector.multi_reduction <add>, %210, %cst_61 [1] : vector<128x32xf32> to vector<128xf32>
    %214 = vector.shape_cast %213 : vector<128xf32> to vector<128x1xf32>
    %cst_62 = arith.constant 3.200000e+01 : f32
    %215 = vector.broadcast %cst_62 : f32 to vector<128x1xf32>
    %216 = arith.divf %214, %215 : vector<128x1xf32>
    %217 = vector.broadcast %216 : vector<128x1xf32> to vector<128x32xf32>
    %218 = arith.subf %210, %217 : vector<128x32xf32>
    %219 = arith.mulf %218, %218 : vector<128x32xf32>
    %cst_63 = arith.constant dense<0.000000e+00> : vector<128xf32>
    %220 = vector.multi_reduction <add>, %219, %cst_63 [1] : vector<128x32xf32> to vector<128xf32>
    %221 = vector.shape_cast %220 : vector<128xf32> to vector<128x1xf32>
    %cst_64 = arith.constant 3.200000e+01 : f32
    %222 = vector.broadcast %cst_64 : f32 to vector<128x1xf32>
    %223 = arith.divf %221, %222 : vector<128x1xf32>
    %224 = vector.broadcast %216 : vector<128x1xf32> to vector<128x32xf32>
    %225 = arith.subf %210, %224 : vector<128x32xf32>
    %cst_65 = arith.constant 9.99999974E-6 : f32
    %226 = vector.broadcast %cst_65 : f32 to vector<128x1xf32>
    %227 = arith.addf %223, %226 : vector<128x1xf32>
    %228 = math.rsqrt %227 : vector<128x1xf32>
    %229 = vector.broadcast %228 : vector<128x1xf32> to vector<128x32xf32>
    %230 = arith.mulf %225, %229 : vector<128x32xf32>
    %231 = vector.broadcast %211 : vector<1x32xf32> to vector<128x32xf32>
    %232 = arith.mulf %230, %231 : vector<128x32xf32>
    %233 = vector.broadcast %212 : vector<1x32xf32> to vector<128x32xf32>
    %234 = arith.addf %232, %233 : vector<128x32xf32>
    %235 = arith.truncf %234 : vector<128x32xf32> to vector<128x32xbf16>
    %c0_66 = arith.constant 0 : index
    %c0_67 = arith.constant 0 : index
    %236 = vector.load %arg7[%c0_66, %c0_67] : memref<32x256xbf16, #tpu.memory_space<vmem>>, vector<32x256xbf16>
    %cst_68 = arith.constant dense<0.000000e+00> : vector<128x256xf32>
    %237 = tpu.matmul %235, %236, %cst_68 {dimension_numbers = #tpu.dot_dimension_numbers<[1], [0], [0], [1], [0, 0, 1, 1], [], []>} : vector<128x32xbf16>, vector<32x256xbf16>, vector<128x256xf32> -> vector<128x256xf32>
    %c0_69 = arith.constant 0 : index
    %c0_70 = arith.constant 0 : index
    %238 = vector.load %arg3[%c0_69, %c0_70] : memref<1x256xf32, #tpu.memory_space<vmem>>, vector<1x256xf32>
    %239 = vector.broadcast %238 : vector<1x256xf32> to vector<128x256xf32>
    %240 = arith.addf %237, %239 : vector<128x256xf32>
    %241 = vector.extract_strided_slice %240 {offsets = [0, 0], sizes = [128, 128], strides = [1, 1]} : vector<128x256xf32> to vector<128x128xf32>
    %242 = vector.extract_strided_slice %240 {offsets = [0, 128], sizes = [128, 128], strides = [1, 1]} : vector<128x256xf32> to vector<128x128xf32>
    %cst_71 = arith.constant 5.000000e-01 : f32
    %243 = vector.broadcast %cst_71 : f32 to vector<128x128xf32>
    %244 = arith.mulf %243, %242 : vector<128x128xf32>
    %cst_72 = arith.constant 0.707106769 : f32
    %245 = vector.broadcast %cst_72 : f32 to vector<128x128xf32>
    %246 = arith.mulf %242, %245 : vector<128x128xf32>
    %247 = math.erf %246 : vector<128x128xf32>
    %cst_73 = arith.constant 1.000000e+00 : f32
    %248 = vector.broadcast %cst_73 : f32 to vector<128x128xf32>
    %249 = arith.addf %248, %247 : vector<128x128xf32>
    %250 = arith.mulf %244, %249 : vector<128x128xf32>
    %251 = arith.mulf %241, %250 : vector<128x128xf32>
    %252 = arith.truncf %251 : vector<128x128xf32> to vector<128x128xbf16>
    %c0_74 = arith.constant 0 : index
    %c0_75 = arith.constant 0 : index
    %253 = vector.load %arg8[%c0_74, %c0_75] : memref<128x32xbf16, #tpu.memory_space<vmem>>, vector<128x32xbf16>
    %cst_76 = arith.constant dense<0.000000e+00> : vector<128x32xf32>
    %254 = tpu.matmul %252, %253, %cst_76 {dimension_numbers = #tpu.dot_dimension_numbers<[1], [0], [0], [1], [0, 0, 1, 1], [], []>} : vector<128x128xbf16>, vector<128x32xbf16>, vector<128x32xf32> -> vector<128x32xf32>
    %255 = vector.extract_strided_slice %1 {offsets = [11, 0], sizes = [1, 32], strides = [1, 1]} : vector<13x32xf32> to vector<1x32xf32>
    %256 = vector.broadcast %255 : vector<1x32xf32> to vector<128x32xf32>
    %257 = arith.addf %254, %256 : vector<128x32xf32>
    %258 = arith.addf %210, %257 : vector<128x32xf32>
    %259 = arith.truncf %258 : vector<128x32xf32> to vector<128x32xbf16>
    %c0_77 = arith.constant 0 : index
    %c0_78 = arith.constant 0 : index
    %260 = vector.load %arg9[%c0_77, %c0_78] : memref<32x32xbf16, #tpu.memory_space<vmem>>, vector<32x32xbf16>
    %cst_79 = arith.constant dense<0.000000e+00> : vector<128x32xf32>
    %261 = tpu.matmul %259, %260, %cst_79 {dimension_numbers = #tpu.dot_dimension_numbers<[1], [0], [0], [1], [0, 0, 1, 1], [], []>} : vector<128x32xbf16>, vector<32x32xbf16>, vector<128x32xf32> -> vector<128x32xf32>
    %262 = vector.extract_strided_slice %1 {offsets = [12, 0], sizes = [1, 32], strides = [1, 1]} : vector<13x32xf32> to vector<1x32xf32>
    %263 = vector.broadcast %262 : vector<1x32xf32> to vector<128x32xf32>
    %264 = arith.addf %261, %263 : vector<128x32xf32>
    %265 = vector.shape_cast %0 : vector<2x64x32xf32> to vector<128x32xf32>
    %266 = arith.addf %264, %265 : vector<128x32xf32>
    %267 = vector.shape_cast %266 : vector<128x32xf32> to vector<2x64x32xf32>
    %c0_80 = arith.constant 0 : index
    %c0_81 = arith.constant 0 : index
    %c0_82 = arith.constant 0 : index
    %268 = vector.load %arg10[%c0_80, %c0_81, %c0_82] : memref<2x64x32xf32, #tpu.memory_space<vmem>>, vector<2x64x32xf32>
    tpu.vector_store %arg10[%c0_80, %c0_81, %c0_82], %267 {strides = array<i32>} : memref<2x64x32xf32, #tpu.memory_space<vmem>>, vector<2x64x32xf32>,
    return
  }
  func.func @transform_0(%arg0: i32) -> (i32, i32, i32) {
    %c0_i32 = arith.constant 0 : i32
    %c0_i32_0 = arith.constant 0 : i32
    %c0_i32_1 = arith.constant 0 : i32
    return %arg0, %c0_i32, %c0_i32_0 : i32, i32, i32
  }
  func.func @transform_1(%arg0: i32) -> (i32, i32) {
    %c0_i32 = arith.constant 0 : i32
    %c0_i32_0 = arith.constant 0 : i32
    %c0_i32_1 = arith.constant 0 : i32
    return %c0_i32, %c0_i32_0 : i32, i32
  }
  func.func @transform_2(%arg0: i32) -> (i32, i32) {
    %c0_i32 = arith.constant 0 : i32
    %c0_i32_0 = arith.constant 0 : i32
    %c0_i32_1 = arith.constant 0 : i32
    return %c0_i32, %c0_i32_0 : i32, i32
  }
  func.func @transform_3(%arg0: i32) -> (i32, i32) {
    %c0_i32 = arith.constant 0 : i32
    %c0_i32_0 = arith.constant 0 : i32
    %c0_i32_1 = arith.constant 0 : i32
    return %c0_i32, %c0_i32_0 : i32, i32
  }
  func.func @transform_4(%arg0: i32) -> (i32, i32, i32) {
    %c0_i32 = arith.constant 0 : i32
    %c0_i32_0 = arith.constant 0 : i32
    %c0_i32_1 = arith.constant 0 : i32
    %c0_i32_2 = arith.constant 0 : i32
    return %c0_i32, %c0_i32_0, %c0_i32_1 : i32, i32, i32
  }
  func.func @transform_5(%arg0: i32) -> (i32, i32, i32) {
    %c0_i32 = arith.constant 0 : i32
    %c0_i32_0 = arith.constant 0 : i32
    %c0_i32_1 = arith.constant 0 : i32
    %c0_i32_2 = arith.constant 0 : i32
    return %c0_i32, %c0_i32_0, %c0_i32_1 : i32, i32, i32
  }
  func.func @transform_6(%arg0: i32) -> (i32, i32) {
    %c0_i32 = arith.constant 0 : i32
    %c0_i32_0 = arith.constant 0 : i32
    %c0_i32_1 = arith.constant 0 : i32
    return %c0_i32, %c0_i32_0 : i32, i32
  }
  func.func @transform_7(%arg0: i32) -> (i32, i32) {
    %c0_i32 = arith.constant 0 : i32
    %c0_i32_0 = arith.constant 0 : i32
    %c0_i32_1 = arith.constant 0 : i32
    return %c0_i32, %c0_i32_0 : i32, i32
  }
  func.func @transform_8(%arg0: i32) -> (i32, i32) {
    %c0_i32 = arith.constant 0 : i32
    %c0_i32_0 = arith.constant 0 : i32
    %c0_i32_1 = arith.constant 0 : i32
    return %c0_i32, %c0_i32_0 : i32, i32
  }
  func.func @transform_9(%arg0: i32) -> (i32, i32, i32) {
    %c0_i32 = arith.constant 0 : i32
    %c0_i32_0 = arith.constant 0 : i32
    %c0_i32_1 = arith.constant 0 : i32
    return %arg0, %c0_i32, %c0_i32_0 : i32, i32, i32
  }
}

</mosaic_0001>

<llo_original>
// kernel: _lambda_.1
$region0: #{_lambda_.1}
  #allocation0 [shape = 'u32[]', space=smem, size = 0x4, offset = 0x4, fixed_abs, tag = 'smem constant byte address 0x4 - core index']
  #allocation1 [shape = 'u32[144,128]{1,0:T(1,128)}', space=vmem, size = 0x12000, scoped, tag = 'internal scratch']
  %s0 = inlined_call_operand.hbm [shape: f32[4,64,32], index: 0, kind: input, shape index: {}]
  %s1 = inlined_call_operand.vmem [shape: f32[13,32], index: 1, kind: input, shape index: {}]
  %s2 = inlined_call_operand.vmem [shape: f32[1,256], index: 2, kind: input, shape index: {}]
  %s3 = inlined_call_operand.hbm [shape: bf16[32,32], index: 3, kind: input, shape index: {}]
  %s4 = inlined_call_operand.vmem [shape: bf16[2,32,96], index: 4, kind: input, shape index: {}]
  %s5 = inlined_call_operand.vmem [shape: bf16[2,32,32], index: 5, kind: input, shape index: {}]
  %s6 = inlined_call_operand.hbm [shape: bf16[32,256], index: 6, kind: input, shape index: {}]
  %s7 = inlined_call_operand.vmem [shape: bf16[128,32], index: 7, kind: input, shape index: {}]
  %s8 = inlined_call_operand.hbm [shape: bf16[32,32], index: 8, kind: input, shape index: {}]
  %s9 = inlined_call_operand.hbm [shape: f32[4,64,32], index: 9, kind: output, shape index: {}]
  %s10 = sld [smem:[#allocation0]]
  $region85: #{_lambda_.1} parent=0
    _
  %s12 = ssub.s32 1, %s10
  %s13 = scalar_select 0, %s12, %s10
  $region1: #{_lambda_.1} parent=0
    #allocation2 [shape = 'u8[131072]{0}', space=vmem, size = 0x20000, scoped, tag = 'input window, operand 0']
    #allocation3 [shape = 's32[2]{0}', space=sflag, size = 0x8, scoped, tag = 'scoped memory for _lambda_.1']
    #allocation4 [shape = 's32[2]{0}', space=sflag, size = 0x8, scoped, tag = 'scoped memory for _lambda_.1']
    #allocation5 [shape = 'u8[8192]{0}', space=vmem, size = 0x2000, scoped, tag = 'input window, operand 3, single buffered']
    #allocation6 [shape = 's32[1]{0}', space=sflag, size = 0x4, scoped, tag = 'scoped memory for _lambda_.1']
    #allocation7 [shape = 'u8[16384]{0}', space=vmem, size = 0x4000, scoped, tag = 'input window, operand 6, single buffered']
    #allocation8 [shape = 'u8[8192]{0}', space=vmem, size = 0x2000, scoped, tag = 'input window, operand 8, single buffered']
    #allocation9 [shape = 's32[1]{0}', space=sflag, size = 0x4, scoped, tag = 'scoped memory for _lambda_.1']
    #allocation10 [shape = 'u8[131072]{0}', space=vmem, size = 0x20000, scoped, tag = 'output window, operand 0']
    %14 = vsyncpa [#allocation3], 0
    %s15 = scalar_lea.sflag [#allocation3], 1
    %16 = vsyncpa %s15, 0
    %17 = vsyncpa [#allocation6], 0
    %18 = vsyncpa [#allocation9], 0
    %19 = vsyncpa [#allocation4], 0
    %s20 = scalar_lea.sflag [#allocation4], 1
    %21 = vsyncpa %s20, 0
    loop: start=0, step=1, limit=4
    $region2: #{_lambda_.1} parent=1 // loop_pre_header
      _
    $region3: #{_lambda_.1} parent=1 // loop_header
      %s23 = sphi 0, %s27
      %p24 = scmp.ge.s32.totalorder %s23, 4
      %s33 = sphi 0, %s35
      %s36 = sphi 0, %s33
      %s37 = sphi 0, %s36
      %s53 = sphi 0, %s37
      %s57 = sphi 0, %s57
      %s59 = sphi 0, %s57
      %s60 = sphi 0, %s59
      %s74 = sphi 0, %s60
      %s78 = sphi 0, %s78
      %s80 = sphi 0, %s78
      %s81 = sphi 0, %s80
      %s95 = sphi 0, %s81
      %s99 = sphi 0, %s99
      %s101 = sphi 0, %s99
      %s102 = sphi 0, %s101
      %s116 = sphi 0, %s102
      %s120 = sphi 0, %s120
      %s122 = sphi 0, %s120
      %s123 = sphi 0, %s122
      %s137 = sphi 0, %s123
      %s141 = sphi 0, %s141
      %s143 = sphi 0, %s141
      %s144 = sphi 0, %s143
      %s158 = sphi 0, %s144
      %s162 = sphi 0, %s162
      %s164 = sphi 0, %s162
      %s165 = sphi 0, %s164
      %s179 = sphi 0, %s165
      %s183 = sphi 0, %s183
      %s185 = sphi 0, %s183
      %s186 = sphi 0, %s185
      %s200 = sphi 0, %s186
      %s204 = sphi 0, %s204
      %s206 = sphi 0, %s204
      %s207 = sphi 0, %s206
      %s221 = sphi 0, %s207
      %s227 = sphi 0, %s229
      %s230 = sphi 0, %s227
      %s231 = sphi 0, %s230
      %s247 = sphi 0, %s231
    $region4: #{_lambda_.1} parent=1 // loop_header_branch
      %26 = sbr.rel (%p24) target = $region8
    $region5: #{_lambda_.1} parent=1 // loop_body
      %s28 = ssub.s32 %s23, 1
      %s29 = ssub.s32 %s23, 2
      %s30 = sadd.s32 %s23, 1
      %s31 = ssub.s32 %s23, %s30
      %p32 = scmp.eq.s32.totalorder %s31, 0
      %s34 = sadd.s32 %s33, 1
      %s35 = scalar_select %p32, %s33, %s34
      %p38 = pneg %p32
      %p39 = scmp.eq.s32.totalorder %s23, 1
      %p40 = por %p38, %p39
      %p41 = scmp.ne.s32.totalorder %s33, %s36
      %p42 = scmp.eq.s32.totalorder %s23, 0
      %p43 = por %p41, %p42
      %p44 = scmp.ne.s32.totalorder %s33, %s36
      %p45 = scmp.eq.s32.totalorder %s28, 1
      %p46 = por %p44, %p45
      %p47 = scmp.ne.s32.totalorder %s36, %s37
      %p48 = scmp.eq.s32.totalorder %s28, 0
      %p49 = por %p47, %p48
      %p50 = scmp.ne.s32.totalorder %s36, %s37
      %p51 = scmp.eq.s32.totalorder %s29, 1
      %p52 = por %p50, %p51
      %p54 = scmp.ne.s32.totalorder %s37, %s53
      %p55 = scmp.eq.s32.totalorder %s29, 0
      %p56 = por %p54, %p55
      %s58 = sadd.s32 %s57, 1
      %p61 = scmp.eq.s32.totalorder %s23, 1
      %p62 = scmp.ne.s32.totalorder %s57, %s59
      %p63 = scmp.eq.s32.totalorder %s23, 0
      %p64 = por %p62, %p63
      %p65 = scmp.ne.s32.totalorder %s57, %s59
      %p66 = scmp.eq.s32.totalorder %s28, 1
      %p67 = por %p65, %p66
      %p68 = scmp.ne.s32.totalorder %s59, %s60
      %p69 = scmp.eq.s32.totalorder %s28, 0
      %p70 = por %p68, %p69
      %p71 = scmp.ne.s32.totalorder %s59, %s60
      %p72 = scmp.eq.s32.totalorder %s29, 1
      %p73 = por %p71, %p72
      %p75 = scmp.ne.s32.totalorder %s60, %s74
      %p76 = scmp.eq.s32.totalorder %s29, 0
      %p77 = por %p75, %p76
      %s79 = sadd.s32 %s78, 1
      %p82 = scmp.eq.s32.totalorder %s23, 1
      %p83 = scmp.ne.s32.totalorder %s78, %s80
      %p84 = scmp.eq.s32.totalorder %s23, 0
      %p85 = por %p83, %p84
      %p86 = scmp.ne.s32.totalorder %s78, %s80
      %p87 = scmp.eq.s32.totalorder %s28, 1
      %p88 = por %p86, %p87
      %p89 = scmp.ne.s32.totalorder %s80, %s81
      %p90 = scmp.eq.s32.totalorder %s28, 0
      %p91 = por %p89, %p90
      %p92 = scmp.ne.s32.totalorder %s80, %s81
      %p93 = scmp.eq.s32.totalorder %s29, 1
      %p94 = por %p92, %p93
      %p96 = scmp.ne.s32.totalorder %s81, %s95
      %p97 = scmp.eq.s32.totalorder %s29, 0
      %p98 = por %p96, %p97
      %s100 = sadd.s32 %s99, 1
      %p103 = scmp.eq.s32.totalorder %s23, 1
      %p104 = scmp.ne.s32.totalorder %s99, %s101
      %p105 = scmp.eq.s32.totalorder %s23, 0
      %p106 = por %p104, %p105
      %p107 = scmp.ne.s32.totalorder %s99, %s101
      %p108 = scmp.eq.s32.totalorder %s28, 1
      %p109 = por %p107, %p108
      %p110 = scmp.ne.s32.totalorder %s101, %s102
      %p111 = scmp.eq.s32.totalorder %s28, 0
      %p112 = por %p110, %p111
      %p113 = scmp.ne.s32.totalorder %s101, %s102
      %p114 = scmp.eq.s32.totalorder %s29, 1
      %p115 = por %p113, %p114
      %p117 = scmp.ne.s32.totalorder %s102, %s116
      %p118 = scmp.eq.s32.totalorder %s29, 0
      %p119 = por %p117, %p118
      %s121 = sadd.s32 %s120, 1
      %p124 = scmp.eq.s32.totalorder %s23, 1
      %p125 = scmp.ne.s32.totalorder %s120, %s122
      %p126 = scmp.eq.s32.totalorder %s23, 0
      %p127 = por %p125, %p126
      %p128 = scmp.ne.s32.totalorder %s120, %s122
      %p129 = scmp.eq.s32.totalorder %s28, 1
      %p130 = por %p128, %p129
      %p131 = scmp.ne.s32.totalorder %s122, %s123
      %p132 = scmp.eq.s32.totalorder %s28, 0
      %p133 = por %p131, %p132
      %p134 = scmp.ne.s32.totalorder %s122, %s123
      %p135 = scmp.eq.s32.totalorder %s29, 1
      %p136 = por %p134, %p135
      %p138 = scmp.ne.s32.totalorder %s123, %s137
      %p139 = scmp.eq.s32.totalorder %s29, 0
      %p140 = por %p138, %p139
      %s142 = sadd.s32 %s141, 1
      %p145 = scmp.eq.s32.totalorder %s23, 1
      %p146 = scmp.ne.s32.totalorder %s141, %s143
      %p147 = scmp.eq.s32.totalorder %s23, 0
      %p148 = por %p146, %p147
      %p149 = scmp.ne.s32.totalorder %s141, %s143
      %p150 = scmp.eq.s32.totalorder %s28, 1
      %p151 = por %p149, %p150
      %p152 = scmp.ne.s32.totalorder %s143, %s144
      %p153 = scmp.eq.s32.totalorder %s28, 0
      %p154 = por %p152, %p153
      %p155 = scmp.ne.s32.totalorder %s143, %s144
      %p156 = scmp.eq.s32.totalorder %s29, 1
      %p157 = por %p155, %p156
      %p159 = scmp.ne.s32.totalorder %s144, %s158
      %p160 = scmp.eq.s32.totalorder %s29, 0
      %p161 = por %p159, %p160
      %s163 = sadd.s32 %s162, 1
      %p166 = scmp.eq.s32.totalorder %s23, 1
      %p167 = scmp.ne.s32.totalorder %s162, %s164
      %p168 = scmp.eq.s32.totalorder %s23, 0
      %p169 = por %p167, %p168
      %p170 = scmp.ne.s32.totalorder %s162, %s164
      %p171 = scmp.eq.s32.totalorder %s28, 1
      %p172 = por %p170, %p171
      %p173 = scmp.ne.s32.totalorder %s164, %s165
      %p174 = scmp.eq.s32.totalorder %s28, 0
      %p175 = por %p173, %p174
      %p176 = scmp.ne.s32.totalorder %s164, %s165
      %p177 = scmp.eq.s32.totalorder %s29, 1
      %p178 = por %p176, %p177
      %p180 = scmp.ne.s32.totalorder %s165, %s179
      %p181 = scmp.eq.s32.totalorder %s29, 0
      %p182 = por %p180, %p181
      %s184 = sadd.s32 %s183, 1
      %p187 = scmp.eq.s32.totalorder %s23, 1
      %p188 = scmp.ne.s32.totalorder %s183, %s185
      %p189 = scmp.eq.s32.totalorder %s23, 0
      %p190 = por %p188, %p189
      %p191 = scmp.ne.s32.totalorder %s183, %s185
      %p192 = scmp.eq.s32.totalorder %s28, 1
      %p193 = por %p191, %p192
      %p194 = scmp.ne.s32.totalorder %s185, %s186
      %p195 = scmp.eq.s32.totalorder %s28, 0
      %p196 = por %p194, %p195
      %p197 = scmp.ne.s32.totalorder %s185, %s186
      %p198 = scmp.eq.s32.totalorder %s29, 1
      %p199 = por %p197, %p198
      %p201 = scmp.ne.s32.totalorder %s186, %s200
      %p202 = scmp.eq.s32.totalorder %s29, 0
      %p203 = por %p201, %p202
      %s205 = sadd.s32 %s204, 1
      %p208 = scmp.eq.s32.totalorder %s23, 1
      %p209 = scmp.ne.s32.totalorder %s204, %s206
      %p210 = scmp.eq.s32.totalorder %s23, 0
      %p211 = por %p209, %p210
      %p212 = scmp.ne.s32.totalorder %s204, %s206
      %p213 = scmp.eq.s32.totalorder %s28, 1
      %p214 = por %p212, %p213
      %p215 = scmp.ne.s32.totalorder %s206, %s207
      %p216 = scmp.eq.s32.totalorder %s28, 0
      %p217 = por %p215, %p216
      %p218 = scmp.ne.s32.totalorder %s206, %s207
      %p219 = scmp.eq.s32.totalorder %s29, 1
      %p220 = por %p218, %p219
      %p222 = scmp.ne.s32.totalorder %s207, %s221
      %p223 = scmp.eq.s32.totalorder %s29, 0
      %p224 = por %p222, %p223
      %s225 = ssub.s32 %s23, %s30
      %p226 = scmp.eq.s32.totalorder %s225, 0
      %s228 = sadd.s32 %s227, 1
      %s229 = scalar_select %p226, %s227, %s228
      %p232 = pneg %p226
      %p233 = scmp.eq.s32.totalorder %s23, 1
      %p234 = por %p232, %p233
      %p235 = scmp.ne.s32.totalorder %s227, %s230
      %p236 = scmp.eq.s32.totalorder %s23, 0
      %p237 = por %p235, %p236
      %p238 = scmp.ne.s32.totalorder %s227, %s230
      %p239 = scmp.eq.s32.totalorder %s28, 1
      %p240 = por %p238, %p239
      %p241 = scmp.ne.s32.totalorder %s230, %s231
      %p242 = scmp.eq.s32.totalorder %s28, 0
      %p243 = por %p241, %p242
      %p244 = scmp.ne.s32.totalorder %s230, %s231
      %p245 = scmp.eq.s32.totalorder %s29, 1
      %p246 = por %p244, %p245
      %p248 = scmp.ne.s32.totalorder %s231, %s247
      %p249 = scmp.eq.s32.totalorder %s29, 0
      %p250 = por %p248, %p249
      %p251 = scmp.le.s32.totalorder 1, %s23
      %p252 = scmp.lt.s32.totalorder %s23, 3
      %p253 = pnand %p251, %p252
      %p254 = pneg %p253
      // Predicated region
      $region9: #{_lambda_.1} parent=5 // pred_check
        _
      $region10: #{_lambda_.1} parent=5 // pred_check_branch
        %256 = sbr.rel (%p253) target = $region12
      $region11: #{_lambda_.1} parent=5 // pred_region
        %s257 = ssub.s32 %s23, 1
        // Predicated region
        $region13: #{_lambda_.1} parent=11 // pred_check
          %p258 = pneg %p70
        $region14: #{_lambda_.1} parent=11 // pred_check_branch
          %260 = sbr.rel (%p258) target = $region16
        $region15: #{_lambda_.1} parent=11 // pred_region
          _
        $region16: #{_lambda_.1} parent=11 // pred_fallthru
          _
        // Predicated region
        $region17: #{_lambda_.1} parent=11 // pred_check
          %p261 = pneg %p91
        $region18: #{_lambda_.1} parent=11 // pred_check_branch
          %263 = sbr.rel (%p261) target = $region20
        $region19: #{_lambda_.1} parent=11 // pred_region
          _
        $region20: #{_lambda_.1} parent=11 // pred_fallthru
          _
        // Predicated region
        $region21: #{_lambda_.1} parent=11 // pred_check
          %p264 = pneg %p112
        $region22: #{_lambda_.1} parent=11 // pred_check_branch
          %266 = sbr.rel (%p264) target = $region24
        $region23: #{_lambda_.1} parent=11 // pred_region
          %s268 = ssub.s32 256, 256
          %269 = vsyncadd [#allocation6], %s268
          %s270 = sshll.u32 [#allocation5], 4
          %s271 = int_to_ptr.vmem [resolvable:$true] %s270
          %276 = dma.hbm_to_vmem [thread:$0]  %s3, 256, %s271, [#allocation6], 64, 64, 4
        $region24: #{_lambda_.1} parent=11 // pred_fallthru
          _
        // Predicated region
        $region25: #{_lambda_.1} parent=11 // pred_check
          %p277 = pneg %p133
        $region26: #{_lambda_.1} parent=11 // pred_check_branch
          %279 = sbr.rel (%p277) target = $region28
        $region27: #{_lambda_.1} parent=11 // pred_region
          _
        $region28: #{_lambda_.1} parent=11 // pred_fallthru
          _
        // Predicated region
        $region29: #{_lambda_.1} parent=11 // pred_check
          %p280 = pneg %p154
        $region30: #{_lambda_.1} parent=11 // pred_check_branch
          %282 = sbr.rel (%p280) target = $region32
        $region31: #{_lambda_.1} parent=11 // pred_region
          _
        $region32: #{_lambda_.1} parent=11 // pred_fallthru
          _
        // Predicated region
        $region33: #{_lambda_.1} parent=11 // pred_check
          %p283 = pneg %p175
        $region34: #{_lambda_.1} parent=11 // pred_check_branch
          %285 = sbr.rel (%p283) target = $region36
        $region35: #{_lambda_.1} parent=11 // pred_region
          %s287 = ssub.s32 512, 512
          %288 = vsyncadd [#allocation6], %s287
          %s289 = sshll.u32 [#allocation7], 4
          %s290 = int_to_ptr.vmem [resolvable:$true] %s289
          %295 = dma.hbm_to_vmem [thread:$0]  %s6, 512, %s290, [#allocation6], 128, 128, 8
        $region36: #{_lambda_.1} parent=11 // pred_fallthru
          _
        // Predicated region
        $region37: #{_lambda_.1} parent=11 // pred_check
          %p296 = pneg %p196
        $region38: #{_lambda_.1} parent=11 // pred_check_branch
          %298 = sbr.rel (%p296) target = $region40
        $region39: #{_lambda_.1} parent=11 // pred_region
          _
        $region40: #{_lambda_.1} parent=11 // pred_fallthru
          _
        // Predicated region
        $region41: #{_lambda_.1} parent=11 // pred_check
          %p299 = pneg %p217
        $region42: #{_lambda_.1} parent=11 // pred_check_branch
          %301 = sbr.rel (%p299) target = $region44
        $region43: #{_lambda_.1} parent=11 // pred_region
          %s303 = ssub.s32 256, 256
          %304 = vsyncadd [#allocation9], %s303
          %s305 = sshll.u32 [#allocation8], 4
          %s306 = int_to_ptr.vmem [resolvable:$true] %s305
          %311 = dma.hbm_to_vmem [thread:$0]  %s8, 256, %s306, [#allocation9], 64, 64, 4
        $region44: #{_lambda_.1} parent=11 // pred_fallthru
          _
      $region12: #{_lambda_.1} parent=5 // pred_fallthru
        _
      %p312 = scmp.lt.s32.totalorder %s23, 2
      // Predicated region
      $region45: #{_lambda_.1} parent=5 // pred_check
        %p313 = pneg %p312
      $region46: #{_lambda_.1} parent=5 // pred_check_branch
        %315 = sbr.rel (%p313) target = $region48
      $region47: #{_lambda_.1} parent=5 // pred_region
        // Predicated region
        $region49: #{_lambda_.1} parent=47 // pred_check
          %p316 = pneg %p43
        $region50: #{_lambda_.1} parent=47 // pred_check_branch
          %318 = sbr.rel (%p316) target = $region52
        $region51: #{_lambda_.1} parent=47 // pred_region
          %s319 = sand.u32 %s33, 1
          %s320 = scalar_lea.sflag [#allocation3], %s319
          %s321 = sand.u32 %s33, 1
          %s322 = smul.addr %s321, 128
          %s323 = scalar_lea.vmem [#allocation2], %s322
          %s324 = smul.u32 2, %s23
          %s326 = ssub.s32 2048, 2048
          %327 = vsyncadd %s320, %s326
          %s328 = smul.addr %s324, 8
          %s329 = smul.addr %s328, 128
          %s330 = scalar_lea.hbm %s0, %s329
          %s331 = sshll.u32 %s323, 4
          %s332 = int_to_ptr.vmem [resolvable:$true] %s331
          %337 = dma.hbm_to_vmem [thread:$0]  %s330, 2048, %s332, %s320, 128, 128, 8
        $region52: #{_lambda_.1} parent=47 // pred_fallthru
          _
      $region48: #{_lambda_.1} parent=5 // pred_fallthru
        _
      %p338 = scmp.le.s32.totalorder 1, %s23
      %p339 = scmp.lt.s32.totalorder %s23, 3
      %p340 = pnand %p338, %p339
      %p341 = pneg %p340
      // Predicated region
      $region53: #{_lambda_.1} parent=5 // pred_check
        _
      $region54: #{_lambda_.1} parent=5 // pred_check_branch
        %343 = sbr.rel (%p340) target = $region56
      $region55: #{_lambda_.1} parent=5 // pred_region
        %s344 = ssub.s32 %s23, 1
        %s345 = sand.u32 %s36, 1
        %s346 = scalar_lea.sflag [#allocation3], %s345
        %s347 = sand.u32 %s36, 1
        %s348 = smul.addr %s347, 128
        %s349 = scalar_lea.vmem [#allocation2], %s348
        // Predicated region
        $region57: #{_lambda_.1} parent=55 // pred_check
          %p350 = pneg %p49
        $region58: #{_lambda_.1} parent=55 // pred_check_branch
          %352 = sbr.rel (%p350) target = $region60
        $region59: #{_lambda_.1} parent=55 // pred_region
          %353 = dma.done %s346, 2048
        $region60: #{_lambda_.1} parent=55 // pred_fallthru
          _
        // Predicated region
        $region61: #{_lambda_.1} parent=55 // pred_check
          %p354 = pneg %p112
        $region62: #{_lambda_.1} parent=55 // pred_check_branch
          %356 = sbr.rel (%p354) target = $region64
        $region63: #{_lambda_.1} parent=55 // pred_region
          %357 = dma.done [#allocation6], 256
        $region64: #{_lambda_.1} parent=55 // pred_fallthru
          _
        // Predicated region
        $region65: #{_lambda_.1} parent=55 // pred_check
          %p358 = pneg %p175
        $region66: #{_lambda_.1} parent=55 // pred_check_branch
          %360 = sbr.rel (%p358) target = $region68
        $region67: #{_lambda_.1} parent=55 // pred_region
          %361 = dma.done [#allocation6], 512
        $region68: #{_lambda_.1} parent=55 // pred_fallthru
          _
        // Predicated region
        $region69: #{_lambda_.1} parent=55 // pred_check
          %p362 = pneg %p217
        $region70: #{_lambda_.1} parent=55 // pred_check_branch
          %364 = sbr.rel (%p362) target = $region72
        $region71: #{_lambda_.1} parent=55 // pred_region
          %365 = dma.done [#allocation9], 256
        $region72: #{_lambda_.1} parent=55 // pred_fallthru
          _
        %s366 = sand.u32 %s36, 1
        %s367 = scalar_lea.sflag [#allocation3], %s366
        %s368 = sand.u32 %s36, 1
        %s369 = smul.addr %s368, 128
        %s370 = scalar_lea.vmem [#allocation2], %s369
        %p371 = pneg %p49
        %p372 = pneg %p46
        %p373 = pneg %p70
        %p374 = pneg %p67
        %p375 = pneg %p91
        %p376 = pneg %p88
        %p377 = pneg %p112
        %p378 = pneg %p109
        %p379 = pneg %p133
        %p380 = pneg %p130
        %p381 = pneg %p154
        %p382 = pneg %p151
        %p383 = pneg %p175
        %p384 = pneg %p172
        %p385 = pneg %p196
        %p386 = pneg %p193
        %p387 = pneg %p217
        %p388 = pneg %p214
        %p389 = pneg %p243
        %p390 = pneg %p240
        %s391 = sand.u32 %s230, 1
        %s392 = scalar_lea.sflag [#allocation4], %s391
        %s393 = sand.u32 %s230, 1
        %s394 = smul.addr %s393, 128
        %s395 = scalar_lea.vmem [#allocation10], %s394
        %s396 = smul.u32 2, %s28
        %s397 = smul.u32 2, %s28
        %v399 = vld [vmem:[%s349] sm:$0xff]
        %v400 = vld [vmem:[%s349 + $0x8] sm:$0xff]
        %v401 = vld [vmem:[%s349 + $0x10] sm:$0xff]
        %v402 = vld [vmem:[%s349 + $0x18] sm:$0xff]
        %v403 = vld [vmem:[%s349 + $0x20] sm:$0xff]
        %v404 = vld [vmem:[%s349 + $0x28] sm:$0xff]
        %v405 = vld [vmem:[%s349 + $0x30] sm:$0xff]
        %v406 = vld [vmem:[%s349 + $0x38] sm:$0xff]
        %v407 = vld [vmem:[%s349 + $0x40] sm:$0xff]
        %v408 = vld [vmem:[%s349 + $0x48] sm:$0xff]
        %v409 = vld [vmem:[%s349 + $0x50] sm:$0xff]
        %v410 = vld [vmem:[%s349 + $0x58] sm:$0xff]
        %v411 = vld [vmem:[%s349 + $0x60] sm:$0xff]
        %v412 = vld [vmem:[%s349 + $0x68] sm:$0xff]
        %v413 = vld [vmem:[%s349 + $0x70] sm:$0xff]
        %v414 = vld [vmem:[%s349 + $0x78] sm:$0xff]
        %v415 = vld [vmem:[%s1] sm:$0xff]
        %v416 = vld [vmem:[%s1 + $0x8] sm:$0x1f]
        %vm417 = vcmask 261120
        %v418 = vsel %vm417, %v399, 0.0
        %v419 = vsel %vm417, %v400, 0.0
        %v420 = vadd.f32 %v418, %v419
        %v421 = vsel %vm417, %v401, 0.0
        %v422 = vadd.f32 %v420, %v421
        %v423 = vsel %vm417, %v402, 0.0
        %v424 = vadd.f32 %v422, %v423
        %v425 = vsel %vm417, %v403, 0.0
        %v426 = vadd.f32 %v424, %v425
        %v427 = vsel %vm417, %v404, 0.0
        %v428 = vadd.f32 %v426, %v427
        %v429 = vsel %vm417, %v405, 0.0
        %v430 = vadd.f32 %v428, %v429
        %v431 = vsel %vm417, %v406, 0.0
        %v432 = vadd.f32 %v430, %v431
        %v433 = vrot.slane %v432, 4
        %v434 = vadd.f32 %v432, %v433
        %v435 = vrot.slane %v434, 2
        %v436 = vadd.f32 %v434, %v435
        %v437 = vrot.slane %v436, 1
        %v438 = vadd.f32 %v436, %v437
        %v439 = vsel %vm417, %v407, 0.0
        %v440 = vsel %vm417, %v408, 0.0
        %v441 = vadd.f32 %v439, %v440
        %v442 = vsel %vm417, %v409, 0.0
        %v443 = vadd.f32 %v441, %v442
        %v444 = vsel %vm417, %v410, 0.0
        %v445 = vadd.f32 %v443, %v444
        %v446 = vsel %vm417, %v411, 0.0
        %v447 = vadd.f32 %v445, %v446
        %v448 = vsel %vm417, %v412, 0.0
        %v449 = vadd.f32 %v447, %v448
        %v450 = vsel %vm417, %v413, 0.0
        %v451 = vadd.f32 %v449, %v450
        %v452 = vsel %vm417, %v414, 0.0
        %v453 = vadd.f32 %v451, %v452
        %v454 = vrot.slane %v453, 4
        %v455 = vadd.f32 %v453, %v454
        %v456 = vrot.slane %v455, 2
        %v457 = vadd.f32 %v455, %v456
        %v458 = vrot.slane %v457, 1
        %v459 = vadd.f32 %v457, %v458
        %v460 = vrcp.pop 64.0
        %v461 = vmul.f32 %v438, %v460
        %v462 = vmul.f32 %v459, %v460
        %v463 = vmul.f32 %v399, %v399
        %v464 = vmul.f32 %v400, %v400
        %v465 = vmul.f32 %v401, %v401
        %v466 = vmul.f32 %v402, %v402
        %v467 = vmul.f32 %v403, %v403
        %v468 = vmul.f32 %v404, %v404
        %v469 = vmul.f32 %v405, %v405
        %v470 = vmul.f32 %v406, %v406
        %v471 = vmul.f32 %v407, %v407
        %v472 = vmul.f32 %v408, %v408
        %v473 = vmul.f32 %v409, %v409
        %v474 = vmul.f32 %v410, %v410
        %v475 = vmul.f32 %v411, %v411
        %v476 = vmul.f32 %v412, %v412
        %v477 = vmul.f32 %v413, %v413
        %v478 = vmul.f32 %v414, %v414
        %v479 = vsel %vm417, %v463, 0.0
        %v480 = vsel %vm417, %v464, 0.0
        %v481 = vadd.f32 %v479, %v480
        %v482 = vsel %vm417, %v465, 0.0
        %v483 = vadd.f32 %v481, %v482
        %v484 = vsel %vm417, %v466, 0.0
        %v485 = vadd.f32 %v483, %v484
        %v486 = vsel %vm417, %v467, 0.0
        %v487 = vadd.f32 %v485, %v486
        %v488 = vsel %vm417, %v468, 0.0
        %v489 = vadd.f32 %v487, %v488
        %v490 = vsel %vm417, %v469, 0.0
        %v491 = vadd.f32 %v489, %v490
        %v492 = vsel %vm417, %v470, 0.0
        %v493 = vadd.f32 %v491, %v492
        %v494 = vrot.slane %v493, 4
        %v495 = vadd.f32 %v493, %v494
        %v496 = vrot.slane %v495, 2
        %v497 = vadd.f32 %v495, %v496
        %v498 = vrot.slane %v497, 1
        %v499 = vadd.f32 %v497, %v498
        %v500 = vsel %vm417, %v471, 0.0
        %v501 = vsel %vm417, %v472, 0.0
        %v502 = vadd.f32 %v500, %v501
        %v503 = vsel %vm417, %v473, 0.0
        %v504 = vadd.f32 %v502, %v503
        %v505 = vsel %vm417, %v474, 0.0
        %v506 = vadd.f32 %v504, %v505
        %v507 = vsel %vm417, %v475, 0.0
        %v508 = vadd.f32 %v506, %v507
        %v509 = vsel %vm417, %v476, 0.0
        %v510 = vadd.f32 %v508, %v509
        %v511 = vsel %vm417, %v477, 0.0
        %v512 = vadd.f32 %v510, %v511
        %v513 = vsel %vm417, %v478, 0.0
        %v514 = vadd.f32 %v512, %v513
        %v515 = vrot.slane %v514, 4
        %v516 = vadd.f32 %v514, %v515
        %v517 = vrot.slane %v516, 2
        %v518 = vadd.f32 %v516, %v517
        %v519 = vrot.slane %v518, 1
        %v520 = vadd.f32 %v518, %v519
        %v521 = vmul.f32 %v499, %v460
        %v522 = vmul.f32 %v520, %v460
        %v523 = vmul.f32 %v461, %v461
        %v524 = vmul.f32 %v462, %v462
        %v525 = vsub.f32 %v521, %v523
        %v526 = vsub.f32 %v522, %v524
        %v527 = vmax.f32 %v525, 0.0
        %v528 = vmax.f32 %v526, 0.0
        %v529 = vsub.f32 %v399, %v461
        %v530 = vsub.f32 %v400, %v461
        %v531 = vsub.f32 %v401, %v461
        %v532 = vsub.f32 %v402, %v461
        %v533 = vsub.f32 %v403, %v461
        %v534 = vsub.f32 %v404, %v461
        %v535 = vsub.f32 %v405, %v461
        %v536 = vsub.f32 %v406, %v461
        %v537 = vsub.f32 %v407, %v462
        %v538 = vsub.f32 %v408, %v462
        %v539 = vsub.f32 %v409, %v462
        %v540 = vsub.f32 %v410, %v462
        %v541 = vsub.f32 %v411, %v462
        %v542 = vsub.f32 %v412, %v462
        %v543 = vsub.f32 %v413, %v462
        %v544 = vsub.f32 %v414, %v462
        %v545 = vadd.f32 %v527, 1e-06
        %v546 = vadd.f32 %v528, 1e-06
        %v547 = vrsqrt.pop %v545
        %v548 = vrsqrt.pop %v546
        %v549 = vmul.f32 %v529, %v547
        %v550 = vmul.f32 %v530, %v547
        %v551 = vmul.f32 %v531, %v547
        %v552 = vmul.f32 %v532, %v547
        %v553 = vmul.f32 %v533, %v547
        %v554 = vmul.f32 %v534, %v547
        %v555 = vmul.f32 %v535, %v547
        %v556 = vmul.f32 %v536, %v547
        %v557 = vmul.f32 %v537, %v548
        %v558 = vmul.f32 %v538, %v548
        %v559 = vmul.f32 %v539, %v548
        %v560 = vmul.f32 %v540, %v548
        %v561 = vmul.f32 %v541, %v548
        %v562 = vmul.f32 %v542, %v548
        %v563 = vmul.f32 %v543, %v548
        %v564 = vmul.f32 %v544, %v548
        %v565 = vlaneseq
        %v566 = vshrl.u32 %v565, 7
        %v567 = vsub.s32 0, %v566
        %v568 = vrot.slane %v415, %v567
        %v569 = vmul.f32 %v549, %v568
        %v570 = vmul.f32 %v550, %v568
        %v571 = vmul.f32 %v551, %v568
        %v572 = vmul.f32 %v552, %v568
        %v573 = vmul.f32 %v553, %v568
        %v574 = vmul.f32 %v554, %v568
        %v575 = vmul.f32 %v555, %v568
        %v576 = vmul.f32 %v556, %v568
        %v577 = vmul.f32 %v557, %v568
        %v578 = vmul.f32 %v558, %v568
        %v579 = vmul.f32 %v559, %v568
        %v580 = vmul.f32 %v560, %v568
        %v581 = vmul.f32 %v561, %v568
        %v582 = vmul.f32 %v562, %v568
        %v583 = vmul.f32 %v563, %v568
        %v584 = vmul.f32 %v564, %v568
        %v585 = vlaneseq
        %v586 = vshrl.u32 %v585, 7
        %v587 = vsub.s32 1, %v586
        %v588 = vrot.slane %v415, %v587
        %v589 = vadd.f32 %v569, %v588
        %v590 = vadd.f32 %v570, %v588
        %v591 = vadd.f32 %v571, %v588
        %v592 = vadd.f32 %v572, %v588
        %v593 = vadd.f32 %v573, %v588
        %v594 = vadd.f32 %v574, %v588
        %v595 = vadd.f32 %v575, %v588
        %v596 = vadd.f32 %v576, %v588
        %v597 = vadd.f32 %v577, %v588
        %v598 = vadd.f32 %v578, %v588
        %v599 = vadd.f32 %v579, %v588
        %v600 = vadd.f32 %v580, %v588
        %v601 = vadd.f32 %v581, %v588
        %v602 = vadd.f32 %v582, %v588
        %v603 = vadd.f32 %v583, %v588
        %v604 = vadd.f32 %v584, %v588
        %v605 = vpack.c.bf16 %v590, %v589
        %v606 = vpack.c.bf16 %v592, %v591
        %v607 = vpack.c.bf16 %v594, %v593
        %v608 = vpack.c.bf16 %v596, %v595
        %v609 = vpack.c.bf16 %v598, %v597
        %v610 = vpack.c.bf16 %v600, %v599
        %v611 = vpack.c.bf16 %v602, %v601
        %v612 = vpack.c.bf16 %v604, %v603
        %v613 = vld [vmem:[#allocation5] sm:$0xf]
        %v614 = vld [vmem:[#allocation5 + $0x4] sm:$0xf]
        %v615 = vld [vmem:[#allocation5 + $0x8] sm:$0xf]
        %v616 = vld [vmem:[#allocation5 + $0xc] sm:$0xf]
        %v617 = vlaneseq
        %v618 = vshrl.u32 %v617, 7
        %v619 = vsub.s32 2, %v618
        %v620 = vrot.slane %v415, %v619
        %v625 = vunpack.c.l.b16 %v613
        %v626 = vunpack.c.l.b16 %v614
        %v627 = vunpack.c.l.b16 %v615
        %v628 = vunpack.c.l.b16 %v616
        %v629 = vpack.c.b16 %v626, %v625
        %v630 = vpack.c.b16 %v628, %v627
        %v634 = vsel %vm417, %v605, 0
        %v637 = vsel %vm417, %v606, 0
        %v640 = vsel %vm417, %v607, 0
        %v643 = vsel %vm417, %v608, 0
        %v646 = vsel %vm417, %v609, 0
        %v649 = vsel %vm417, %v610, 0
        %v652 = vsel %vm417, %v611, 0
        %v655 = vsel %vm417, %v612, 0
        %657 = vmatprep.subr.bf16.mxu0 0
        %658 = vmatpush1.bf16.msra.mxu0 0
        %659 = vmatprep.subr.bf16.mxu0 0
        %660 = vmatpush1.bf16.msra.mxu0 0
        %661 = vmatprep.subr.bf16.mxu0 0
        %662 = vmatpush1.bf16.msra.mxu0 0
        %663 = vmatprep.subr.bf16.mxu0 0
        %664 = vmatpush1.bf16.msra.mxu0 0
        %665 = vmatprep.subr.bf16.mxu0 0
        %666 = vmatpush1.bf16.msra.mxu0 0
        %667 = vmatprep.subr.bf16.mxu0 0
        %668 = vmatpush1.bf16.msra.mxu0 0
        %669 = vmatprep.subr.bf16.mxu0 0
        %670 = vmatpush1.bf16.msra.mxu0 %v630
        %671 = vmatprep.subr.bf16.mxu0 0
        %672 = vmatpush1.bf16.msra.mxu0 %v629
        %673 = vmatprep.subr.bf16.mxu0 0
        %674 = vmatpush2.bf16.msra.mxu0 0
        %675 = vmatprep.subr.bf16.mxu0 0
        %676 = vmatpush2.bf16.msra.mxu0 0
        %677 = vmatprep.subr.bf16.mxu0 0
        %678 = vmatpush2.bf16.msra.mxu0 0
        %679 = vmatprep.subr.bf16.mxu0 0
        %680 = vmatpush2.bf16.msra.mxu0 0
        %681 = vmatprep.subr.bf16.mxu0 0
        %682 = vmatpush2.bf16.msra.mxu0 0
        %683 = vmatprep.subr.bf16.mxu0 0
        %684 = vmatpush2.bf16.msra.mxu0 0
        %685 = vmatprep.subr.bf16.mxu0 0
        %686 = vmatpush2.bf16.msra.mxu0 0
        %687 = vmatprep.subr.bf16.mxu0 0
        %688 = vmatpush2.bf16.msra.mxu0 0
        %689 = vmatprep.mubr.bf16.mxu0 0
        %690 = vmatmul.mubr.bf16.gmra.mxu0 %v634
        %v691 = vpop.f32.mrf.mxu0
        %v692 = vadd.f32 %v620, %v691
        %v693 = vpop.f32.mrf.mxu0
        %v694 = vpop.f32.mrf.mxu0
        %v695 = vadd.f32 %v620, %v694
        %v696 = vpop.f32.mrf.mxu0
        %697 = vmatprep.mubr.bf16.mxu0 0
        %698 = vmatmul.mubr.bf16.gmra.mxu0 %v637
        %v699 = vpop.f32.mrf.mxu0
        %v700 = vadd.f32 %v620, %v699
        %v701 = vpop.f32.mrf.mxu0
        %v702 = vpop.f32.mrf.mxu0
        %v703 = vadd.f32 %v620, %v702
        %v704 = vpop.f32.mrf.mxu0
        %705 = vmatprep.mubr.bf16.mxu0 0
        %706 = vmatmul.mubr.bf16.gmra.mxu0 %v640
        %v707 = vpop.f32.mrf.mxu0
        %v708 = vadd.f32 %v620, %v707
        %v709 = vpop.f32.mrf.mxu0
        %v710 = vpop.f32.mrf.mxu0
        %v711 = vadd.f32 %v620, %v710
        %v712 = vpop.f32.mrf.mxu0
        %713 = vmatprep.mubr.bf16.mxu0 0
        %714 = vmatmul.mubr.bf16.gmra.mxu0 %v643
        %v715 = vpop.f32.mrf.mxu0
        %v716 = vadd.f32 %v620, %v715
        %v717 = vpop.f32.mrf.mxu0
        %v718 = vpop.f32.mrf.mxu0
        %v719 = vadd.f32 %v620, %v718
        %v720 = vpop.f32.mrf.mxu0
        %721 = vmatprep.mubr.bf16.mxu0 0
        %722 = vmatmul.mubr.bf16.gmra.mxu0 %v646
        %v723 = vpop.f32.mrf.mxu0
        %v724 = vadd.f32 %v620, %v723
        %v725 = vpop.f32.mrf.mxu0
        %v726 = vpop.f32.mrf.mxu0
        %v727 = vadd.f32 %v620, %v726
        %v728 = vpop.f32.mrf.mxu0
        %729 = vmatprep.mubr.bf16.mxu0 0
        %730 = vmatmul.mubr.bf16.gmra.mxu0 %v649
        %v731 = vpop.f32.mrf.mxu0
        %v732 = vadd.f32 %v620, %v731
        %v733 = vpop.f32.mrf.mxu0
        %v734 = vpop.f32.mrf.mxu0
        %v735 = vadd.f32 %v620, %v734
        %v736 = vpop.f32.mrf.mxu0
        %737 = vmatprep.mubr.bf16.mxu0 0
        %738 = vmatmul.mubr.bf16.gmra.mxu0 %v652
        %v739 = vpop.f32.mrf.mxu0
        %v740 = vadd.f32 %v620, %v739
        %v741 = vpop.f32.mrf.mxu0
        %v742 = vpop.f32.mrf.mxu0
        %v743 = vadd.f32 %v620, %v742
        %v744 = vpop.f32.mrf.mxu0
        %745 = vmatprep.mubr.bf16.mxu0 0
        %746 = vmatmul.mubr.bf16.gmra.mxu0 %v655
        %v747 = vpop.f32.mrf.mxu0
        %v748 = vadd.f32 %v620, %v747
        %v749 = vpop.f32.mrf.mxu0
        %v750 = vpop.f32.mrf.mxu0
        %v751 = vadd.f32 %v620, %v750
        %v752 = vpop.f32.mrf.mxu0
        %753 = vdwg.mxu0
        %v754 = vsel %vm417, %v692, 0.0
        %755 = vadd.xlane.f32.xlu0 %v754
        %v756 = vpop.xlane.xlu0 %755
        %v757 = vsel %vm417, %v695, 0.0
        %758 = vadd.xlane.f32.xlu0 %v757
        %v759 = vpop.xlane.xlu0 %758
        %v760 = vsel %vm417, %v700, 0.0
        %761 = vadd.xlane.f32.xlu0 %v760
        %v762 = vpop.xlane.xlu0 %761
        %v763 = vsel %vm417, %v703, 0.0
        %764 = vadd.xlane.f32.xlu0 %v763
        %v765 = vpop.xlane.xlu0 %764
        %v766 = vsel %vm417, %v708, 0.0
        %767 = vadd.xlane.f32.xlu0 %v766
        %v768 = vpop.xlane.xlu0 %767
        %v769 = vsel %vm417, %v711, 0.0
        %770 = vadd.xlane.f32.xlu0 %v769
        %v771 = vpop.xlane.xlu0 %770
        %v772 = vsel %vm417, %v716, 0.0
        %773 = vadd.xlane.f32.xlu0 %v772
        %v774 = vpop.xlane.xlu0 %773
        %v775 = vsel %vm417, %v719, 0.0
        %776 = vadd.xlane.f32.xlu0 %v775
        %v777 = vpop.xlane.xlu0 %776
        %v778 = vsel %vm417, %v724, 0.0
        %779 = vadd.xlane.f32.xlu0 %v778
        %v780 = vpop.xlane.xlu0 %779
        %v781 = vsel %vm417, %v727, 0.0
        %782 = vadd.xlane.f32.xlu0 %v781
        %v783 = vpop.xlane.xlu0 %782
        %v784 = vsel %vm417, %v732, 0.0
        %785 = vadd.xlane.f32.xlu0 %v784
        %v786 = vpop.xlane.xlu0 %785
        %v787 = vsel %vm417, %v735, 0.0
        %788 = vadd.xlane.f32.xlu0 %v787
        %v789 = vpop.xlane.xlu0 %788
        %v790 = vsel %vm417, %v740, 0.0
        %791 = vadd.xlane.f32.xlu0 %v790
        %v792 = vpop.xlane.xlu0 %791
        %v793 = vsel %vm417, %v743, 0.0
        %794 = vadd.xlane.f32.xlu0 %v793
        %v795 = vpop.xlane.xlu0 %794
        %v796 = vsel %vm417, %v748, 0.0
        %797 = vadd.xlane.f32.xlu0 %v796
        %v798 = vpop.xlane.xlu0 %797
        %v799 = vsel %vm417, %v751, 0.0
        %800 = vadd.xlane.f32.xlu0 %v799
        %v801 = vpop.xlane.xlu0 %800
        %v802 = vrcp.pop 32.0
        %v803 = vmul.f32 %v756, %v802
        %v804 = vmul.f32 %v759, %v802
        %v805 = vmul.f32 %v762, %v802
        %v806 = vmul.f32 %v765, %v802
        %v807 = vmul.f32 %v768, %v802
        %v808 = vmul.f32 %v771, %v802
        %v809 = vmul.f32 %v774, %v802
        %v810 = vmul.f32 %v777, %v802
        %v811 = vmul.f32 %v780, %v802
        %v812 = vmul.f32 %v783, %v802
        %v813 = vmul.f32 %v786, %v802
        %v814 = vmul.f32 %v789, %v802
        %v815 = vmul.f32 %v792, %v802
        %v816 = vmul.f32 %v795, %v802
        %v817 = vmul.f32 %v798, %v802
        %v818 = vmul.f32 %v801, %v802
        %v819 = vsub.f32 %v692, %v803
        %v820 = vsub.f32 %v695, %v804
        %v821 = vsub.f32 %v700, %v805
        %v822 = vsub.f32 %v703, %v806
        %v823 = vsub.f32 %v708, %v807
        %v824 = vsub.f32 %v711, %v808
        %v825 = vsub.f32 %v716, %v809
        %v826 = vsub.f32 %v719, %v810
        %v827 = vsub.f32 %v724, %v811
        %v828 = vsub.f32 %v727, %v812
        %v829 = vsub.f32 %v732, %v813
        %v830 = vsub.f32 %v735, %v814
        %v831 = vsub.f32 %v740, %v815
        %v832 = vsub.f32 %v743, %v816
        %v833 = vsub.f32 %v748, %v817
        %v834 = vsub.f32 %v751, %v818
        %v835 = vmul.f32 %v819, %v819
        %v836 = vmul.f32 %v820, %v820
        %v837 = vmul.f32 %v821, %v821
        %v838 = vmul.f32 %v822, %v822
        %v839 = vmul.f32 %v823, %v823
        %v840 = vmul.f32 %v824, %v824
        %v841 = vmul.f32 %v825, %v825
        %v842 = vmul.f32 %v826, %v826
        %v843 = vmul.f32 %v827, %v827
        %v844 = vmul.f32 %v828, %v828
        %v845 = vmul.f32 %v829, %v829
        %v846 = vmul.f32 %v830, %v830
        %v847 = vmul.f32 %v831, %v831
        %v848 = vmul.f32 %v832, %v832
        %v849 = vmul.f32 %v833, %v833
        %v850 = vmul.f32 %v834, %v834
        %v851 = vsel %vm417, %v835, 0.0
        %852 = vadd.xlane.f32.xlu0 %v851
        %v853 = vpop.xlane.xlu0 %852
        %v854 = vsel %vm417, %v836, 0.0
        %855 = vadd.xlane.f32.xlu0 %v854
        %v856 = vpop.xlane.xlu0 %855
        %v857 = vsel %vm417, %v837, 0.0
        %858 = vadd.xlane.f32.xlu0 %v857
        %v859 = vpop.xlane.xlu0 %858
        %v860 = vsel %vm417, %v838, 0.0
        %861 = vadd.xlane.f32.xlu0 %v860
        %v862 = vpop.xlane.xlu0 %861
        %v863 = vsel %vm417, %v839, 0.0
        %864 = vadd.xlane.f32.xlu0 %v863
        %v865 = vpop.xlane.xlu0 %864
        %v866 = vsel %vm417, %v840, 0.0
        %867 = vadd.xlane.f32.xlu0 %v866
        %v868 = vpop.xlane.xlu0 %867
        %v869 = vsel %vm417, %v841, 0.0
        %870 = vadd.xlane.f32.xlu0 %v869
        %v871 = vpop.xlane.xlu0 %870
        %v872 = vsel %vm417, %v842, 0.0
        %873 = vadd.xlane.f32.xlu0 %v872
        %v874 = vpop.xlane.xlu0 %873
        %v875 = vsel %vm417, %v843, 0.0
        %876 = vadd.xlane.f32.xlu0 %v875
        %v877 = vpop.xlane.xlu0 %876
        %v878 = vsel %vm417, %v844, 0.0
        %879 = vadd.xlane.f32.xlu0 %v878
        %v880 = vpop.xlane.xlu0 %879
        %v881 = vsel %vm417, %v845, 0.0
        %882 = vadd.xlane.f32.xlu0 %v881
        %v883 = vpop.xlane.xlu0 %882
        %v884 = vsel %vm417, %v846, 0.0
        %885 = vadd.xlane.f32.xlu0 %v884
        %v886 = vpop.xlane.xlu0 %885
        %v887 = vsel %vm417, %v847, 0.0
        %888 = vadd.xlane.f32.xlu0 %v887
        %v889 = vpop.xlane.xlu0 %888
        %v890 = vsel %vm417, %v848, 0.0
        %891 = vadd.xlane.f32.xlu0 %v890
        %v892 = vpop.xlane.xlu0 %891
        %v893 = vsel %vm417, %v849, 0.0
        %894 = vadd.xlane.f32.xlu0 %v893
        %v895 = vpop.xlane.xlu0 %894
        %v896 = vsel %vm417, %v850, 0.0
        %897 = vadd.xlane.f32.xlu0 %v896
        %v898 = vpop.xlane.xlu0 %897
        %v899 = vmul.f32 %v853, %v802
        %v900 = vmul.f32 %v856, %v802
        %v901 = vmul.f32 %v859, %v802
        %v902 = vmul.f32 %v862, %v802
        %v903 = vmul.f32 %v865, %v802
        %v904 = vmul.f32 %v868, %v802
        %v905 = vmul.f32 %v871, %v802
        %v906 = vmul.f32 %v874, %v802
        %v907 = vmul.f32 %v877, %v802
        %v908 = vmul.f32 %v880, %v802
        %v909 = vmul.f32 %v883, %v802
        %v910 = vmul.f32 %v886, %v802
        %v911 = vmul.f32 %v889, %v802
        %v912 = vmul.f32 %v892, %v802
        %v913 = vmul.f32 %v895, %v802
        %v914 = vmul.f32 %v898, %v802
        %v915 = vadd.f32 %v899, 1e-05
        %v916 = vadd.f32 %v900, 1e-05
        %v917 = vadd.f32 %v901, 1e-05
        %v918 = vadd.f32 %v902, 1e-05
        %v919 = vadd.f32 %v903, 1e-05
        %v920 = vadd.f32 %v904, 1e-05
        %v921 = vadd.f32 %v905, 1e-05
        %v922 = vadd.f32 %v906, 1e-05
        %v923 = vadd.f32 %v907, 1e-05
        %v924 = vadd.f32 %v908, 1e-05
        %v925 = vadd.f32 %v909, 1e-05
        %v926 = vadd.f32 %v910, 1e-05
        %v927 = vadd.f32 %v911, 1e-05
        %v928 = vadd.f32 %v912, 1e-05
        %v929 = vadd.f32 %v913, 1e-05
        %v930 = vadd.f32 %v914, 1e-05
        %v931 = vrsqrt.pop %v915
        %v932 = vrsqrt.pop %v916
        %v933 = vrsqrt.pop %v917
        %v934 = vrsqrt.pop %v918
        %v935 = vrsqrt.pop %v919
        %v936 = vrsqrt.pop %v920
        %v937 = vrsqrt.pop %v921
        %v938 = vrsqrt.pop %v922
        %v939 = vrsqrt.pop %v923
        %v940 = vrsqrt.pop %v924
        %v941 = vrsqrt.pop %v925
        %v942 = vrsqrt.pop %v926
        %v943 = vrsqrt.pop %v927
        %v944 = vrsqrt.pop %v928
        %v945 = vrsqrt.pop %v929
        %v946 = vrsqrt.pop %v930
        %v947 = vmul.f32 %v819, %v931
        %v948 = vmul.f32 %v820, %v932
        %v949 = vmul.f32 %v821, %v933
        %v950 = vmul.f32 %v822, %v934
        %v951 = vmul.f32 %v823, %v935
        %v952 = vmul.f32 %v824, %v936
        %v953 = vmul.f32 %v825, %v937
        %v954 = vmul.f32 %v826, %v938
        %v955 = vmul.f32 %v827, %v939
        %v956 = vmul.f32 %v828, %v940
        %v957 = vmul.f32 %v829, %v941
        %v958 = vmul.f32 %v830, %v942
        %v959 = vmul.f32 %v831, %v943
        %v960 = vmul.f32 %v832, %v944
        %v961 = vmul.f32 %v833, %v945
        %v962 = vmul.f32 %v834, %v946
        %v963 = vlaneseq
        %v964 = vshrl.u32 %v963, 7
        %v965 = vsub.s32 3, %v964
        %v966 = vrot.slane %v415, %v965
        %v967 = vmul.f32 %v947, %v966
        %v968 = vmul.f32 %v948, %v966
        %v969 = vmul.f32 %v949, %v966
        %v970 = vmul.f32 %v950, %v966
        %v971 = vmul.f32 %v951, %v966
        %v972 = vmul.f32 %v952, %v966
        %v973 = vmul.f32 %v953, %v966
        %v974 = vmul.f32 %v954, %v966
        %v975 = vmul.f32 %v955, %v966
        %v976 = vmul.f32 %v956, %v966
        %v977 = vmul.f32 %v957, %v966
        %v978 = vmul.f32 %v958, %v966
        %v979 = vmul.f32 %v959, %v966
        %v980 = vmul.f32 %v960, %v966
        %v981 = vmul.f32 %v961, %v966
        %v982 = vmul.f32 %v962, %v966
        %v983 = vlaneseq
        %v984 = vshrl.u32 %v983, 7
        %v985 = vsub.s32 4, %v984
        %v986 = vrot.slane %v415, %v985
        %v987 = vadd.f32 %v967, %v986
        %v988 = vadd.f32 %v968, %v986
        %v989 = vadd.f32 %v969, %v986
        %v990 = vadd.f32 %v970, %v986
        %v991 = vadd.f32 %v971, %v986
        %v992 = vadd.f32 %v972, %v986
        %v993 = vadd.f32 %v973, %v986
        %v994 = vadd.f32 %v974, %v986
        %v995 = vadd.f32 %v975, %v986
        %v996 = vadd.f32 %v976, %v986
        %v997 = vadd.f32 %v977, %v986
        %v998 = vadd.f32 %v978, %v986
        %v999 = vadd.f32 %v979, %v986
        %v1000 = vadd.f32 %v980, %v986
        %v1001 = vadd.f32 %v981, %v986
        %v1002 = vadd.f32 %v982, %v986
        %v1003 = vld [vmem:[%s4] sm:$0xf]
        %v1004 = vld [vmem:[%s4 + $0x4] sm:$0xf]
        %v1005 = vld [vmem:[%s4 + $0x8] sm:$0xf]
        %v1006 = vld [vmem:[%s4 + $0xc] sm:$0xf]
        %v1007 = vld [vmem:[%s5] sm:$0xf]
        %v1008 = vld [vmem:[%s5 + $0x4] sm:$0xf]
        %v1009 = vld [vmem:[%s5 + $0x8] sm:$0xf]
        %v1010 = vld [vmem:[%s5 + $0xc] sm:$0xf]
        %v1011 = vpack.c.bf16 %v988, %v987
        %v1012 = vpack.c.bf16 %v990, %v989
        %v1013 = vpack.c.bf16 %v992, %v991
        %v1014 = vpack.c.bf16 %v994, %v993
        %v1015 = vpack.c.bf16 %v996, %v995
        %v1016 = vpack.c.bf16 %v998, %v997
        %v1017 = vpack.c.bf16 %v1000, %v999
        %v1018 = vpack.c.bf16 %v1002, %v1001
        %v1023 = vunpack.c.l.b16 %v1003
        %v1024 = vunpack.c.l.b16 %v1004
        %v1025 = vunpack.c.l.b16 %v1005
        %v1026 = vunpack.c.l.b16 %v1006
        %v1027 = vpack.c.b16 %v1024, %v1023
        %v1028 = vpack.c.b16 %v1026, %v1025
        %v1032 = vsel %vm417, %v1011, 0
        %v1035 = vsel %vm417, %v1012, 0
        %v1038 = vsel %vm417, %v1013, 0
        %v1041 = vsel %vm417, %v1014, 0
        %v1044 = vsel %vm417, %v1015, 0
        %v1047 = vsel %vm417, %v1016, 0
        %v1050 = vsel %vm417, %v1017, 0
        %v1053 = vsel %vm417, %v1018, 0
        %1055 = vmatprep.subr.bf16.mxu0 0
        %1056 = vmatpush1.bf16.msra.mxu0 0
        %1057 = vmatprep.subr.bf16.mxu0 0
        %1058 = vmatpush1.bf16.msra.mxu0 0
        %1059 = vmatprep.subr.bf16.mxu0 0
        %1060 = vmatpush1.bf16.msra.mxu0 0
        %1061 = vmatprep.subr.bf16.mxu0 0
        %1062 = vmatpush1.bf16.msra.mxu0 0
        %1063 = vmatprep.subr.bf16.mxu0 0
        %1064 = vmatpush1.bf16.msra.mxu0 0
        %1065 = vmatprep.subr.bf16.mxu0 0
        %1066 = vmatpush1.bf16.msra.mxu0 0
        %1067 = vmatprep.subr.bf16.mxu0 0
        %1068 = vmatpush1.bf16.msra.mxu0 %v1028
        %1069 = vmatprep.subr.bf16.mxu0 0
        %1070 = vmatpush1.bf16.msra.mxu0 %v1027
        %1071 = vmatprep.subr.bf16.mxu0 0
        %1072 = vmatpush2.bf16.msra.mxu0 0
        %1073 = vmatprep.subr.bf16.mxu0 0
        %1074 = vmatpush2.bf16.msra.mxu0 0
        %1075 = vmatprep.subr.bf16.mxu0 0
        %1076 = vmatpush2.bf16.msra.mxu0 0
        %1077 = vmatprep.subr.bf16.mxu0 0
        %1078 = vmatpush2.bf16.msra.mxu0 0
        %1079 = vmatprep.subr.bf16.mxu0 0
        %1080 = vmatpush2.bf16.msra.mxu0 0
        %1081 = vmatprep.subr.bf16.mxu0 0
        %1082 = vmatpush2.bf16.msra.mxu0 0
        %1083 = vmatprep.subr.bf16.mxu0 0
        %1084 = vmatpush2.bf16.msra.mxu0 0
        %1085 = vmatprep.subr.bf16.mxu0 0
        %1086 = vmatpush2.bf16.msra.mxu0 0
        %1087 = vmatprep.mubr.bf16.mxu0 0
        %1088 = vmatmul.mubr.bf16.gmra.mxu0 %v1032
        %v1089 = vpop.f32.mrf.mxu0
        %v1090 = vadd.f32 0.0, %v1089
        %v1091 = vpop.f32.mrf.mxu0
        %v1092 = vpop.f32.mrf.mxu0
        %v1093 = vadd.f32 0.0, %v1092
        %v1094 = vpop.f32.mrf.mxu0
        %1095 = vmatprep.mubr.bf16.mxu0 0
        %1096 = vmatmul.mubr.bf16.gmra.mxu0 %v1035
        %v1097 = vpop.f32.mrf.mxu0
        %v1098 = vadd.f32 0.0, %v1097
        %v1099 = vpop.f32.mrf.mxu0
        %v1100 = vpop.f32.mrf.mxu0
        %v1101 = vadd.f32 0.0, %v1100
        %v1102 = vpop.f32.mrf.mxu0
        %1103 = vmatprep.mubr.bf16.mxu0 0
        %1104 = vmatmul.mubr.bf16.gmra.mxu0 %v1038
        %v1105 = vpop.f32.mrf.mxu0
        %v1106 = vadd.f32 0.0, %v1105
        %v1107 = vpop.f32.mrf.mxu0
        %v1108 = vpop.f32.mrf.mxu0
        %v1109 = vadd.f32 0.0, %v1108
        %v1110 = vpop.f32.mrf.mxu0
        %1111 = vmatprep.mubr.bf16.mxu0 0
        %1112 = vmatmul.mubr.bf16.gmra.mxu0 %v1041
        %v1113 = vpop.f32.mrf.mxu0
        %v1114 = vadd.f32 0.0, %v1113
        %v1115 = vpop.f32.mrf.mxu0
        %v1116 = vpop.f32.mrf.mxu0
        %v1117 = vadd.f32 0.0, %v1116
        %v1118 = vpop.f32.mrf.mxu0
        %1119 = vmatprep.mubr.bf16.mxu0 0
        %1120 = vmatmul.mubr.bf16.gmra.mxu0 %v1044
        %v1121 = vpop.f32.mrf.mxu0
        %v1122 = vadd.f32 0.0, %v1121
        %v1123 = vpop.f32.mrf.mxu0
        %v1124 = vpop.f32.mrf.mxu0
        %v1125 = vadd.f32 0.0, %v1124
        %v1126 = vpop.f32.mrf.mxu0
        %1127 = vmatprep.mubr.bf16.mxu0 0
        %1128 = vmatmul.mubr.bf16.gmra.mxu0 %v1047
        %v1129 = vpop.f32.mrf.mxu0
        %v1130 = vadd.f32 0.0, %v1129
        %v1131 = vpop.f32.mrf.mxu0
        %v1132 = vpop.f32.mrf.mxu0
        %v1133 = vadd.f32 0.0, %v1132
        %v1134 = vpop.f32.mrf.mxu0
        %1135 = vmatprep.mubr.bf16.mxu0 0
        %1136 = vmatmul.mubr.bf16.gmra.mxu0 %v1050
        %v1137 = vpop.f32.mrf.mxu0
        %v1138 = vadd.f32 0.0, %v1137
        %v1139 = vpop.f32.mrf.mxu0
        %v1140 = vpop.f32.mrf.mxu0
        %v1141 = vadd.f32 0.0, %v1140
        %v1142 = vpop.f32.mrf.mxu0
        %1143 = vmatprep.mubr.bf16.mxu0 0
        %1144 = vmatmul.mubr.bf16.gmra.mxu0 %v1053
        %v1145 = vpop.f32.mrf.mxu0
        %v1146 = vadd.f32 0.0, %v1145
        %v1147 = vpop.f32.mrf.mxu0
        %v1148 = vpop.f32.mrf.mxu0
        %v1149 = vadd.f32 0.0, %v1148
        %v1150 = vpop.f32.mrf.mxu0
        %1151 = vdwg.mxu0
        %v1152 = vpack.c.bf16 %v1093, %v1090
        %v1153 = vpack.c.bf16 %v1101, %v1098
        %v1154 = vpack.c.bf16 %v1109, %v1106
        %v1155 = vpack.c.bf16 %v1117, %v1114
        %v1156 = vpack.c.bf16 %v1125, %v1122
        %v1157 = vpack.c.bf16 %v1133, %v1130
        %v1158 = vpack.c.bf16 %v1141, %v1138
        %v1159 = vpack.c.bf16 %v1149, %v1146
        %1164 = vrot.lane.b32.xlu0 %v1152, 96
        %v1165 = vpop.permute.xlu0 %1164
        %1166 = vrot.lane.b32.xlu0 %v1153, 96
        %v1167 = vpop.permute.xlu0 %1166
        %1168 = vrot.lane.b32.xlu0 %v1154, 96
        %v1169 = vpop.permute.xlu0 %1168
        %1170 = vrot.lane.b32.xlu0 %v1155, 96
        %v1171 = vpop.permute.xlu0 %1170
        %vm1172 = vcmask 130048
        %v1174 = vsel %vm1172, %v1152, 0
        %v1177 = vsel %vm1172, %v1153, 0
        %v1180 = vsel %vm1172, %v1154, 0
        %v1183 = vsel %vm1172, %v1155, 0
        %v1186 = vsel %vm1172, %v1165, 0
        %v1189 = vsel %vm1172, %v1167, 0
        %v1192 = vsel %vm1172, %v1169, 0
        %v1195 = vsel %vm1172, %v1171, 0
        %1197 = vmatprep.subr.bf16.mxu0 0
        %1198 = vmatpush1.bf16.xpose.msra.mxu0 0
        %1199 = vmatprep.subr.bf16.mxu0 0
        %1200 = vmatpush1.bf16.xpose.msra.mxu0 0
        %1201 = vmatprep.subr.bf16.mxu0 0
        %1202 = vmatpush1.bf16.xpose.msra.mxu0 0
        %1203 = vmatprep.subr.bf16.mxu0 0
        %1204 = vmatpush1.bf16.xpose.msra.mxu0 0
        %1205 = vmatprep.subr.bf16.mxu0 0
        %1206 = vmatpush1.bf16.xpose.msra.mxu0 %v1195
        %1207 = vmatprep.subr.bf16.mxu0 0
        %1208 = vmatpush1.bf16.xpose.msra.mxu0 %v1192
        %1209 = vmatprep.subr.bf16.mxu0 0
        %1210 = vmatpush1.bf16.xpose.msra.mxu0 %v1189
        %1211 = vmatprep.subr.bf16.mxu0 0
        %1212 = vmatpush1.bf16.xpose.msra.mxu0 %v1186
        %1213 = vmatprep.subr.bf16.mxu0 0
        %1214 = vmatpush2.bf16.xpose.msra.mxu0 0
        %1215 = vmatprep.subr.bf16.mxu0 0
        %1216 = vmatpush2.bf16.xpose.msra.mxu0 0
        %1217 = vmatprep.subr.bf16.mxu0 0
        %1218 = vmatpush2.bf16.xpose.msra.mxu0 0
        %1219 = vmatprep.subr.bf16.mxu0 0
        %1220 = vmatpush2.bf16.xpose.msra.mxu0 0
        %1221 = vmatprep.subr.bf16.mxu0 0
        %1222 = vmatpush2.bf16.xpose.msra.mxu0 0
        %1223 = vmatprep.subr.bf16.mxu0 0
        %1224 = vmatpush2.bf16.xpose.msra.mxu0 0
        %1225 = vmatprep.subr.bf16.mxu0 0
        %1226 = vmatpush2.bf16.xpose.msra.mxu0 0
        %1227 = vmatprep.subr.bf16.mxu0 0
        %1228 = vmatpush2.bf16.xpose.msra.mxu0 0
        %1229 = vmatprep.mubr.bf16.mxu0 0
        %1230 = vmatmul.mubr.bf16.gmra.mxu0 %v1174
        %v1231 = vpop.f32.mrf.mxu0
        %v1232 = vadd.f32 0.0, %v1231
        %v1233 = vpop.f32.mrf.mxu0
        %v1234 = vpop.f32.mrf.mxu0
        %v1235 = vadd.f32 0.0, %v1234
        %v1236 = vpop.f32.mrf.mxu0
        %1237 = vmatprep.mubr.bf16.mxu0 0
        %1238 = vmatmul.mubr.bf16.gmra.mxu0 %v1177
        %v1239 = vpop.f32.mrf.mxu0
        %v1240 = vadd.f32 0.0, %v1239
        %v1241 = vpop.f32.mrf.mxu0
        %v1242 = vpop.f32.mrf.mxu0
        %v1243 = vadd.f32 0.0, %v1242
        %v1244 = vpop.f32.mrf.mxu0
        %1245 = vmatprep.mubr.bf16.mxu0 0
        %1246 = vmatmul.mubr.bf16.gmra.mxu0 %v1180
        %v1247 = vpop.f32.mrf.mxu0
        %v1248 = vadd.f32 0.0, %v1247
        %v1249 = vpop.f32.mrf.mxu0
        %v1250 = vpop.f32.mrf.mxu0
        %v1251 = vadd.f32 0.0, %v1250
        %v1252 = vpop.f32.mrf.mxu0
        %1253 = vmatprep.mubr.bf16.mxu0 0
        %1254 = vmatmul.mubr.bf16.gmra.mxu0 %v1183
        %v1255 = vpop.f32.mrf.mxu0
        %v1256 = vadd.f32 0.0, %v1255
        %v1257 = vpop.f32.mrf.mxu0
        %v1258 = vpop.f32.mrf.mxu0
        %v1259 = vadd.f32 0.0, %v1258
        %v1260 = vpop.f32.mrf.mxu0
        %1261 = vdwg.mxu0
        %1266 = vrot.lane.b32.xlu0 %v1156, 96
        %v1267 = vpop.permute.xlu0 %1266
        %1268 = vrot.lane.b32.xlu0 %v1157, 96
        %v1269 = vpop.permute.xlu0 %1268
        %1270 = vrot.lane.b32.xlu0 %v1158, 96
        %v1271 = vpop.permute.xlu0 %1270
        %1272 = vrot.lane.b32.xlu0 %v1159, 96
        %v1273 = vpop.permute.xlu0 %1272
        %v1275 = vsel %vm1172, %v1156, 0
        %v1278 = vsel %vm1172, %v1157, 0
        %v1281 = vsel %vm1172, %v1158, 0
        %v1284 = vsel %vm1172, %v1159, 0
        %v1287 = vsel %vm1172, %v1267, 0
        %v1290 = vsel %vm1172, %v1269, 0
        %v1293 = vsel %vm1172, %v1271, 0
        %v1296 = vsel %vm1172, %v1273, 0
        %1298 = vmatprep.subr.bf16.mxu0 0
        %1299 = vmatpush1.bf16.xpose.msra.mxu0 0
        %1300 = vmatprep.subr.bf16.mxu0 0
        %1301 = vmatpush1.bf16.xpose.msra.mxu0 0
        %1302 = vmatprep.subr.bf16.mxu0 0
        %1303 = vmatpush1.bf16.xpose.msra.mxu0 0
        %1304 = vmatprep.subr.bf16.mxu0 0
        %1305 = vmatpush1.bf16.xpose.msra.mxu0 0
        %1306 = vmatprep.subr.bf16.mxu0 0
        %1307 = vmatpush1.bf16.xpose.msra.mxu0 %v1296
        %1308 = vmatprep.subr.bf16.mxu0 0
        %1309 = vmatpush1.bf16.xpose.msra.mxu0 %v1293
        %1310 = vmatprep.subr.bf16.mxu0 0
        %1311 = vmatpush1.bf16.xpose.msra.mxu0 %v1290
        %1312 = vmatprep.subr.bf16.mxu0 0
        %1313 = vmatpush1.bf16.xpose.msra.mxu0 %v1287
        %1314 = vmatprep.subr.bf16.mxu0 0
        %1315 = vmatpush2.bf16.xpose.msra.mxu0 0
        %1316 = vmatprep.subr.bf16.mxu0 0
        %1317 = vmatpush2.bf16.xpose.msra.mxu0 0
        %1318 = vmatprep.subr.bf16.mxu0 0
        %1319 = vmatpush2.bf16.xpose.msra.mxu0 0
        %1320 = vmatprep.subr.bf16.mxu0 0
        %1321 = vmatpush2.bf16.xpose.msra.mxu0 0
        %1322 = vmatprep.subr.bf16.mxu0 0
        %1323 = vmatpush2.bf16.xpose.msra.mxu0 0
        %1324 = vmatprep.subr.bf16.mxu0 0
        %1325 = vmatpush2.bf16.xpose.msra.mxu0 0
        %1326 = vmatprep.subr.bf16.mxu0 0
        %1327 = vmatpush2.bf16.xpose.msra.mxu0 0
        %1328 = vmatprep.subr.bf16.mxu0 0
        %1329 = vmatpush2.bf16.xpose.msra.mxu0 0
        %1330 = vmatprep.mubr.bf16.mxu0 0
        %1331 = vmatmul.mubr.bf16.gmra.mxu0 %v1275
        %v1332 = vpop.f32.mrf.mxu0
        %v1333 = vadd.f32 0.0, %v1332
        %v1334 = vpop.f32.mrf.mxu0
        %v1335 = vpop.f32.mrf.mxu0
        %v1336 = vadd.f32 0.0, %v1335
        %v1337 = vpop.f32.mrf.mxu0
        %1338 = vmatprep.mubr.bf16.mxu0 0
        %1339 = vmatmul.mubr.bf16.gmra.mxu0 %v1278
        %v1340 = vpop.f32.mrf.mxu0
        %v1341 = vadd.f32 0.0, %v1340
        %v1342 = vpop.f32.mrf.mxu0
        %v1343 = vpop.f32.mrf.mxu0
        %v1344 = vadd.f32 0.0, %v1343
        %v1345 = vpop.f32.mrf.mxu0
        %1346 = vmatprep.mubr.bf16.mxu0 0
        %1347 = vmatmul.mubr.bf16.gmra.mxu0 %v1281
        %v1348 = vpop.f32.mrf.mxu0
        %v1349 = vadd.f32 0.0, %v1348
        %v1350 = vpop.f32.mrf.mxu0
        %v1351 = vpop.f32.mrf.mxu0
        %v1352 = vadd.f32 0.0, %v1351
        %v1353 = vpop.f32.mrf.mxu0
        %1354 = vmatprep.mubr.bf16.mxu0 0
        %1355 = vmatmul.mubr.bf16.gmra.mxu0 %v1284
        %v1356 = vpop.f32.mrf.mxu0
        %v1357 = vadd.f32 0.0, %v1356
        %v1358 = vpop.f32.mrf.mxu0
        %v1359 = vpop.f32.mrf.mxu0
        %v1360 = vadd.f32 0.0, %v1359
        %v1361 = vpop.f32.mrf.mxu0
        %1362 = vdwg.mxu0
        %v1363 = vmul.f32 %v1232, 0.25
        %v1364 = vmul.f32 %v1235, 0.25
        %v1365 = vmul.f32 %v1240, 0.25
        %v1366 = vmul.f32 %v1243, 0.25
        %v1367 = vmul.f32 %v1248, 0.25
        %v1368 = vmul.f32 %v1251, 0.25
        %v1369 = vmul.f32 %v1256, 0.25
        %v1370 = vmul.f32 %v1259, 0.25
        %v1371 = vmul.f32 %v1333, 0.25
        %v1372 = vmul.f32 %v1336, 0.25
        %v1373 = vmul.f32 %v1341, 0.25
        %v1374 = vmul.f32 %v1344, 0.25
        %v1375 = vmul.f32 %v1349, 0.25
        %v1376 = vmul.f32 %v1352, 0.25
        %v1377 = vmul.f32 %v1357, 0.25
        %v1378 = vmul.f32 %v1360, 0.25
        %vm1379 = vcmask 523264
        %v1380 = vsel %vm1379, %v1363, -inf
        %1381 = vmax.xlane.f32.xlu0 %v1380
        %v1382 = vpop.xlane.xlu0 %1381
        %v1383 = vsel %vm1379, %v1364, -inf
        %1384 = vmax.xlane.f32.xlu0 %v1383
        %v1385 = vpop.xlane.xlu0 %1384
        %v1386 = vsel %vm1379, %v1365, -inf
        %1387 = vmax.xlane.f32.xlu0 %v1386
        %v1388 = vpop.xlane.xlu0 %1387
        %v1389 = vsel %vm1379, %v1366, -inf
        %1390 = vmax.xlane.f32.xlu0 %v1389
        %v1391 = vpop.xlane.xlu0 %1390
        %v1392 = vsel %vm1379, %v1367, -inf
        %1393 = vmax.xlane.f32.xlu0 %v1392
        %v1394 = vpop.xlane.xlu0 %1393
        %v1395 = vsel %vm1379, %v1368, -inf
        %1396 = vmax.xlane.f32.xlu0 %v1395
        %v1397 = vpop.xlane.xlu0 %1396
        %v1398 = vsel %vm1379, %v1369, -inf
        %1399 = vmax.xlane.f32.xlu0 %v1398
        %v1400 = vpop.xlane.xlu0 %1399
        %v1401 = vsel %vm1379, %v1370, -inf
        %1402 = vmax.xlane.f32.xlu0 %v1401
        %v1403 = vpop.xlane.xlu0 %1402
        %v1404 = vsel %vm1379, %v1371, -inf
        %1405 = vmax.xlane.f32.xlu0 %v1404
        %v1406 = vpop.xlane.xlu0 %1405
        %v1407 = vsel %vm1379, %v1372, -inf
        %1408 = vmax.xlane.f32.xlu0 %v1407
        %v1409 = vpop.xlane.xlu0 %1408
        %v1410 = vsel %vm1379, %v1373, -inf
        %1411 = vmax.xlane.f32.xlu0 %v1410
        %v1412 = vpop.xlane.xlu0 %1411
        %v1413 = vsel %vm1379, %v1374, -inf
        %1414 = vmax.xlane.f32.xlu0 %v1413
        %v1415 = vpop.xlane.xlu0 %1414
        %v1416 = vsel %vm1379, %v1375, -inf
        %1417 = vmax.xlane.f32.xlu0 %v1416
        %v1418 = vpop.xlane.xlu0 %1417
        %v1419 = vsel %vm1379, %v1376, -inf
        %1420 = vmax.xlane.f32.xlu0 %v1419
        %v1421 = vpop.xlane.xlu0 %1420
        %v1422 = vsel %vm1379, %v1377, -inf
        %1423 = vmax.xlane.f32.xlu0 %v1422
        %v1424 = vpop.xlane.xlu0 %1423
        %v1425 = vsel %vm1379, %v1378, -inf
        %1426 = vmax.xlane.f32.xlu0 %v1425
        %v1427 = vpop.xlane.xlu0 %1426
        %v1428 = vsub.f32 %v1363, %v1382
        %v1429 = vsub.f32 %v1364, %v1385
        %v1430 = vsub.f32 %v1365, %v1388
        %v1431 = vsub.f32 %v1366, %v1391
        %v1432 = vsub.f32 %v1367, %v1394
        %v1433 = vsub.f32 %v1368, %v1397
        %v1434 = vsub.f32 %v1369, %v1400
        %v1435 = vsub.f32 %v1370, %v1403
        %v1436 = vsub.f32 %v1371, %v1406
        %v1437 = vsub.f32 %v1372, %v1409
        %v1438 = vsub.f32 %v1373, %v1412
        %v1439 = vsub.f32 %v1374, %v1415
        %v1440 = vsub.f32 %v1375, %v1418
        %v1441 = vsub.f32 %v1376, %v1421
        %v1442 = vsub.f32 %v1377, %v1424
        %v1443 = vsub.f32 %v1378, %v1427
        %v1444 = vmul.f32 %v1428, 1.442695
        %v1445 = vpow.pop %v1444
        %v1446 = vmul.f32 %v1429, 1.442695
        %v1447 = vpow.pop %v1446
        %v1448 = vmul.f32 %v1430, 1.442695
        %v1449 = vpow.pop %v1448
        %v1450 = vmul.f32 %v1431, 1.442695
        %v1451 = vpow.pop %v1450
        %v1452 = vmul.f32 %v1432, 1.442695
        %v1453 = vpow.pop %v1452
        %v1454 = vmul.f32 %v1433, 1.442695
        %v1455 = vpow.pop %v1454
        %v1456 = vmul.f32 %v1434, 1.442695
        %v1457 = vpow.pop %v1456
        %v1458 = vmul.f32 %v1435, 1.442695
        %v1459 = vpow.pop %v1458
        %v1460 = vmul.f32 %v1436, 1.442695
        %v1461 = vpow.pop %v1460
        %v1462 = vmul.f32 %v1437, 1.442695
        %v1463 = vpow.pop %v1462
        %v1464 = vmul.f32 %v1438, 1.442695
        %v1465 = vpow.pop %v1464
        %v1466 = vmul.f32 %v1439, 1.442695
        %v1467 = vpow.pop %v1466
        %v1468 = vmul.f32 %v1440, 1.442695
        %v1469 = vpow.pop %v1468
        %v1470 = vmul.f32 %v1441, 1.442695
        %v1471 = vpow.pop %v1470
        %v1472 = vmul.f32 %v1442, 1.442695
        %v1473 = vpow.pop %v1472
        %v1474 = vmul.f32 %v1443, 1.442695
        %v1475 = vpow.pop %v1474
        %v1476 = vsel %vm1379, %v1445, 0.0
        %1477 = vadd.xlane.f32.xlu0 %v1476
        %v1478 = vpop.xlane.xlu0 %1477
        %v1479 = vsel %vm1379, %v1447, 0.0
        %1480 = vadd.xlane.f32.xlu0 %v1479
        %v1481 = vpop.xlane.xlu0 %1480
        %v1482 = vsel %vm1379, %v1449, 0.0
        %1483 = vadd.xlane.f32.xlu0 %v1482
        %v1484 = vpop.xlane.xlu0 %1483
        %v1485 = vsel %vm1379, %v1451, 0.0
        %1486 = vadd.xlane.f32.xlu0 %v1485
        %v1487 = vpop.xlane.xlu0 %1486
        %v1488 = vsel %vm1379, %v1453, 0.0
        %1489 = vadd.xlane.f32.xlu0 %v1488
        %v1490 = vpop.xlane.xlu0 %1489
        %v1491 = vsel %vm1379, %v1455, 0.0
        %1492 = vadd.xlane.f32.xlu0 %v1491
        %v1493 = vpop.xlane.xlu0 %1492
        %v1494 = vsel %vm1379, %v1457, 0.0
        %1495 = vadd.xlane.f32.xlu0 %v1494
        %v1496 = vpop.xlane.xlu0 %1495
        %v1497 = vsel %vm1379, %v1459, 0.0
        %1498 = vadd.xlane.f32.xlu0 %v1497
        %v1499 = vpop.xlane.xlu0 %1498
        %v1500 = vsel %vm1379, %v1461, 0.0
        %1501 = vadd.xlane.f32.xlu0 %v1500
        %v1502 = vpop.xlane.xlu0 %1501
        %v1503 = vsel %vm1379, %v1463, 0.0
        %1504 = vadd.xlane.f32.xlu0 %v1503
        %v1505 = vpop.xlane.xlu0 %1504
        %v1506 = vsel %vm1379, %v1465, 0.0
        %1507 = vadd.xlane.f32.xlu0 %v1506
        %v1508 = vpop.xlane.xlu0 %1507
        %v1509 = vsel %vm1379, %v1467, 0.0
        %1510 = vadd.xlane.f32.xlu0 %v1509
        %v1511 = vpop.xlane.xlu0 %1510
        %v1512 = vsel %vm1379, %v1469, 0.0
        %1513 = vadd.xlane.f32.xlu0 %v1512
        %v1514 = vpop.xlane.xlu0 %1513
        %v1515 = vsel %vm1379, %v1471, 0.0
        %1516 = vadd.xlane.f32.xlu0 %v1515
        %v1517 = vpop.xlane.xlu0 %1516
        %v1518 = vsel %vm1379, %v1473, 0.0
        %1519 = vadd.xlane.f32.xlu0 %v1518
        %v1520 = vpop.xlane.xlu0 %1519
        %v1521 = vsel %vm1379, %v1475, 0.0
        %1522 = vadd.xlane.f32.xlu0 %v1521
        %v1523 = vpop.xlane.xlu0 %1522
        %v1524 = vrcp.pop %v1478
        %v1525 = vrcp.pop %v1481
        %v1526 = vrcp.pop %v1484
        %v1527 = vrcp.pop %v1487
        %v1528 = vrcp.pop %v1490
        %v1529 = vrcp.pop %v1493
        %v1530 = vrcp.pop %v1496
        %v1531 = vrcp.pop %v1499
        %v1532 = vrcp.pop %v1502
        %v1533 = vrcp.pop %v1505
        %v1534 = vrcp.pop %v1508
        %v1535 = vrcp.pop %v1511
        %v1536 = vrcp.pop %v1514
        %v1537 = vrcp.pop %v1517
        %v1538 = vrcp.pop %v1520
        %v1539 = vrcp.pop %v1523
        %v1540 = vmul.f32 %v1445, %v1524
        %v1541 = vmul.f32 %v1447, %v1525
        %v1542 = vmul.f32 %v1449, %v1526
        %v1543 = vmul.f32 %v1451, %v1527
        %v1544 = vmul.f32 %v1453, %v1528
        %v1545 = vmul.f32 %v1455, %v1529
        %v1546 = vmul.f32 %v1457, %v1530
        %v1547 = vmul.f32 %v1459, %v1531
        %v1548 = vmul.f32 %v1461, %v1532
        %v1549 = vmul.f32 %v1463, %v1533
        %v1550 = vmul.f32 %v1465, %v1534
        %v1551 = vmul.f32 %v1467, %v1535
        %v1552 = vmul.f32 %v1469, %v1536
        %v1553 = vmul.f32 %v1471, %v1537
        %v1554 = vmul.f32 %v1473, %v1538
        %v1555 = vmul.f32 %v1475, %v1539
        %v1556 = vpack.c.bf16 %v1541, %v1540
        %v1557 = vpack.c.bf16 %v1543, %v1542
        %v1558 = vpack.c.bf16 %v1545, %v1544
        %v1559 = vpack.c.bf16 %v1547, %v1546
        %v1560 = vpack.c.bf16 %v1549, %v1548
        %v1561 = vpack.c.bf16 %v1551, %v1550
        %v1562 = vpack.c.bf16 %v1553, %v1552
        %v1563 = vpack.c.bf16 %v1555, %v1554
        %1564 = vrot.lane.b32.xlu0 %v1152, 64
        %v1565 = vpop.permute.xlu0 %1564
        %1566 = vrot.lane.b32.xlu0 %v1153, 64
        %v1567 = vpop.permute.xlu0 %1566
        %1568 = vrot.lane.b32.xlu0 %v1154, 64
        %v1569 = vpop.permute.xlu0 %1568
        %1570 = vrot.lane.b32.xlu0 %v1155, 64
        %v1571 = vpop.permute.xlu0 %1570
        %v1577 = vsel %vm1379, %v1556, 0
        %v1580 = vsel %vm1379, %v1557, 0
        %v1583 = vsel %vm1379, %v1558, 0
        %v1586 = vsel %vm1379, %v1559, 0
        %1588 = vmatprep.subr.bf16.mxu0 0
        %1589 = vmatpush1.bf16.msra.mxu0 0
        %1590 = vmatprep.subr.bf16.mxu0 0
        %1591 = vmatpush1.bf16.msra.mxu0 0
        %1592 = vmatprep.subr.bf16.mxu0 0
        %1593 = vmatpush1.bf16.msra.mxu0 0
        %1594 = vmatprep.subr.bf16.mxu0 0
        %1595 = vmatpush1.bf16.msra.mxu0 0
        %1596 = vmatprep.subr.bf16.mxu0 0
        %1597 = vmatpush1.bf16.msra.mxu0 %v1571
        %1598 = vmatprep.subr.bf16.mxu0 0
        %1599 = vmatpush1.bf16.msra.mxu0 %v1569
        %1600 = vmatprep.subr.bf16.mxu0 0
        %1601 = vmatpush1.bf16.msra.mxu0 %v1567
        %1602 = vmatprep.subr.bf16.mxu0 0
        %1603 = vmatpush1.bf16.msra.mxu0 %v1565
        %1604 = vmatprep.subr.bf16.mxu0 0
        %1605 = vmatpush2.bf16.msra.mxu0 0
        %1606 = vmatprep.subr.bf16.mxu0 0
        %1607 = vmatpush2.bf16.msra.mxu0 0
        %1608 = vmatprep.subr.bf16.mxu0 0
        %1609 = vmatpush2.bf16.msra.mxu0 0
        %1610 = vmatprep.subr.bf16.mxu0 0
        %1611 = vmatpush2.bf16.msra.mxu0 0
        %1612 = vmatprep.subr.bf16.mxu0 0
        %1613 = vmatpush2.bf16.msra.mxu0 0
        %1614 = vmatprep.subr.bf16.mxu0 0
        %1615 = vmatpush2.bf16.msra.mxu0 0
        %1616 = vmatprep.subr.bf16.mxu0 0
        %1617 = vmatpush2.bf16.msra.mxu0 0
        %1618 = vmatprep.subr.bf16.mxu0 0
        %1619 = vmatpush2.bf16.msra.mxu0 0
        %1620 = vmatprep.mubr.bf16.mxu0 0
        %1621 = vmatmul.mubr.bf16.gmra.mxu0 %v1577
        %v1622 = vpop.f32.mrf.mxu0
        %v1623 = vadd.f32 0.0, %v1622
        %v1624 = vpop.f32.mrf.mxu0
        %v1625 = vpop.f32.mrf.mxu0
        %v1626 = vadd.f32 0.0, %v1625
        %v1627 = vpop.f32.mrf.mxu0
        %1628 = vmatprep.mubr.bf16.mxu0 0
        %1629 = vmatmul.mubr.bf16.gmra.mxu0 %v1580
        %v1630 = vpop.f32.mrf.mxu0
        %v1631 = vadd.f32 0.0, %v1630
        %v1632 = vpop.f32.mrf.mxu0
        %v1633 = vpop.f32.mrf.mxu0
        %v1634 = vadd.f32 0.0, %v1633
        %v1635 = vpop.f32.mrf.mxu0
        %1636 = vmatprep.mubr.bf16.mxu0 0
        %1637 = vmatmul.mubr.bf16.gmra.mxu0 %v1583
        %v1638 = vpop.f32.mrf.mxu0
        %v1639 = vadd.f32 0.0, %v1638
        %v1640 = vpop.f32.mrf.mxu0
        %v1641 = vpop.f32.mrf.mxu0
        %v1642 = vadd.f32 0.0, %v1641
        %v1643 = vpop.f32.mrf.mxu0
        %1644 = vmatprep.mubr.bf16.mxu0 0
        %1645 = vmatmul.mubr.bf16.gmra.mxu0 %v1586
        %v1646 = vpop.f32.mrf.mxu0
        %v1647 = vadd.f32 0.0, %v1646
        %v1648 = vpop.f32.mrf.mxu0
        %v1649 = vpop.f32.mrf.mxu0
        %v1650 = vadd.f32 0.0, %v1649
        %v1651 = vpop.f32.mrf.mxu0
        %1652 = vdwg.mxu0
        %1653 = vrot.lane.b32.xlu0 %v1156, 64
        %v1654 = vpop.permute.xlu0 %1653
        %1655 = vrot.lane.b32.xlu0 %v1157, 64
        %v1656 = vpop.permute.xlu0 %1655
        %1657 = vrot.lane.b32.xlu0 %v1158, 64
        %v1658 = vpop.permute.xlu0 %1657
        %1659 = vrot.lane.b32.xlu0 %v1159, 64
        %v1660 = vpop.permute.xlu0 %1659
        %v1666 = vsel %vm1379, %v1560, 0
        %v1669 = vsel %vm1379, %v1561, 0
        %v1672 = vsel %vm1379, %v1562, 0
        %v1675 = vsel %vm1379, %v1563, 0
        %1677 = vmatprep.subr.bf16.mxu0 0
        %1678 = vmatpush1.bf16.msra.mxu0 0
        %1679 = vmatprep.subr.bf16.mxu0 0
        %1680 = vmatpush1.bf16.msra.mxu0 0
        %1681 = vmatprep.subr.bf16.mxu0 0
        %1682 = vmatpush1.bf16.msra.mxu0 0
        %1683 = vmatprep.subr.bf16.mxu0 0
        %1684 = vmatpush1.bf16.msra.mxu0 0
        %1685 = vmatprep.subr.bf16.mxu0 0
        %1686 = vmatpush1.bf16.msra.mxu0 %v1660
        %1687 = vmatprep.subr.bf16.mxu0 0
        %1688 = vmatpush1.bf16.msra.mxu0 %v1658
        %1689 = vmatprep.subr.bf16.mxu0 0
        %1690 = vmatpush1.bf16.msra.mxu0 %v1656
        %1691 = vmatprep.subr.bf16.mxu0 0
        %1692 = vmatpush1.bf16.msra.mxu0 %v1654
        %1693 = vmatprep.subr.bf16.mxu0 0
        %1694 = vmatpush2.bf16.msra.mxu0 0
        %1695 = vmatprep.subr.bf16.mxu0 0
        %1696 = vmatpush2.bf16.msra.mxu0 0
        %1697 = vmatprep.subr.bf16.mxu0 0
        %1698 = vmatpush2.bf16.msra.mxu0 0
        %1699 = vmatprep.subr.bf16.mxu0 0
        %1700 = vmatpush2.bf16.msra.mxu0 0
        %1701 = vmatprep.subr.bf16.mxu0 0
        %1702 = vmatpush2.bf16.msra.mxu0 0
        %1703 = vmatprep.subr.bf16.mxu0 0
        %1704 = vmatpush2.bf16.msra.mxu0 0
        %1705 = vmatprep.subr.bf16.mxu0 0
        %1706 = vmatpush2.bf16.msra.mxu0 0
        %1707 = vmatprep.subr.bf16.mxu0 0
        %1708 = vmatpush2.bf16.msra.mxu0 0
        %1709 = vmatprep.mubr.bf16.mxu0 0
        %1710 = vmatmul.mubr.bf16.gmra.mxu0 %v1666
        %v1711 = vpop.f32.mrf.mxu0
        %v1712 = vadd.f32 0.0, %v1711
        %v1713 = vpop.f32.mrf.mxu0
        %v1714 = vpop.f32.mrf.mxu0
        %v1715 = vadd.f32 0.0, %v1714
        %v1716 = vpop.f32.mrf.mxu0
        %1717 = vmatprep.mubr.bf16.mxu0 0
        %1718 = vmatmul.mubr.bf16.gmra.mxu0 %v1669
        %v1719 = vpop.f32.mrf.mxu0
        %v1720 = vadd.f32 0.0, %v1719
        %v1721 = vpop.f32.mrf.mxu0
        %v1722 = vpop.f32.mrf.mxu0
        %v1723 = vadd.f32 0.0, %v1722
        %v1724 = vpop.f32.mrf.mxu0
        %1725 = vmatprep.mubr.bf16.mxu0 0
        %1726 = vmatmul.mubr.bf16.gmra.mxu0 %v1672
        %v1727 = vpop.f32.mrf.mxu0
        %v1728 = vadd.f32 0.0, %v1727
        %v1729 = vpop.f32.mrf.mxu0
        %v1730 = vpop.f32.mrf.mxu0
        %v1731 = vadd.f32 0.0, %v1730
        %v1732 = vpop.f32.mrf.mxu0
        %1733 = vmatprep.mubr.bf16.mxu0 0
        %1734 = vmatmul.mubr.bf16.gmra.mxu0 %v1675
        %v1735 = vpop.f32.mrf.mxu0
        %v1736 = vadd.f32 0.0, %v1735
        %v1737 = vpop.f32.mrf.mxu0
        %v1738 = vpop.f32.mrf.mxu0
        %v1739 = vadd.f32 0.0, %v1738
        %v1740 = vpop.f32.mrf.mxu0
        %1741 = vdwg.mxu0
        %v1742 = vpack.c.bf16 %v1626, %v1623
        %v1743 = vpack.c.bf16 %v1634, %v1631
        %v1744 = vpack.c.bf16 %v1642, %v1639
        %v1745 = vpack.c.bf16 %v1650, %v1647
        %v1746 = vpack.c.bf16 %v1715, %v1712
        %v1747 = vpack.c.bf16 %v1723, %v1720
        %v1748 = vpack.c.bf16 %v1731, %v1728
        %v1749 = vpack.c.bf16 %v1739, %v1736
        %1750 = vrot.lane.b32.xlu0 %v1152, 112
        %v1751 = vpop.permute.xlu0 %1750
        %1752 = vrot.lane.b32.xlu0 %v1153, 112
        %v1753 = vpop.permute.xlu0 %1752
        %1754 = vrot.lane.b32.xlu0 %v1154, 112
        %v1755 = vpop.permute.xlu0 %1754
        %1756 = vrot.lane.b32.xlu0 %v1155, 112
        %v1757 = vpop.permute.xlu0 %1756
        %1758 = vrot.lane.b32.xlu0 %v1152, 80
        %v1759 = vpop.permute.xlu0 %1758
        %1760 = vrot.lane.b32.xlu0 %v1153, 80
        %v1761 = vpop.permute.xlu0 %1760
        %1762 = vrot.lane.b32.xlu0 %v1154, 80
        %v1763 = vpop.permute.xlu0 %1762
        %1764 = vrot.lane.b32.xlu0 %v1155, 80
        %v1765 = vpop.permute.xlu0 %1764
        %v1767 = vsel %vm1172, %v1751, 0
        %v1770 = vsel %vm1172, %v1753, 0
        %v1773 = vsel %vm1172, %v1755, 0
        %v1776 = vsel %vm1172, %v1757, 0
        %v1779 = vsel %vm1172, %v1759, 0
        %v1782 = vsel %vm1172, %v1761, 0
        %v1785 = vsel %vm1172, %v1763, 0
        %v1788 = vsel %vm1172, %v1765, 0
        %1790 = vmatprep.subr.bf16.mxu0 0
        %1791 = vmatpush1.bf16.xpose.msra.mxu0 0
        %1792 = vmatprep.subr.bf16.mxu0 0
        %1793 = vmatpush1.bf16.xpose.msra.mxu0 0
        %1794 = vmatprep.subr.bf16.mxu0 0
        %1795 = vmatpush1.bf16.xpose.msra.mxu0 0
        %1796 = vmatprep.subr.bf16.mxu0 0
        %1797 = vmatpush1.bf16.xpose.msra.mxu0 0
        %1798 = vmatprep.subr.bf16.mxu0 0
        %1799 = vmatpush1.bf16.xpose.msra.mxu0 %v1788
        %1800 = vmatprep.subr.bf16.mxu0 0
        %1801 = vmatpush1.bf16.xpose.msra.mxu0 %v1785
        %1802 = vmatprep.subr.bf16.mxu0 0
        %1803 = vmatpush1.bf16.xpose.msra.mxu0 %v1782
        %1804 = vmatprep.subr.bf16.mxu0 0
        %1805 = vmatpush1.bf16.xpose.msra.mxu0 %v1779
        %1806 = vmatprep.subr.bf16.mxu0 0
        %1807 = vmatpush2.bf16.xpose.msra.mxu0 0
        %1808 = vmatprep.subr.bf16.mxu0 0
        %1809 = vmatpush2.bf16.xpose.msra.mxu0 0
        %1810 = vmatprep.subr.bf16.mxu0 0
        %1811 = vmatpush2.bf16.xpose.msra.mxu0 0
        %1812 = vmatprep.subr.bf16.mxu0 0
        %1813 = vmatpush2.bf16.xpose.msra.mxu0 0
        %1814 = vmatprep.subr.bf16.mxu0 0
        %1815 = vmatpush2.bf16.xpose.msra.mxu0 0
        %1816 = vmatprep.subr.bf16.mxu0 0
        %1817 = vmatpush2.bf16.xpose.msra.mxu0 0
        %1818 = vmatprep.subr.bf16.mxu0 0
        %1819 = vmatpush2.bf16.xpose.msra.mxu0 0
        %1820 = vmatprep.subr.bf16.mxu0 0
        %1821 = vmatpush2.bf16.xpose.msra.mxu0 0
        %1822 = vmatprep.mubr.bf16.mxu0 0
        %1823 = vmatmul.mubr.bf16.gmra.mxu0 %v1767
        %v1824 = vpop.f32.mrf.mxu0
        %v1825 = vadd.f32 0.0, %v1824
        %v1826 = vpop.f32.mrf.mxu0
        %v1827 = vpop.f32.mrf.mxu0
        %v1828 = vadd.f32 0.0, %v1827
        %v1829 = vpop.f32.mrf.mxu0
        %1830 = vmatprep.mubr.bf16.mxu0 0
        %1831 = vmatmul.mubr.bf16.gmra.mxu0 %v1770
        %v1832 = vpop.f32.mrf.mxu0
        %v1833 = vadd.f32 0.0, %v1832
        %v1834 = vpop.f32.mrf.mxu0
        %v1835 = vpop.f32.mrf.mxu0
        %v1836 = vadd.f32 0.0, %v1835
        %v1837 = vpop.f32.mrf.mxu0
        %1838 = vmatprep.mubr.bf16.mxu0 0
        %1839 = vmatmul.mubr.bf16.gmra.mxu0 %v1773
        %v1840 = vpop.f32.mrf.mxu0
        %v1841 = vadd.f32 0.0, %v1840
        %v1842 = vpop.f32.mrf.mxu0
        %v1843 = vpop.f32.mrf.mxu0
        %v1844 = vadd.f32 0.0, %v1843
        %v1845 = vpop.f32.mrf.mxu0
        %1846 = vmatprep.mubr.bf16.mxu0 0
        %1847 = vmatmul.mubr.bf16.gmra.mxu0 %v1776
        %v1848 = vpop.f32.mrf.mxu0
        %v1849 = vadd.f32 0.0, %v1848
        %v1850 = vpop.f32.mrf.mxu0
        %v1851 = vpop.f32.mrf.mxu0
        %v1852 = vadd.f32 0.0, %v1851
        %v1853 = vpop.f32.mrf.mxu0
        %1854 = vdwg.mxu0
        %1855 = vrot.lane.b32.xlu0 %v1156, 112
        %v1856 = vpop.permute.xlu0 %1855
        %1857 = vrot.lane.b32.xlu0 %v1157, 112
        %v1858 = vpop.permute.xlu0 %1857
        %1859 = vrot.lane.b32.xlu0 %v1158, 112
        %v1860 = vpop.permute.xlu0 %1859
        %1861 = vrot.lane.b32.xlu0 %v1159, 112
        %v1862 = vpop.permute.xlu0 %1861
        %1863 = vrot.lane.b32.xlu0 %v1156, 80
        %v1864 = vpop.permute.xlu0 %1863
        %1865 = vrot.lane.b32.xlu0 %v1157, 80
        %v1866 = vpop.permute.xlu0 %1865
        %1867 = vrot.lane.b32.xlu0 %v1158, 80
        %v1868 = vpop.permute.xlu0 %1867
        %1869 = vrot.lane.b32.xlu0 %v1159, 80
        %v1870 = vpop.permute.xlu0 %1869
        %v1872 = vsel %vm1172, %v1856, 0
        %v1875 = vsel %vm1172, %v1858, 0
        %v1878 = vsel %vm1172, %v1860, 0
        %v1881 = vsel %vm1172, %v1862, 0
        %v1884 = vsel %vm1172, %v1864, 0
        %v1887 = vsel %vm1172, %v1866, 0
        %v1890 = vsel %vm1172, %v1868, 0
        %v1893 = vsel %vm1172, %v1870, 0
        %1895 = vmatprep.subr.bf16.mxu0 0
        %1896 = vmatpush1.bf16.xpose.msra.mxu0 0
        %1897 = vmatprep.subr.bf16.mxu0 0
        %1898 = vmatpush1.bf16.xpose.msra.mxu0 0
        %1899 = vmatprep.subr.bf16.mxu0 0
        %1900 = vmatpush1.bf16.xpose.msra.mxu0 0
        %1901 = vmatprep.subr.bf16.mxu0 0
        %1902 = vmatpush1.bf16.xpose.msra.mxu0 0
        %1903 = vmatprep.subr.bf16.mxu0 0
        %1904 = vmatpush1.bf16.xpose.msra.mxu0 %v1893
        %1905 = vmatprep.subr.bf16.mxu0 0
        %1906 = vmatpush1.bf16.xpose.msra.mxu0 %v1890
        %1907 = vmatprep.subr.bf16.mxu0 0
        %1908 = vmatpush1.bf16.xpose.msra.mxu0 %v1887
        %1909 = vmatprep.subr.bf16.mxu0 0
        %1910 = vmatpush1.bf16.xpose.msra.mxu0 %v1884
        %1911 = vmatprep.subr.bf16.mxu0 0
        %1912 = vmatpush2.bf16.xpose.msra.mxu0 0
        %1913 = vmatprep.subr.bf16.mxu0 0
        %1914 = vmatpush2.bf16.xpose.msra.mxu0 0
        %1915 = vmatprep.subr.bf16.mxu0 0
        %1916 = vmatpush2.bf16.xpose.msra.mxu0 0
        %1917 = vmatprep.subr.bf16.mxu0 0
        %1918 = vmatpush2.bf16.xpose.msra.mxu0 0
        %1919 = vmatprep.subr.bf16.mxu0 0
        %1920 = vmatpush2.bf16.xpose.msra.mxu0 0
        %1921 = vmatprep.subr.bf16.mxu0 0
        %1922 = vmatpush2.bf16.xpose.msra.mxu0 0
        %1923 = vmatprep.subr.bf16.mxu0 0
        %1924 = vmatpush2.bf16.xpose.msra.mxu0 0
        %1925 = vmatprep.subr.bf16.mxu0 0
        %1926 = vmatpush2.bf16.xpose.msra.mxu0 0
        %1927 = vmatprep.mubr.bf16.mxu0 0
        %1928 = vmatmul.mubr.bf16.gmra.mxu0 %v1872
        %v1929 = vpop.f32.mrf.mxu0
        %v1930 = vadd.f32 0.0, %v1929
        %v1931 = vpop.f32.mrf.mxu0
        %v1932 = vpop.f32.mrf.mxu0
        %v1933 = vadd.f32 0.0, %v1932
        %v1934 = vpop.f32.mrf.mxu0
        %1935 = vmatprep.mubr.bf16.mxu0 0
        %1936 = vmatmul.mubr.bf16.gmra.mxu0 %v1875
        %v1937 = vpop.f32.mrf.mxu0
        %v1938 = vadd.f32 0.0, %v1937
        %v1939 = vpop.f32.mrf.mxu0
        %v1940 = vpop.f32.mrf.mxu0
        %v1941 = vadd.f32 0.0, %v1940
        %v1942 = vpop.f32.mrf.mxu0
        %1943 = vmatprep.mubr.bf16.mxu0 0
        %1944 = vmatmul.mubr.bf16.gmra.mxu0 %v1878
        %v1945 = vpop.f32.mrf.mxu0
        %v1946 = vadd.f32 0.0, %v1945
        %v1947 = vpop.f32.mrf.mxu0
        %v1948 = vpop.f32.mrf.mxu0
        %v1949 = vadd.f32 0.0, %v1948
        %v1950 = vpop.f32.mrf.mxu0
        %1951 = vmatprep.mubr.bf16.mxu0 0
        %1952 = vmatmul.mubr.bf16.gmra.mxu0 %v1881
        %v1953 = vpop.f32.mrf.mxu0
        %v1954 = vadd.f32 0.0, %v1953
        %v1955 = vpop.f32.mrf.mxu0
        %v1956 = vpop.f32.mrf.mxu0
        %v1957 = vadd.f32 0.0, %v1956
        %v1958 = vpop.f32.mrf.mxu0
        %1959 = vdwg.mxu0
        %v1960 = vmul.f32 %v1825, 0.25
        %v1961 = vmul.f32 %v1828, 0.25
        %v1962 = vmul.f32 %v1833, 0.25
        %v1963 = vmul.f32 %v1836, 0.25
        %v1964 = vmul.f32 %v1841, 0.25
        %v1965 = vmul.f32 %v1844, 0.25
        %v1966 = vmul.f32 %v1849, 0.25
        %v1967 = vmul.f32 %v1852, 0.25
        %v1968 = vmul.f32 %v1930, 0.25
        %v1969 = vmul.f32 %v1933, 0.25
        %v1970 = vmul.f32 %v1938, 0.25
        %v1971 = vmul.f32 %v1941, 0.25
        %v1972 = vmul.f32 %v1946, 0.25
        %v1973 = vmul.f32 %v1949, 0.25
        %v1974 = vmul.f32 %v1954, 0.25
        %v1975 = vmul.f32 %v1957, 0.25
        %v1976 = vsel %vm1379, %v1960, -inf
        %1977 = vmax.xlane.f32.xlu0 %v1976
        %v1978 = vpop.xlane.xlu0 %1977
        %v1979 = vsel %vm1379, %v1961, -inf
        %1980 = vmax.xlane.f32.xlu0 %v1979
        %v1981 = vpop.xlane.xlu0 %1980
        %v1982 = vsel %vm1379, %v1962, -inf
        %1983 = vmax.xlane.f32.xlu0 %v1982
        %v1984 = vpop.xlane.xlu0 %1983
        %v1985 = vsel %vm1379, %v1963, -inf
        %1986 = vmax.xlane.f32.xlu0 %v1985
        %v1987 = vpop.xlane.xlu0 %1986
        %v1988 = vsel %vm1379, %v1964, -inf
        %1989 = vmax.xlane.f32.xlu0 %v1988
        %v1990 = vpop.xlane.xlu0 %1989
        %v1991 = vsel %vm1379, %v1965, -inf
        %1992 = vmax.xlane.f32.xlu0 %v1991
        %v1993 = vpop.xlane.xlu0 %1992
        %v1994 = vsel %vm1379, %v1966, -inf
        %1995 = vmax.xlane.f32.xlu0 %v1994
        %v1996 = vpop.xlane.xlu0 %1995
        %v1997 = vsel %vm1379, %v1967, -inf
        %1998 = vmax.xlane.f32.xlu0 %v1997
        %v1999 = vpop.xlane.xlu0 %1998
        %v2000 = vsel %vm1379, %v1968, -inf
        %2001 = vmax.xlane.f32.xlu0 %v2000
        %v2002 = vpop.xlane.xlu0 %2001
        %v2003 = vsel %vm1379, %v1969, -inf
        %2004 = vmax.xlane.f32.xlu0 %v2003
        %v2005 = vpop.xlane.xlu0 %2004
        %v2006 = vsel %vm1379, %v1970, -inf
        %2007 = vmax.xlane.f32.xlu0 %v2006
        %v2008 = vpop.xlane.xlu0 %2007
        %v2009 = vsel %vm1379, %v1971, -inf
        %2010 = vmax.xlane.f32.xlu0 %v2009
        %v2011 = vpop.xlane.xlu0 %2010
        %v2012 = vsel %vm1379, %v1972, -inf
        %2013 = vmax.xlane.f32.xlu0 %v2012
        %v2014 = vpop.xlane.xlu0 %2013
        %v2015 = vsel %vm1379, %v1973, -inf
        %2016 = vmax.xlane.f32.xlu0 %v2015
        %v2017 = vpop.xlane.xlu0 %2016
        %v2018 = vsel %vm1379, %v1974, -inf
        %2019 = vmax.xlane.f32.xlu0 %v2018
        %v2020 = vpop.xlane.xlu0 %2019
        %v2021 = vsel %vm1379, %v1975, -inf
        %2022 = vmax.xlane.f32.xlu0 %v2021
        %v2023 = vpop.xlane.xlu0 %2022
        %v2024 = vsub.f32 %v1960, %v1978
        %v2025 = vsub.f32 %v1961, %v1981
        %v2026 = vsub.f32 %v1962, %v1984
        %v2027 = vsub.f32 %v1963, %v1987
        %v2028 = vsub.f32 %v1964, %v1990
        %v2029 = vsub.f32 %v1965, %v1993
        %v2030 = vsub.f32 %v1966, %v1996
        %v2031 = vsub.f32 %v1967, %v1999
        %v2032 = vsub.f32 %v1968, %v2002
        %v2033 = vsub.f32 %v1969, %v2005
        %v2034 = vsub.f32 %v1970, %v2008
        %v2035 = vsub.f32 %v1971, %v2011
        %v2036 = vsub.f32 %v1972, %v2014
        %v2037 = vsub.f32 %v1973, %v2017
        %v2038 = vsub.f32 %v1974, %v2020
        %v2039 = vsub.f32 %v1975, %v2023
        %v2040 = vmul.f32 %v2024, 1.442695
        %v2041 = vpow.pop %v2040
        %v2042 = vmul.f32 %v2025, 1.442695
        %v2043 = vpow.pop %v2042
        %v2044 = vmul.f32 %v2026, 1.442695
        %v2045 = vpow.pop %v2044
        %v2046 = vmul.f32 %v2027, 1.442695
        %v2047 = vpow.pop %v2046
        %v2048 = vmul.f32 %v2028, 1.442695
        %v2049 = vpow.pop %v2048
        %v2050 = vmul.f32 %v2029, 1.442695
        %v2051 = vpow.pop %v2050
        %v2052 = vmul.f32 %v2030, 1.442695
        %v2053 = vpow.pop %v2052
        %v2054 = vmul.f32 %v2031, 1.442695
        %v2055 = vpow.pop %v2054
        %v2056 = vmul.f32 %v2032, 1.442695
        %v2057 = vpow.pop %v2056
        %v2058 = vmul.f32 %v2033, 1.442695
        %v2059 = vpow.pop %v2058
        %v2060 = vmul.f32 %v2034, 1.442695
        %v2061 = vpow.pop %v2060
        %v2062 = vmul.f32 %v2035, 1.442695
        %v2063 = vpow.pop %v2062
        %v2064 = vmul.f32 %v2036, 1.442695
        %v2065 = vpow.pop %v2064
        %v2066 = vmul.f32 %v2037, 1.442695
        %v2067 = vpow.pop %v2066
        %v2068 = vmul.f32 %v2038, 1.442695
        %v2069 = vpow.pop %v2068
        %v2070 = vmul.f32 %v2039, 1.442695
        %v2071 = vpow.pop %v2070
        %v2072 = vsel %vm1379, %v2041, 0.0
        %2073 = vadd.xlane.f32.xlu0 %v2072
        %v2074 = vpop.xlane.xlu0 %2073
        %v2075 = vsel %vm1379, %v2043, 0.0
        %2076 = vadd.xlane.f32.xlu0 %v2075
        %v2077 = vpop.xlane.xlu0 %2076
        %v2078 = vsel %vm1379, %v2045, 0.0
        %2079 = vadd.xlane.f32.xlu0 %v2078
        %v2080 = vpop.xlane.xlu0 %2079
        %v2081 = vsel %vm1379, %v2047, 0.0
        %2082 = vadd.xlane.f32.xlu0 %v2081
        %v2083 = vpop.xlane.xlu0 %2082
        %v2084 = vsel %vm1379, %v2049, 0.0
        %2085 = vadd.xlane.f32.xlu0 %v2084
        %v2086 = vpop.xlane.xlu0 %2085
        %v2087 = vsel %vm1379, %v2051, 0.0
        %2088 = vadd.xlane.f32.xlu0 %v2087
        %v2089 = vpop.xlane.xlu0 %2088
        %v2090 = vsel %vm1379, %v2053, 0.0
        %2091 = vadd.xlane.f32.xlu0 %v2090
        %v2092 = vpop.xlane.xlu0 %2091
        %v2093 = vsel %vm1379, %v2055, 0.0
        %2094 = vadd.xlane.f32.xlu0 %v2093
        %v2095 = vpop.xlane.xlu0 %2094
        %v2096 = vsel %vm1379, %v2057, 0.0
        %2097 = vadd.xlane.f32.xlu0 %v2096
        %v2098 = vpop.xlane.xlu0 %2097
        %v2099 = vsel %vm1379, %v2059, 0.0
        %2100 = vadd.xlane.f32.xlu0 %v2099
        %v2101 = vpop.xlane.xlu0 %2100
        %v2102 = vsel %vm1379, %v2061, 0.0
        %2103 = vadd.xlane.f32.xlu0 %v2102
        %v2104 = vpop.xlane.xlu0 %2103
        %v2105 = vsel %vm1379, %v2063, 0.0
        %2106 = vadd.xlane.f32.xlu0 %v2105
        %v2107 = vpop.xlane.xlu0 %2106
        %v2108 = vsel %vm1379, %v2065, 0.0
        %2109 = vadd.xlane.f32.xlu0 %v2108
        %v2110 = vpop.xlane.xlu0 %2109
        %v2111 = vsel %vm1379, %v2067, 0.0
        %2112 = vadd.xlane.f32.xlu0 %v2111
        %v2113 = vpop.xlane.xlu0 %2112
        %v2114 = vsel %vm1379, %v2069, 0.0
        %2115 = vadd.xlane.f32.xlu0 %v2114
        %v2116 = vpop.xlane.xlu0 %2115
        %v2117 = vsel %vm1379, %v2071, 0.0
        %2118 = vadd.xlane.f32.xlu0 %v2117
        %v2119 = vpop.xlane.xlu0 %2118
        %v2120 = vrcp.pop %v2074
        %v2121 = vrcp.pop %v2077
        %v2122 = vrcp.pop %v2080
        %v2123 = vrcp.pop %v2083
        %v2124 = vrcp.pop %v2086
        %v2125 = vrcp.pop %v2089
        %v2126 = vrcp.pop %v2092
        %v2127 = vrcp.pop %v2095
        %v2128 = vrcp.pop %v2098
        %v2129 = vrcp.pop %v2101
        %v2130 = vrcp.pop %v2104
        %v2131 = vrcp.pop %v2107
        %v2132 = vrcp.pop %v2110
        %v2133 = vrcp.pop %v2113
        %v2134 = vrcp.pop %v2116
        %v2135 = vrcp.pop %v2119
        %v2136 = vmul.f32 %v2041, %v2120
        %v2137 = vmul.f32 %v2043, %v2121
        %v2138 = vmul.f32 %v2045, %v2122
        %v2139 = vmul.f32 %v2047, %v2123
        %v2140 = vmul.f32 %v2049, %v2124
        %v2141 = vmul.f32 %v2051, %v2125
        %v2142 = vmul.f32 %v2053, %v2126
        %v2143 = vmul.f32 %v2055, %v2127
        %v2144 = vmul.f32 %v2057, %v2128
        %v2145 = vmul.f32 %v2059, %v2129
        %v2146 = vmul.f32 %v2061, %v2130
        %v2147 = vmul.f32 %v2063, %v2131
        %v2148 = vmul.f32 %v2065, %v2132
        %v2149 = vmul.f32 %v2067, %v2133
        %v2150 = vmul.f32 %v2069, %v2134
        %v2151 = vmul.f32 %v2071, %v2135
        %v2152 = vpack.c.bf16 %v2137, %v2136
        %v2153 = vpack.c.bf16 %v2139, %v2138
        %v2154 = vpack.c.bf16 %v2141, %v2140
        %v2155 = vpack.c.bf16 %v2143, %v2142
        %v2156 = vpack.c.bf16 %v2145, %v2144
        %v2157 = vpack.c.bf16 %v2147, %v2146
        %v2158 = vpack.c.bf16 %v2149, %v2148
        %v2159 = vpack.c.bf16 %v2151, %v2150
        %2160 = vrot.lane.b32.xlu0 %v1152, 48
        %v2161 = vpop.permute.xlu0 %2160
        %2162 = vrot.lane.b32.xlu0 %v1153, 48
        %v2163 = vpop.permute.xlu0 %2162
        %2164 = vrot.lane.b32.xlu0 %v1154, 48
        %v2165 = vpop.permute.xlu0 %2164
        %2166 = vrot.lane.b32.xlu0 %v1155, 48
        %v2167 = vpop.permute.xlu0 %2166
        %v2173 = vsel %vm1379, %v2152, 0
        %v2176 = vsel %vm1379, %v2153, 0
        %v2179 = vsel %vm1379, %v2154, 0
        %v2182 = vsel %vm1379, %v2155, 0
        %2184 = vmatprep.subr.bf16.mxu0 0
        %2185 = vmatpush1.bf16.msra.mxu0 0
        %2186 = vmatprep.subr.bf16.mxu0 0
        %2187 = vmatpush1.bf16.msra.mxu0 0
        %2188 = vmatprep.subr.bf16.mxu0 0
        %2189 = vmatpush1.bf16.msra.mxu0 0
        %2190 = vmatprep.subr.bf16.mxu0 0
        %2191 = vmatpush1.bf16.msra.mxu0 0
        %2192 = vmatprep.subr.bf16.mxu0 0
        %2193 = vmatpush1.bf16.msra.mxu0 %v2167
        %2194 = vmatprep.subr.bf16.mxu0 0
        %2195 = vmatpush1.bf16.msra.mxu0 %v2165
        %2196 = vmatprep.subr.bf16.mxu0 0
        %2197 = vmatpush1.bf16.msra.mxu0 %v2163
        %2198 = vmatprep.subr.bf16.mxu0 0
        %2199 = vmatpush1.bf16.msra.mxu0 %v2161
        %2200 = vmatprep.subr.bf16.mxu0 0
        %2201 = vmatpush2.bf16.msra.mxu0 0
        %2202 = vmatprep.subr.bf16.mxu0 0
        %2203 = vmatpush2.bf16.msra.mxu0 0
        %2204 = vmatprep.subr.bf16.mxu0 0
        %2205 = vmatpush2.bf16.msra.mxu0 0
        %2206 = vmatprep.subr.bf16.mxu0 0
        %2207 = vmatpush2.bf16.msra.mxu0 0
        %2208 = vmatprep.subr.bf16.mxu0 0
        %2209 = vmatpush2.bf16.msra.mxu0 0
        %2210 = vmatprep.subr.bf16.mxu0 0
        %2211 = vmatpush2.bf16.msra.mxu0 0
        %2212 = vmatprep.subr.bf16.mxu0 0
        %2213 = vmatpush2.bf16.msra.mxu0 0
        %2214 = vmatprep.subr.bf16.mxu0 0
        %2215 = vmatpush2.bf16.msra.mxu0 0
        %2216 = vmatprep.mubr.bf16.mxu0 0
        %2217 = vmatmul.mubr.bf16.gmra.mxu0 %v2173
        %v2218 = vpop.f32.mrf.mxu0
        %v2219 = vadd.f32 0.0, %v2218
        %v2220 = vpop.f32.mrf.mxu0
        %v2221 = vpop.f32.mrf.mxu0
        %v2222 = vadd.f32 0.0, %v2221
        %v2223 = vpop.f32.mrf.mxu0
        %2224 = vmatprep.mubr.bf16.mxu0 0
        %2225 = vmatmul.mubr.bf16.gmra.mxu0 %v2176
        %v2226 = vpop.f32.mrf.mxu0
        %v2227 = vadd.f32 0.0, %v2226
        %v2228 = vpop.f32.mrf.mxu0
        %v2229 = vpop.f32.mrf.mxu0
        %v2230 = vadd.f32 0.0, %v2229
        %v2231 = vpop.f32.mrf.mxu0
        %2232 = vmatprep.mubr.bf16.mxu0 0
        %2233 = vmatmul.mubr.bf16.gmra.mxu0 %v2179
        %v2234 = vpop.f32.mrf.mxu0
        %v2235 = vadd.f32 0.0, %v2234
        %v2236 = vpop.f32.mrf.mxu0
        %v2237 = vpop.f32.mrf.mxu0
        %v2238 = vadd.f32 0.0, %v2237
        %v2239 = vpop.f32.mrf.mxu0
        %2240 = vmatprep.mubr.bf16.mxu0 0
        %2241 = vmatmul.mubr.bf16.gmra.mxu0 %v2182
        %v2242 = vpop.f32.mrf.mxu0
        %v2243 = vadd.f32 0.0, %v2242
        %v2244 = vpop.f32.mrf.mxu0
        %v2245 = vpop.f32.mrf.mxu0
        %v2246 = vadd.f32 0.0, %v2245
        %v2247 = vpop.f32.mrf.mxu0
        %2248 = vdwg.mxu0
        %2249 = vrot.lane.b32.xlu0 %v1156, 48
        %v2250 = vpop.permute.xlu0 %2249
        %2251 = vrot.lane.b32.xlu0 %v1157, 48
        %v2252 = vpop.permute.xlu0 %2251
        %2253 = vrot.lane.b32.xlu0 %v1158, 48
        %v2254 = vpop.permute.xlu0 %2253
        %2255 = vrot.lane.b32.xlu0 %v1159, 48
        %v2256 = vpop.permute.xlu0 %2255
        %v2262 = vsel %vm1379, %v2156, 0
        %v2265 = vsel %vm1379, %v2157, 0
        %v2268 = vsel %vm1379, %v2158, 0
        %v2271 = vsel %vm1379, %v2159, 0
        %2273 = vmatprep.subr.bf16.mxu0 0
        %2274 = vmatpush1.bf16.msra.mxu0 0
        %2275 = vmatprep.subr.bf16.mxu0 0
        %2276 = vmatpush1.bf16.msra.mxu0 0
        %2277 = vmatprep.subr.bf16.mxu0 0
        %2278 = vmatpush1.bf16.msra.mxu0 0
        %2279 = vmatprep.subr.bf16.mxu0 0
        %2280 = vmatpush1.bf16.msra.mxu0 0
        %2281 = vmatprep.subr.bf16.mxu0 0
        %2282 = vmatpush1.bf16.msra.mxu0 %v2256
        %2283 = vmatprep.subr.bf16.mxu0 0
        %2284 = vmatpush1.bf16.msra.mxu0 %v2254
        %2285 = vmatprep.subr.bf16.mxu0 0
        %2286 = vmatpush1.bf16.msra.mxu0 %v2252
        %2287 = vmatprep.subr.bf16.mxu0 0
        %2288 = vmatpush1.bf16.msra.mxu0 %v2250
        %2289 = vmatprep.subr.bf16.mxu0 0
        %2290 = vmatpush2.bf16.msra.mxu0 0
        %2291 = vmatprep.subr.bf16.mxu0 0
        %2292 = vmatpush2.bf16.msra.mxu0 0
        %2293 = vmatprep.subr.bf16.mxu0 0
        %2294 = vmatpush2.bf16.msra.mxu0 0
        %2295 = vmatprep.subr.bf16.mxu0 0
        %2296 = vmatpush2.bf16.msra.mxu0 0
        %2297 = vmatprep.subr.bf16.mxu0 0
        %2298 = vmatpush2.bf16.msra.mxu0 0
        %2299 = vmatprep.subr.bf16.mxu0 0
        %2300 = vmatpush2.bf16.msra.mxu0 0
        %2301 = vmatprep.subr.bf16.mxu0 0
        %2302 = vmatpush2.bf16.msra.mxu0 0
        %2303 = vmatprep.subr.bf16.mxu0 0
        %2304 = vmatpush2.bf16.msra.mxu0 0
        %2305 = vmatprep.mubr.bf16.mxu0 0
        %2306 = vmatmul.mubr.bf16.gmra.mxu0 %v2262
        %v2307 = vpop.f32.mrf.mxu0
        %v2308 = vadd.f32 0.0, %v2307
        %v2309 = vpop.f32.mrf.mxu0
        %v2310 = vpop.f32.mrf.mxu0
        %v2311 = vadd.f32 0.0, %v2310
        %v2312 = vpop.f32.mrf.mxu0
        %2313 = vmatprep.mubr.bf16.mxu0 0
        %2314 = vmatmul.mubr.bf16.gmra.mxu0 %v2265
        %v2315 = vpop.f32.mrf.mxu0
        %v2316 = vadd.f32 0.0, %v2315
        %v2317 = vpop.f32.mrf.mxu0
        %v2318 = vpop.f32.mrf.mxu0
        %v2319 = vadd.f32 0.0, %v2318
        %v2320 = vpop.f32.mrf.mxu0
        %2321 = vmatprep.mubr.bf16.mxu0 0
        %2322 = vmatmul.mubr.bf16.gmra.mxu0 %v2268
        %v2323 = vpop.f32.mrf.mxu0
        %v2324 = vadd.f32 0.0, %v2323
        %v2325 = vpop.f32.mrf.mxu0
        %v2326 = vpop.f32.mrf.mxu0
        %v2327 = vadd.f32 0.0, %v2326
        %v2328 = vpop.f32.mrf.mxu0
        %2329 = vmatprep.mubr.bf16.mxu0 0
        %2330 = vmatmul.mubr.bf16.gmra.mxu0 %v2271
        %v2331 = vpop.f32.mrf.mxu0
        %v2332 = vadd.f32 0.0, %v2331
        %v2333 = vpop.f32.mrf.mxu0
        %v2334 = vpop.f32.mrf.mxu0
        %v2335 = vadd.f32 0.0, %v2334
        %v2336 = vpop.f32.mrf.mxu0
        %2337 = vdwg.mxu0
        %v2338 = vpack.c.bf16 %v2222, %v2219
        %v2339 = vpack.c.bf16 %v2230, %v2227
        %v2340 = vpack.c.bf16 %v2238, %v2235
        %v2341 = vpack.c.bf16 %v2246, %v2243
        %v2342 = vpack.c.bf16 %v2311, %v2308
        %v2343 = vpack.c.bf16 %v2319, %v2316
        %v2344 = vpack.c.bf16 %v2327, %v2324
        %v2345 = vpack.c.bf16 %v2335, %v2332
        %v2348 = vunpack.c.l.b16 %v1009
        %v2349 = vunpack.c.l.b16 %v1010
        %v2350 = vpack.c.b16 %v2349, %v2348
        %v2353 = vsel %vm1172, %v2338, 0
        %v2356 = vsel %vm1172, %v2339, 0
        %v2359 = vsel %vm1172, %v2340, 0
        %v2362 = vsel %vm1172, %v2341, 0
        %v2365 = vsel %vm1172, %v2342, 0
        %v2368 = vsel %vm1172, %v2343, 0
        %v2371 = vsel %vm1172, %v2344, 0
        %v2374 = vsel %vm1172, %v2345, 0
        %2376 = vmatprep.subr.bf16.mxu0 0
        %2377 = vmatpush1.bf16.msra.mxu0 0
        %2378 = vmatprep.subr.bf16.mxu0 0
        %2379 = vmatpush1.bf16.msra.mxu0 0
        %2380 = vmatprep.subr.bf16.mxu0 0
        %2381 = vmatpush1.bf16.msra.mxu0 0
        %2382 = vmatprep.subr.bf16.mxu0 0
        %2383 = vmatpush1.bf16.msra.mxu0 0
        %2384 = vmatprep.subr.bf16.mxu0 0
        %2385 = vmatpush1.bf16.msra.mxu0 0
        %2386 = vmatprep.subr.bf16.mxu0 0
        %2387 = vmatpush1.bf16.msra.mxu0 0
        %2388 = vmatprep.subr.bf16.mxu0 0
        %2389 = vmatpush1.bf16.msra.mxu0 0
        %2390 = vmatprep.subr.bf16.mxu0 0
        %2391 = vmatpush1.bf16.msra.mxu0 %v2350
        %2392 = vmatprep.subr.bf16.mxu0 0
        %2393 = vmatpush2.bf16.msra.mxu0 0
        %2394 = vmatprep.subr.bf16.mxu0 0
        %2395 = vmatpush2.bf16.msra.mxu0 0
        %2396 = vmatprep.subr.bf16.mxu0 0
        %2397 = vmatpush2.bf16.msra.mxu0 0
        %2398 = vmatprep.subr.bf16.mxu0 0
        %2399 = vmatpush2.bf16.msra.mxu0 0
        %2400 = vmatprep.subr.bf16.mxu0 0
        %2401 = vmatpush2.bf16.msra.mxu0 0
        %2402 = vmatprep.subr.bf16.mxu0 0
        %2403 = vmatpush2.bf16.msra.mxu0 0
        %2404 = vmatprep.subr.bf16.mxu0 0
        %2405 = vmatpush2.bf16.msra.mxu0 0
        %2406 = vmatprep.subr.bf16.mxu0 0
        %2407 = vmatpush2.bf16.msra.mxu0 0
        %2408 = vmatprep.mubr.bf16.mxu0 0
        %2409 = vmatmul.mubr.bf16.gmra.mxu0 %v2353
        %v2410 = vpop.f32.mrf.mxu0
        %v2411 = vadd.f32 0.0, %v2410
        %v2412 = vpop.f32.mrf.mxu0
        %v2413 = vpop.f32.mrf.mxu0
        %v2414 = vadd.f32 0.0, %v2413
        %v2415 = vpop.f32.mrf.mxu0
        %2416 = vmatprep.mubr.bf16.mxu0 0
        %2417 = vmatmul.mubr.bf16.gmra.mxu0 %v2356
        %v2418 = vpop.f32.mrf.mxu0
        %v2419 = vadd.f32 0.0, %v2418
        %v2420 = vpop.f32.mrf.mxu0
        %v2421 = vpop.f32.mrf.mxu0
        %v2422 = vadd.f32 0.0, %v2421
        %v2423 = vpop.f32.mrf.mxu0
        %2424 = vmatprep.mubr.bf16.mxu0 0
        %2425 = vmatmul.mubr.bf16.gmra.mxu0 %v2359
        %v2426 = vpop.f32.mrf.mxu0
        %v2427 = vadd.f32 0.0, %v2426
        %v2428 = vpop.f32.mrf.mxu0
        %v2429 = vpop.f32.mrf.mxu0
        %v2430 = vadd.f32 0.0, %v2429
        %v2431 = vpop.f32.mrf.mxu0
        %2432 = vmatprep.mubr.bf16.mxu0 0
        %2433 = vmatmul.mubr.bf16.gmra.mxu0 %v2362
        %v2434 = vpop.f32.mrf.mxu0
        %v2435 = vadd.f32 0.0, %v2434
        %v2436 = vpop.f32.mrf.mxu0
        %v2437 = vpop.f32.mrf.mxu0
        %v2438 = vadd.f32 0.0, %v2437
        %v2439 = vpop.f32.mrf.mxu0
        %2440 = vmatprep.mubr.bf16.mxu0 0
        %2441 = vmatmul.mubr.bf16.gmra.mxu0 %v2365
        %v2442 = vpop.f32.mrf.mxu0
        %v2443 = vadd.f32 0.0, %v2442
        %v2444 = vpop.f32.mrf.mxu0
        %v2445 = vpop.f32.mrf.mxu0
        %v2446 = vadd.f32 0.0, %v2445
        %v2447 = vpop.f32.mrf.mxu0
        %2448 = vmatprep.mubr.bf16.mxu0 0
        %2449 = vmatmul.mubr.bf16.gmra.mxu0 %v2368
        %v2450 = vpop.f32.mrf.mxu0
        %v2451 = vadd.f32 0.0, %v2450
        %v2452 = vpop.f32.mrf.mxu0
        %v2453 = vpop.f32.mrf.mxu0
        %v2454 = vadd.f32 0.0, %v2453
        %v2455 = vpop.f32.mrf.mxu0
        %2456 = vmatprep.mubr.bf16.mxu0 0
        %2457 = vmatmul.mubr.bf16.gmra.mxu0 %v2371
        %v2458 = vpop.f32.mrf.mxu0
        %v2459 = vadd.f32 0.0, %v2458
        %v2460 = vpop.f32.mrf.mxu0
        %v2461 = vpop.f32.mrf.mxu0
        %v2462 = vadd.f32 0.0, %v2461
        %v2463 = vpop.f32.mrf.mxu0
        %2464 = vmatprep.mubr.bf16.mxu0 0
        %2465 = vmatmul.mubr.bf16.gmra.mxu0 %v2374
        %v2466 = vpop.f32.mrf.mxu0
        %v2467 = vadd.f32 0.0, %v2466
        %v2468 = vpop.f32.mrf.mxu0
        %v2469 = vpop.f32.mrf.mxu0
        %v2470 = vadd.f32 0.0, %v2469
        %v2471 = vpop.f32.mrf.mxu0
        %2472 = vdwg.mxu0
        %v2475 = vunpack.c.l.b16 %v1007
        %v2476 = vunpack.c.l.b16 %v1008
        %v2477 = vpack.c.b16 %v2476, %v2475
        %v2480 = vsel %vm1172, %v1742, 0
        %v2483 = vsel %vm1172, %v1743, 0
        %v2486 = vsel %vm1172, %v1744, 0
        %v2489 = vsel %vm1172, %v1745, 0
        %v2492 = vsel %vm1172, %v1746, 0
        %v2495 = vsel %vm1172, %v1747, 0
        %v2498 = vsel %vm1172, %v1748, 0
        %v2501 = vsel %vm1172, %v1749, 0
        %2503 = vmatprep.subr.bf16.mxu0 0
        %2504 = vmatpush1.bf16.msra.mxu0 0
        %2505 = vmatprep.subr.bf16.mxu0 0
        %2506 = vmatpush1.bf16.msra.mxu0 0
        %2507 = vmatprep.subr.bf16.mxu0 0
        %2508 = vmatpush1.bf16.msra.mxu0 0
        %2509 = vmatprep.subr.bf16.mxu0 0
        %2510 = vmatpush1.bf16.msra.mxu0 0
        %2511 = vmatprep.subr.bf16.mxu0 0
        %2512 = vmatpush1.bf16.msra.mxu0 0
        %2513 = vmatprep.subr.bf16.mxu0 0
        %2514 = vmatpush1.bf16.msra.mxu0 0
        %2515 = vmatprep.subr.bf16.mxu0 0
        %2516 = vmatpush1.bf16.msra.mxu0 0
        %2517 = vmatprep.subr.bf16.mxu0 0
        %2518 = vmatpush1.bf16.msra.mxu0 %v2477
        %2519 = vmatprep.subr.bf16.mxu0 0
        %2520 = vmatpush2.bf16.msra.mxu0 0
        %2521 = vmatprep.subr.bf16.mxu0 0
        %2522 = vmatpush2.bf16.msra.mxu0 0
        %2523 = vmatprep.subr.bf16.mxu0 0
        %2524 = vmatpush2.bf16.msra.mxu0 0
        %2525 = vmatprep.subr.bf16.mxu0 0
        %2526 = vmatpush2.bf16.msra.mxu0 0
        %2527 = vmatprep.subr.bf16.mxu0 0
        %2528 = vmatpush2.bf16.msra.mxu0 0
        %2529 = vmatprep.subr.bf16.mxu0 0
        %2530 = vmatpush2.bf16.msra.mxu0 0
        %2531 = vmatprep.subr.bf16.mxu0 0
        %2532 = vmatpush2.bf16.msra.mxu0 0
        %2533 = vmatprep.subr.bf16.mxu0 0
        %2534 = vmatpush2.bf16.msra.mxu0 0
        %2535 = vmatprep.mubr.bf16.mxu0 0
        %2536 = vmatmul.mubr.bf16.gmra.mxu0 %v2480
        %v2537 = vpop.f32.mrf.mxu0
        %v2538 = vadd.f32 %v2411, %v2537
        %v2539 = vpop.f32.mrf.mxu0
        %v2540 = vpop.f32.mrf.mxu0
        %v2541 = vadd.f32 %v2414, %v2540
        %v2542 = vpop.f32.mrf.mxu0
        %2543 = vmatprep.mubr.bf16.mxu0 0
        %2544 = vmatmul.mubr.bf16.gmra.mxu0 %v2483
        %v2545 = vpop.f32.mrf.mxu0
        %v2546 = vadd.f32 %v2419, %v2545
        %v2547 = vpop.f32.mrf.mxu0
        %v2548 = vpop.f32.mrf.mxu0
        %v2549 = vadd.f32 %v2422, %v2548
        %v2550 = vpop.f32.mrf.mxu0
        %2551 = vmatprep.mubr.bf16.mxu0 0
        %2552 = vmatmul.mubr.bf16.gmra.mxu0 %v2486
        %v2553 = vpop.f32.mrf.mxu0
        %v2554 = vadd.f32 %v2427, %v2553
        %v2555 = vpop.f32.mrf.mxu0
        %v2556 = vpop.f32.mrf.mxu0
        %v2557 = vadd.f32 %v2430, %v2556
        %v2558 = vpop.f32.mrf.mxu0
        %2559 = vmatprep.mubr.bf16.mxu0 0
        %2560 = vmatmul.mubr.bf16.gmra.mxu0 %v2489
        %v2561 = vpop.f32.mrf.mxu0
        %v2562 = vadd.f32 %v2435, %v2561
        %v2563 = vpop.f32.mrf.mxu0
        %v2564 = vpop.f32.mrf.mxu0
        %v2565 = vadd.f32 %v2438, %v2564
        %v2566 = vpop.f32.mrf.mxu0
        %2567 = vmatprep.mubr.bf16.mxu0 0
        %2568 = vmatmul.mubr.bf16.gmra.mxu0 %v2492
        %v2569 = vpop.f32.mrf.mxu0
        %v2570 = vadd.f32 %v2443, %v2569
        %v2571 = vpop.f32.mrf.mxu0
        %v2572 = vpop.f32.mrf.mxu0
        %v2573 = vadd.f32 %v2446, %v2572
        %v2574 = vpop.f32.mrf.mxu0
        %2575 = vmatprep.mubr.bf16.mxu0 0
        %2576 = vmatmul.mubr.bf16.gmra.mxu0 %v2495
        %v2577 = vpop.f32.mrf.mxu0
        %v2578 = vadd.f32 %v2451, %v2577
        %v2579 = vpop.f32.mrf.mxu0
        %v2580 = vpop.f32.mrf.mxu0
        %v2581 = vadd.f32 %v2454, %v2580
        %v2582 = vpop.f32.mrf.mxu0
        %2583 = vmatprep.mubr.bf16.mxu0 0
        %2584 = vmatmul.mubr.bf16.gmra.mxu0 %v2498
        %v2585 = vpop.f32.mrf.mxu0
        %v2586 = vadd.f32 %v2459, %v2585
        %v2587 = vpop.f32.mrf.mxu0
        %v2588 = vpop.f32.mrf.mxu0
        %v2589 = vadd.f32 %v2462, %v2588
        %v2590 = vpop.f32.mrf.mxu0
        %2591 = vmatprep.mubr.bf16.mxu0 0
        %2592 = vmatmul.mubr.bf16.gmra.mxu0 %v2501
        %v2593 = vpop.f32.mrf.mxu0
        %v2594 = vadd.f32 %v2467, %v2593
        %v2595 = vpop.f32.mrf.mxu0
        %v2596 = vpop.f32.mrf.mxu0
        %v2597 = vadd.f32 %v2470, %v2596
        %v2598 = vpop.f32.mrf.mxu0
        %2599 = vdwg.mxu0
        %v2600 = vlaneseq
        %v2601 = vshrl.u32 %v2600, 7
        %v2602 = vsub.s32 5, %v2601
        %v2603 = vrot.slane %v415, %v2602
        %v2604 = vadd.f32 %v2538, %v2603
        %v2605 = vadd.f32 %v2541, %v2603
        %v2606 = vadd.f32 %v2546, %v2603
        %v2607 = vadd.f32 %v2549, %v2603
        %v2608 = vadd.f32 %v2554, %v2603
        %v2609 = vadd.f32 %v2557, %v2603
        %v2610 = vadd.f32 %v2562, %v2603
        %v2611 = vadd.f32 %v2565, %v2603
        %v2612 = vadd.f32 %v2570, %v2603
        %v2613 = vadd.f32 %v2573, %v2603
        %v2614 = vadd.f32 %v2578, %v2603
        %v2615 = vadd.f32 %v2581, %v2603
        %v2616 = vadd.f32 %v2586, %v2603
        %v2617 = vadd.f32 %v2589, %v2603
        %v2618 = vadd.f32 %v2594, %v2603
        %v2619 = vadd.f32 %v2597, %v2603
        %v2620 = vadd.f32 %v692, %v2604
        %v2621 = vadd.f32 %v695, %v2605
        %v2622 = vadd.f32 %v700, %v2606
        %v2623 = vadd.f32 %v703, %v2607
        %v2624 = vadd.f32 %v708, %v2608
        %v2625 = vadd.f32 %v711, %v2609
        %v2626 = vadd.f32 %v716, %v2610
        %v2627 = vadd.f32 %v719, %v2611
        %v2628 = vadd.f32 %v724, %v2612
        %v2629 = vadd.f32 %v727, %v2613
        %v2630 = vadd.f32 %v732, %v2614
        %v2631 = vadd.f32 %v735, %v2615
        %v2632 = vadd.f32 %v740, %v2616
        %v2633 = vadd.f32 %v743, %v2617
        %v2634 = vadd.f32 %v748, %v2618
        %v2635 = vadd.f32 %v751, %v2619
        %v2636 = vsel %vm417, %v2620, 0.0
        %2637 = vadd.xlane.f32.xlu0 %v2636
        %v2638 = vpop.xlane.xlu0 %2637
        %v2639 = vsel %vm417, %v2621, 0.0
        %2640 = vadd.xlane.f32.xlu0 %v2639
        %v2641 = vpop.xlane.xlu0 %2640
        %v2642 = vsel %vm417, %v2622, 0.0
        %2643 = vadd.xlane.f32.xlu0 %v2642
        %v2644 = vpop.xlane.xlu0 %2643
        %v2645 = vsel %vm417, %v2623, 0.0
        %2646 = vadd.xlane.f32.xlu0 %v2645
        %v2647 = vpop.xlane.xlu0 %2646
        %v2648 = vsel %vm417, %v2624, 0.0
        %2649 = vadd.xlane.f32.xlu0 %v2648
        %v2650 = vpop.xlane.xlu0 %2649
        %v2651 = vsel %vm417, %v2625, 0.0
        %2652 = vadd.xlane.f32.xlu0 %v2651
        %v2653 = vpop.xlane.xlu0 %2652
        %v2654 = vsel %vm417, %v2626, 0.0
        %2655 = vadd.xlane.f32.xlu0 %v2654
        %v2656 = vpop.xlane.xlu0 %2655
        %v2657 = vsel %vm417, %v2627, 0.0
        %2658 = vadd.xlane.f32.xlu0 %v2657
        %v2659 = vpop.xlane.xlu0 %2658
        %v2660 = vsel %vm417, %v2628, 0.0
        %2661 = vadd.xlane.f32.xlu0 %v2660
        %v2662 = vpop.xlane.xlu0 %2661
        %v2663 = vsel %vm417, %v2629, 0.0
        %2664 = vadd.xlane.f32.xlu0 %v2663
        %v2665 = vpop.xlane.xlu0 %2664
        %v2666 = vsel %vm417, %v2630, 0.0
        %2667 = vadd.xlane.f32.xlu0 %v2666
        %v2668 = vpop.xlane.xlu0 %2667
        %v2669 = vsel %vm417, %v2631, 0.0
        %2670 = vadd.xlane.f32.xlu0 %v2669
        %v2671 = vpop.xlane.xlu0 %2670
        %v2672 = vsel %vm417, %v2632, 0.0
        %2673 = vadd.xlane.f32.xlu0 %v2672
        %v2674 = vpop.xlane.xlu0 %2673
        %v2675 = vsel %vm417, %v2633, 0.0
        %2676 = vadd.xlane.f32.xlu0 %v2675
        %v2677 = vpop.xlane.xlu0 %2676
        %v2678 = vsel %vm417, %v2634, 0.0
        %2679 = vadd.xlane.f32.xlu0 %v2678
        %v2680 = vpop.xlane.xlu0 %2679
        %v2681 = vsel %vm417, %v2635, 0.0
        %2682 = vadd.xlane.f32.xlu0 %v2681
        %v2683 = vpop.xlane.xlu0 %2682
        %v2684 = vmul.f32 %v2638, %v802
        %v2685 = vmul.f32 %v2641, %v802
        %v2686 = vmul.f32 %v2644, %v802
        %v2687 = vmul.f32 %v2647, %v802
        %v2688 = vmul.f32 %v2650, %v802
        %v2689 = vmul.f32 %v2653, %v802
        %v2690 = vmul.f32 %v2656, %v802
        %v2691 = vmul.f32 %v2659, %v802
        %v2692 = vmul.f32 %v2662, %v802
        %v2693 = vmul.f32 %v2665, %v802
        %v2694 = vmul.f32 %v2668, %v802
        %v2695 = vmul.f32 %v2671, %v802
        %v2696 = vmul.f32 %v2674, %v802
        %v2697 = vmul.f32 %v2677, %v802
        %v2698 = vmul.f32 %v2680, %v802
        %v2699 = vmul.f32 %v2683, %v802
        %v2700 = vsub.f32 %v2620, %v2684
        %v2701 = vsub.f32 %v2621, %v2685
        %v2702 = vsub.f32 %v2622, %v2686
        %v2703 = vsub.f32 %v2623, %v2687
        %v2704 = vsub.f32 %v2624, %v2688
        %v2705 = vsub.f32 %v2625, %v2689
        %v2706 = vsub.f32 %v2626, %v2690
        %v2707 = vsub.f32 %v2627, %v2691
        %v2708 = vsub.f32 %v2628, %v2692
        %v2709 = vsub.f32 %v2629, %v2693
        %v2710 = vsub.f32 %v2630, %v2694
        %v2711 = vsub.f32 %v2631, %v2695
        %v2712 = vsub.f32 %v2632, %v2696
        %v2713 = vsub.f32 %v2633, %v2697
        %v2714 = vsub.f32 %v2634, %v2698
        %v2715 = vsub.f32 %v2635, %v2699
        %v2716 = vmul.f32 %v2700, %v2700
        %v2717 = vmul.f32 %v2701, %v2701
        %v2718 = vmul.f32 %v2702, %v2702
        %v2719 = vmul.f32 %v2703, %v2703
        %v2720 = vmul.f32 %v2704, %v2704
        %v2721 = vmul.f32 %v2705, %v2705
        %v2722 = vmul.f32 %v2706, %v2706
        %v2723 = vmul.f32 %v2707, %v2707
        %v2724 = vmul.f32 %v2708, %v2708
        %v2725 = vmul.f32 %v2709, %v2709
        %v2726 = vmul.f32 %v2710, %v2710
        %v2727 = vmul.f32 %v2711, %v2711
        %v2728 = vmul.f32 %v2712, %v2712
        %v2729 = vmul.f32 %v2713, %v2713
        %v2730 = vmul.f32 %v2714, %v2714
        %v2731 = vmul.f32 %v2715, %v2715
        %v2732 = vsel %vm417, %v2716, 0.0
        %2733 = vadd.xlane.f32.xlu0 %v2732
        %v2734 = vpop.xlane.xlu0 %2733
        %v2735 = vsel %vm417, %v2717, 0.0
        %2736 = vadd.xlane.f32.xlu0 %v2735
        %v2737 = vpop.xlane.xlu0 %2736
        %v2738 = vsel %vm417, %v2718, 0.0
        %2739 = vadd.xlane.f32.xlu0 %v2738
        %v2740 = vpop.xlane.xlu0 %2739
        %v2741 = vsel %vm417, %v2719, 0.0
        %2742 = vadd.xlane.f32.xlu0 %v2741
        %v2743 = vpop.xlane.xlu0 %2742
        %v2744 = vsel %vm417, %v2720, 0.0
        %2745 = vadd.xlane.f32.xlu0 %v2744
        %v2746 = vpop.xlane.xlu0 %2745
        %v2747 = vsel %vm417, %v2721, 0.0
        %2748 = vadd.xlane.f32.xlu0 %v2747
        %v2749 = vpop.xlane.xlu0 %2748
        %v2750 = vsel %vm417, %v2722, 0.0
        %2751 = vadd.xlane.f32.xlu0 %v2750
        %v2752 = vpop.xlane.xlu0 %2751
        %v2753 = vsel %vm417, %v2723, 0.0
        %2754 = vadd.xlane.f32.xlu0 %v2753
        %v2755 = vpop.xlane.xlu0 %2754
        %v2756 = vsel %vm417, %v2724, 0.0
        %2757 = vadd.xlane.f32.xlu0 %v2756
        %v2758 = vpop.xlane.xlu0 %2757
        %v2759 = vsel %vm417, %v2725, 0.0
        %2760 = vadd.xlane.f32.xlu0 %v2759
        %v2761 = vpop.xlane.xlu0 %2760
        %v2762 = vsel %vm417, %v2726, 0.0
        %2763 = vadd.xlane.f32.xlu0 %v2762
        %v2764 = vpop.xlane.xlu0 %2763
        %v2765 = vsel %vm417, %v2727, 0.0
        %2766 = vadd.xlane.f32.xlu0 %v2765
        %v2767 = vpop.xlane.xlu0 %2766
        %v2768 = vsel %vm417, %v2728, 0.0
        %2769 = vadd.xlane.f32.xlu0 %v2768
        %v2770 = vpop.xlane.xlu0 %2769
        %v2771 = vsel %vm417, %v2729, 0.0
        %2772 = vadd.xlane.f32.xlu0 %v2771
        %v2773 = vpop.xlane.xlu0 %2772
        %v2774 = vsel %vm417, %v2730, 0.0
        %2775 = vadd.xlane.f32.xlu0 %v2774
        %v2776 = vpop.xlane.xlu0 %2775
        %v2777 = vsel %vm417, %v2731, 0.0
        %2778 = vadd.xlane.f32.xlu0 %v2777
        %v2779 = vpop.xlane.xlu0 %2778
        %v2780 = vmul.f32 %v2734, %v802
        %v2781 = vmul.f32 %v2737, %v802
        %v2782 = vmul.f32 %v2740, %v802
        %v2783 = vmul.f32 %v2743, %v802
        %v2784 = vmul.f32 %v2746, %v802
        %v2785 = vmul.f32 %v2749, %v802
        %v2786 = vmul.f32 %v2752, %v802
        %v2787 = vmul.f32 %v2755, %v802
        %v2788 = vmul.f32 %v2758, %v802
        %v2789 = vmul.f32 %v2761, %v802
        %v2790 = vmul.f32 %v2764, %v802
        %v2791 = vmul.f32 %v2767, %v802
        %v2792 = vmul.f32 %v2770, %v802
        %v2793 = vmul.f32 %v2773, %v802
        %v2794 = vmul.f32 %v2776, %v802
        %v2795 = vmul.f32 %v2779, %v802
        %v2796 = vadd.f32 %v2780, 1e-05
        %v2797 = vadd.f32 %v2781, 1e-05
        %v2798 = vadd.f32 %v2782, 1e-05
        %v2799 = vadd.f32 %v2783, 1e-05
        %v2800 = vadd.f32 %v2784, 1e-05
        %v2801 = vadd.f32 %v2785, 1e-05
        %v2802 = vadd.f32 %v2786, 1e-05
        %v2803 = vadd.f32 %v2787, 1e-05
        %v2804 = vadd.f32 %v2788, 1e-05
        %v2805 = vadd.f32 %v2789, 1e-05
        %v2806 = vadd.f32 %v2790, 1e-05
        %v2807 = vadd.f32 %v2791, 1e-05
        %v2808 = vadd.f32 %v2792, 1e-05
        %v2809 = vadd.f32 %v2793, 1e-05
        %v2810 = vadd.f32 %v2794, 1e-05
        %v2811 = vadd.f32 %v2795, 1e-05
        %v2812 = vrsqrt.pop %v2796
        %v2813 = vrsqrt.pop %v2797
        %v2814 = vrsqrt.pop %v2798
        %v2815 = vrsqrt.pop %v2799
        %v2816 = vrsqrt.pop %v2800
        %v2817 = vrsqrt.pop %v2801
        %v2818 = vrsqrt.pop %v2802
        %v2819 = vrsqrt.pop %v2803
        %v2820 = vrsqrt.pop %v2804
        %v2821 = vrsqrt.pop %v2805
        %v2822 = vrsqrt.pop %v2806
        %v2823 = vrsqrt.pop %v2807
        %v2824 = vrsqrt.pop %v2808
        %v2825 = vrsqrt.pop %v2809
        %v2826 = vrsqrt.pop %v2810
        %v2827 = vrsqrt.pop %v2811
        %v2828 = vmul.f32 %v2700, %v2812
        %v2829 = vmul.f32 %v2701, %v2813
        %v2830 = vmul.f32 %v2702, %v2814
        %v2831 = vmul.f32 %v2703, %v2815
        %v2832 = vmul.f32 %v2704, %v2816
        %v2833 = vmul.f32 %v2705, %v2817
        %v2834 = vmul.f32 %v2706, %v2818
        %v2835 = vmul.f32 %v2707, %v2819
        %v2836 = vmul.f32 %v2708, %v2820
        %v2837 = vmul.f32 %v2709, %v2821
        %v2838 = vmul.f32 %v2710, %v2822
        %v2839 = vmul.f32 %v2711, %v2823
        %v2840 = vmul.f32 %v2712, %v2824
        %v2841 = vmul.f32 %v2713, %v2825
        %v2842 = vmul.f32 %v2714, %v2826
        %v2843 = vmul.f32 %v2715, %v2827
        %v2844 = vlaneseq
        %v2845 = vshrl.u32 %v2844, 7
        %v2846 = vsub.s32 6, %v2845
        %v2847 = vrot.slane %v415, %v2846
        %v2848 = vmul.f32 %v2828, %v2847
        %v2849 = vmul.f32 %v2829, %v2847
        %v2850 = vmul.f32 %v2830, %v2847
        %v2851 = vmul.f32 %v2831, %v2847
        %v2852 = vmul.f32 %v2832, %v2847
        %v2853 = vmul.f32 %v2833, %v2847
        %v2854 = vmul.f32 %v2834, %v2847
        %v2855 = vmul.f32 %v2835, %v2847
        %v2856 = vmul.f32 %v2836, %v2847
        %v2857 = vmul.f32 %v2837, %v2847
        %v2858 = vmul.f32 %v2838, %v2847
        %v2859 = vmul.f32 %v2839, %v2847
        %v2860 = vmul.f32 %v2840, %v2847
        %v2861 = vmul.f32 %v2841, %v2847
        %v2862 = vmul.f32 %v2842, %v2847
        %v2863 = vmul.f32 %v2843, %v2847
        %v2864 = vlaneseq
        %v2865 = vshrl.u32 %v2864, 7
        %v2866 = vsub.s32 7, %v2865
        %v2867 = vrot.slane %v415, %v2866
        %v2868 = vadd.f32 %v2848, %v2867
        %v2869 = vadd.f32 %v2849, %v2867
        %v2870 = vadd.f32 %v2850, %v2867
        %v2871 = vadd.f32 %v2851, %v2867
        %v2872 = vadd.f32 %v2852, %v2867
        %v2873 = vadd.f32 %v2853, %v2867
        %v2874 = vadd.f32 %v2854, %v2867
        %v2875 = vadd.f32 %v2855, %v2867
        %v2876 = vadd.f32 %v2856, %v2867
        %v2877 = vadd.f32 %v2857, %v2867
        %v2878 = vadd.f32 %v2858, %v2867
        %v2879 = vadd.f32 %v2859, %v2867
        %v2880 = vadd.f32 %v2860, %v2867
        %v2881 = vadd.f32 %v2861, %v2867
        %v2882 = vadd.f32 %v2862, %v2867
        %v2883 = vadd.f32 %v2863, %v2867
        %s2884 = scalar_lea.vmem %s4, 16
        %v2885 = vld [vmem:[%s2884] sm:$0xf]
        %v2886 = vld [vmem:[%s2884 + $0x4] sm:$0xf]
        %v2887 = vld [vmem:[%s2884 + $0x8] sm:$0xf]
        %v2888 = vld [vmem:[%s2884 + $0xc] sm:$0xf]
        %s2889 = scalar_lea.vmem %s5, 16
        %v2890 = vld [vmem:[%s2889] sm:$0xf]
        %v2891 = vld [vmem:[%s2889 + $0x4] sm:$0xf]
        %v2892 = vld [vmem:[%s2889 + $0x8] sm:$0xf]
        %v2893 = vld [vmem:[%s2889 + $0xc] sm:$0xf]
        %v2894 = vpack.c.bf16 %v2869, %v2868
        %v2895 = vpack.c.bf16 %v2871, %v2870
        %v2896 = vpack.c.bf16 %v2873, %v2872
        %v2897 = vpack.c.bf16 %v2875, %v2874
        %v2898 = vpack.c.bf16 %v2877, %v2876
        %v2899 = vpack.c.bf16 %v2879, %v2878
        %v2900 = vpack.c.bf16 %v2881, %v2880
        %v2901 = vpack.c.bf16 %v2883, %v2882
        %v2906 = vunpack.c.l.b16 %v2885
        %v2907 = vunpack.c.l.b16 %v2886
        %v2908 = vunpack.c.l.b16 %v2887
        %v2909 = vunpack.c.l.b16 %v2888
        %v2910 = vpack.c.b16 %v2907, %v2906
        %v2911 = vpack.c.b16 %v2909, %v2908
        %v2915 = vsel %vm417, %v2894, 0
        %v2918 = vsel %vm417, %v2895, 0
        %v2921 = vsel %vm417, %v2896, 0
        %v2924 = vsel %vm417, %v2897, 0
        %v2927 = vsel %vm417, %v2898, 0
        %v2930 = vsel %vm417, %v2899, 0
        %v2933 = vsel %vm417, %v2900, 0
        %v2936 = vsel %vm417, %v2901, 0
        %2938 = vmatprep.subr.bf16.mxu0 0
        %2939 = vmatpush1.bf16.msra.mxu0 0
        %2940 = vmatprep.subr.bf16.mxu0 0
        %2941 = vmatpush1.bf16.msra.mxu0 0
        %2942 = vmatprep.subr.bf16.mxu0 0
        %2943 = vmatpush1.bf16.msra.mxu0 0
        %2944 = vmatprep.subr.bf16.mxu0 0
        %2945 = vmatpush1.bf16.msra.mxu0 0
        %2946 = vmatprep.subr.bf16.mxu0 0
        %2947 = vmatpush1.bf16.msra.mxu0 0
        %2948 = vmatprep.subr.bf16.mxu0 0
        %2949 = vmatpush1.bf16.msra.mxu0 0
        %2950 = vmatprep.subr.bf16.mxu0 0
        %2951 = vmatpush1.bf16.msra.mxu0 %v2911
        %2952 = vmatprep.subr.bf16.mxu0 0
        %2953 = vmatpush1.bf16.msra.mxu0 %v2910
        %2954 = vmatprep.subr.bf16.mxu0 0
        %2955 = vmatpush2.bf16.msra.mxu0 0
        %2956 = vmatprep.subr.bf16.mxu0 0
        %2957 = vmatpush2.bf16.msra.mxu0 0
        %2958 = vmatprep.subr.bf16.mxu0 0
        %2959 = vmatpush2.bf16.msra.mxu0 0
        %2960 = vmatprep.subr.bf16.mxu0 0
        %2961 = vmatpush2.bf16.msra.mxu0 0
        %2962 = vmatprep.subr.bf16.mxu0 0
        %2963 = vmatpush2.bf16.msra.mxu0 0
        %2964 = vmatprep.subr.bf16.mxu0 0
        %2965 = vmatpush2.bf16.msra.mxu0 0
        %2966 = vmatprep.subr.bf16.mxu0 0
        %2967 = vmatpush2.bf16.msra.mxu0 0
        %2968 = vmatprep.subr.bf16.mxu0 0
        %2969 = vmatpush2.bf16.msra.mxu0 0
        %2970 = vmatprep.mubr.bf16.mxu0 0
        %2971 = vmatmul.mubr.bf16.gmra.mxu0 %v2915
        %v2972 = vpop.f32.mrf.mxu0
        %v2973 = vadd.f32 0.0, %v2972
        %v2974 = vpop.f32.mrf.mxu0
        %v2975 = vpop.f32.mrf.mxu0
        %v2976 = vadd.f32 0.0, %v2975
        %v2977 = vpop.f32.mrf.mxu0
        %2978 = vmatprep.mubr.bf16.mxu0 0
        %2979 = vmatmul.mubr.bf16.gmra.mxu0 %v2918
        %v2980 = vpop.f32.mrf.mxu0
        %v2981 = vadd.f32 0.0, %v2980
        %v2982 = vpop.f32.mrf.mxu0
        %v2983 = vpop.f32.mrf.mxu0
        %v2984 = vadd.f32 0.0, %v2983
        %v2985 = vpop.f32.mrf.mxu0
        %2986 = vmatprep.mubr.bf16.mxu0 0
        %2987 = vmatmul.mubr.bf16.gmra.mxu0 %v2921
        %v2988 = vpop.f32.mrf.mxu0
        %v2989 = vadd.f32 0.0, %v2988
        %v2990 = vpop.f32.mrf.mxu0
        %v2991 = vpop.f32.mrf.mxu0
        %v2992 = vadd.f32 0.0, %v2991
        %v2993 = vpop.f32.mrf.mxu0
        %2994 = vmatprep.mubr.bf16.mxu0 0
        %2995 = vmatmul.mubr.bf16.gmra.mxu0 %v2924
        %v2996 = vpop.f32.mrf.mxu0
        %v2997 = vadd.f32 0.0, %v2996
        %v2998 = vpop.f32.mrf.mxu0
        %v2999 = vpop.f32.mrf.mxu0
        %v3000 = vadd.f32 0.0, %v2999
        %v3001 = vpop.f32.mrf.mxu0
        %3002 = vmatprep.mubr.bf16.mxu0 0
        %3003 = vmatmul.mubr.bf16.gmra.mxu0 %v2927
        %v3004 = vpop.f32.mrf.mxu0
        %v3005 = vadd.f32 0.0, %v3004
        %v3006 = vpop.f32.mrf.mxu0
        %v3007 = vpop.f32.mrf.mxu0
        %v3008 = vadd.f32 0.0, %v3007
        %v3009 = vpop.f32.mrf.mxu0
        %3010 = vmatprep.mubr.bf16.mxu0 0
        %3011 = vmatmul.mubr.bf16.gmra.mxu0 %v2930
        %v3012 = vpop.f32.mrf.mxu0
        %v3013 = vadd.f32 0.0, %v3012
        %v3014 = vpop.f32.mrf.mxu0
        %v3015 = vpop.f32.mrf.mxu0
        %v3016 = vadd.f32 0.0, %v3015
        %v3017 = vpop.f32.mrf.mxu0
        %3018 = vmatprep.mubr.bf16.mxu0 0
        %3019 = vmatmul.mubr.bf16.gmra.mxu0 %v2933
        %v3020 = vpop.f32.mrf.mxu0
        %v3021 = vadd.f32 0.0, %v3020
        %v3022 = vpop.f32.mrf.mxu0
        %v3023 = vpop.f32.mrf.mxu0
        %v3024 = vadd.f32 0.0, %v3023
        %v3025 = vpop.f32.mrf.mxu0
        %3026 = vmatprep.mubr.bf16.mxu0 0
        %3027 = vmatmul.mubr.bf16.gmra.mxu0 %v2936
        %v3028 = vpop.f32.mrf.mxu0
        %v3029 = vadd.f32 0.0, %v3028
        %v3030 = vpop.f32.mrf.mxu0
        %v3031 = vpop.f32.mrf.mxu0
        %v3032 = vadd.f32 0.0, %v3031
        %v3033 = vpop.f32.mrf.mxu0
        %3034 = vdwg.mxu0
        %v3035 = vpack.c.bf16 %v2976, %v2973
        %v3036 = vpack.c.bf16 %v2984, %v2981
        %v3037 = vpack.c.bf16 %v2992, %v2989
        %v3038 = vpack.c.bf16 %v3000, %v2997
        %v3039 = vpack.c.bf16 %v3008, %v3005
        %v3040 = vpack.c.bf16 %v3016, %v3013
        %v3041 = vpack.c.bf16 %v3024, %v3021
        %v3042 = vpack.c.bf16 %v3032, %v3029
        %3047 = vrot.lane.b32.xlu0 %v3035, 96
        %v3048 = vpop.permute.xlu0 %3047
        %3049 = vrot.lane.b32.xlu0 %v3036, 96
        %v3050 = vpop.permute.xlu0 %3049
        %3051 = vrot.lane.b32.xlu0 %v3037, 96
        %v3052 = vpop.permute.xlu0 %3051
        %3053 = vrot.lane.b32.xlu0 %v3038, 96
        %v3054 = vpop.permute.xlu0 %3053
        %v3056 = vsel %vm1172, %v3035, 0
        %v3059 = vsel %vm1172, %v3036, 0
        %v3062 = vsel %vm1172, %v3037, 0
        %v3065 = vsel %vm1172, %v3038, 0
        %v3068 = vsel %vm1172, %v3048, 0
        %v3071 = vsel %vm1172, %v3050, 0
        %v3074 = vsel %vm1172, %v3052, 0
        %v3077 = vsel %vm1172, %v3054, 0
        %3079 = vmatprep.subr.bf16.mxu0 0
        %3080 = vmatpush1.bf16.xpose.msra.mxu0 0
        %3081 = vmatprep.subr.bf16.mxu0 0
        %3082 = vmatpush1.bf16.xpose.msra.mxu0 0
        %3083 = vmatprep.subr.bf16.mxu0 0
        %3084 = vmatpush1.bf16.xpose.msra.mxu0 0
        %3085 = vmatprep.subr.bf16.mxu0 0
        %3086 = vmatpush1.bf16.xpose.msra.mxu0 0
        %3087 = vmatprep.subr.bf16.mxu0 0
        %3088 = vmatpush1.bf16.xpose.msra.mxu0 %v3077
        %3089 = vmatprep.subr.bf16.mxu0 0
        %3090 = vmatpush1.bf16.xpose.msra.mxu0 %v3074
        %3091 = vmatprep.subr.bf16.mxu0 0
        %3092 = vmatpush1.bf16.xpose.msra.mxu0 %v3071
        %3093 = vmatprep.subr.bf16.mxu0 0
        %3094 = vmatpush1.bf16.xpose.msra.mxu0 %v3068
        %3095 = vmatprep.subr.bf16.mxu0 0
        %3096 = vmatpush2.bf16.xpose.msra.mxu0 0
        %3097 = vmatprep.subr.bf16.mxu0 0
        %3098 = vmatpush2.bf16.xpose.msra.mxu0 0
        %3099 = vmatprep.subr.bf16.mxu0 0
        %3100 = vmatpush2.bf16.xpose.msra.mxu0 0
        %3101 = vmatprep.subr.bf16.mxu0 0
        %3102 = vmatpush2.bf16.xpose.msra.mxu0 0
        %3103 = vmatprep.subr.bf16.mxu0 0
        %3104 = vmatpush2.bf16.xpose.msra.mxu0 0
        %3105 = vmatprep.subr.bf16.mxu0 0
        %3106 = vmatpush2.bf16.xpose.msra.mxu0 0
        %3107 = vmatprep.subr.bf16.mxu0 0
        %3108 = vmatpush2.bf16.xpose.msra.mxu0 0
        %3109 = vmatprep.subr.bf16.mxu0 0
        %3110 = vmatpush2.bf16.xpose.msra.mxu0 0
        %3111 = vmatprep.mubr.bf16.mxu0 0
        %3112 = vmatmul.mubr.bf16.gmra.mxu0 %v3056
        %v3113 = vpop.f32.mrf.mxu0
        %v3114 = vadd.f32 0.0, %v3113
        %v3115 = vpop.f32.mrf.mxu0
        %v3116 = vpop.f32.mrf.mxu0
        %v3117 = vadd.f32 0.0, %v3116
        %v3118 = vpop.f32.mrf.mxu0
        %3119 = vmatprep.mubr.bf16.mxu0 0
        %3120 = vmatmul.mubr.bf16.gmra.mxu0 %v3059
        %v3121 = vpop.f32.mrf.mxu0
        %v3122 = vadd.f32 0.0, %v3121
        %v3123 = vpop.f32.mrf.mxu0
        %v3124 = vpop.f32.mrf.mxu0
        %v3125 = vadd.f32 0.0, %v3124
        %v3126 = vpop.f32.mrf.mxu0
        %3127 = vmatprep.mubr.bf16.mxu0 0
        %3128 = vmatmul.mubr.bf16.gmra.mxu0 %v3062
        %v3129 = vpop.f32.mrf.mxu0
        %v3130 = vadd.f32 0.0, %v3129
        %v3131 = vpop.f32.mrf.mxu0
        %v3132 = vpop.f32.mrf.mxu0
        %v3133 = vadd.f32 0.0, %v3132
        %v3134 = vpop.f32.mrf.mxu0
        %3135 = vmatprep.mubr.bf16.mxu0 0
        %3136 = vmatmul.mubr.bf16.gmra.mxu0 %v3065
        %v3137 = vpop.f32.mrf.mxu0
        %v3138 = vadd.f32 0.0, %v3137
        %v3139 = vpop.f32.mrf.mxu0
        %v3140 = vpop.f32.mrf.mxu0
        %v3141 = vadd.f32 0.0, %v3140
        %v3142 = vpop.f32.mrf.mxu0
        %3143 = vdwg.mxu0
        %3148 = vrot.lane.b32.xlu0 %v3039, 96
        %v3149 = vpop.permute.xlu0 %3148
        %3150 = vrot.lane.b32.xlu0 %v3040, 96
        %v3151 = vpop.permute.xlu0 %3150
        %3152 = vrot.lane.b32.xlu0 %v3041, 96
        %v3153 = vpop.permute.xlu0 %3152
        %3154 = vrot.lane.b32.xlu0 %v3042, 96
        %v3155 = vpop.permute.xlu0 %3154
        %v3157 = vsel %vm1172, %v3039, 0
        %v3160 = vsel %vm1172, %v3040, 0
        %v3163 = vsel %vm1172, %v3041, 0
        %v3166 = vsel %vm1172, %v3042, 0
        %v3169 = vsel %vm1172, %v3149, 0
        %v3172 = vsel %vm1172, %v3151, 0
        %v3175 = vsel %vm1172, %v3153, 0
        %v3178 = vsel %vm1172, %v3155, 0
        %3180 = vmatprep.subr.bf16.mxu0 0
        %3181 = vmatpush1.bf16.xpose.msra.mxu0 0
        %3182 = vmatprep.subr.bf16.mxu0 0
        %3183 = vmatpush1.bf16.xpose.msra.mxu0 0
        %3184 = vmatprep.subr.bf16.mxu0 0
        %3185 = vmatpush1.bf16.xpose.msra.mxu0 0
        %3186 = vmatprep.subr.bf16.mxu0 0
        %3187 = vmatpush1.bf16.xpose.msra.mxu0 0
        %3188 = vmatprep.subr.bf16.mxu0 0
        %3189 = vmatpush1.bf16.xpose.msra.mxu0 %v3178
        %3190 = vmatprep.subr.bf16.mxu0 0
        %3191 = vmatpush1.bf16.xpose.msra.mxu0 %v3175
        %3192 = vmatprep.subr.bf16.mxu0 0
        %3193 = vmatpush1.bf16.xpose.msra.mxu0 %v3172
        %3194 = vmatprep.subr.bf16.mxu0 0
        %3195 = vmatpush1.bf16.xpose.msra.mxu0 %v3169
        %3196 = vmatprep.subr.bf16.mxu0 0
        %3197 = vmatpush2.bf16.xpose.msra.mxu0 0
        %3198 = vmatprep.subr.bf16.mxu0 0
        %3199 = vmatpush2.bf16.xpose.msra.mxu0 0
        %3200 = vmatprep.subr.bf16.mxu0 0
        %3201 = vmatpush2.bf16.xpose.msra.mxu0 0
        %3202 = vmatprep.subr.bf16.mxu0 0
        %3203 = vmatpush2.bf16.xpose.msra.mxu0 0
        %3204 = vmatprep.subr.bf16.mxu0 0
        %3205 = vmatpush2.bf16.xpose.msra.mxu0 0
        %3206 = vmatprep.subr.bf16.mxu0 0
        %3207 = vmatpush2.bf16.xpose.msra.mxu0 0
        %3208 = vmatprep.subr.bf16.mxu0 0
        %3209 = vmatpush2.bf16.xpose.msra.mxu0 0
        %3210 = vmatprep.subr.bf16.mxu0 0
        %3211 = vmatpush2.bf16.xpose.msra.mxu0 0
        %3212 = vmatprep.mubr.bf16.mxu0 0
        %3213 = vmatmul.mubr.bf16.gmra.mxu0 %v3157
        %v3214 = vpop.f32.mrf.mxu0
        %v3215 = vadd.f32 0.0, %v3214
        %v3216 = vpop.f32.mrf.mxu0
        %v3217 = vpop.f32.mrf.mxu0
        %v3218 = vadd.f32 0.0, %v3217
        %v3219 = vpop.f32.mrf.mxu0
        %3220 = vmatprep.mubr.bf16.mxu0 0
        %3221 = vmatmul.mubr.bf16.gmra.mxu0 %v3160
        %v3222 = vpop.f32.mrf.mxu0
        %v3223 = vadd.f32 0.0, %v3222
        %v3224 = vpop.f32.mrf.mxu0
        %v3225 = vpop.f32.mrf.mxu0
        %v3226 = vadd.f32 0.0, %v3225
        %v3227 = vpop.f32.mrf.mxu0
        %3228 = vmatprep.mubr.bf16.mxu0 0
        %3229 = vmatmul.mubr.bf16.gmra.mxu0 %v3163
        %v3230 = vpop.f32.mrf.mxu0
        %v3231 = vadd.f32 0.0, %v3230
        %v3232 = vpop.f32.mrf.mxu0
        %v3233 = vpop.f32.mrf.mxu0
        %v3234 = vadd.f32 0.0, %v3233
        %v3235 = vpop.f32.mrf.mxu0
        %3236 = vmatprep.mubr.bf16.mxu0 0
        %3237 = vmatmul.mubr.bf16.gmra.mxu0 %v3166
        %v3238 = vpop.f32.mrf.mxu0
        %v3239 = vadd.f32 0.0, %v3238
        %v3240 = vpop.f32.mrf.mxu0
        %v3241 = vpop.f32.mrf.mxu0
        %v3242 = vadd.f32 0.0, %v3241
        %v3243 = vpop.f32.mrf.mxu0
        %3244 = vdwg.mxu0
        %v3245 = vmul.f32 %v3114, 0.25
        %v3246 = vmul.f32 %v3117, 0.25
        %v3247 = vmul.f32 %v3122, 0.25
        %v3248 = vmul.f32 %v3125, 0.25
        %v3249 = vmul.f32 %v3130, 0.25
        %v3250 = vmul.f32 %v3133, 0.25
        %v3251 = vmul.f32 %v3138, 0.25
        %v3252 = vmul.f32 %v3141, 0.25
        %v3253 = vmul.f32 %v3215, 0.25
        %v3254 = vmul.f32 %v3218, 0.25
        %v3255 = vmul.f32 %v3223, 0.25
        %v3256 = vmul.f32 %v3226, 0.25
        %v3257 = vmul.f32 %v3231, 0.25
        %v3258 = vmul.f32 %v3234, 0.25
        %v3259 = vmul.f32 %v3239, 0.25
        %v3260 = vmul.f32 %v3242, 0.25
        %v3261 = vsel %vm1379, %v3245, -inf
        %3262 = vmax.xlane.f32.xlu0 %v3261
        %v3263 = vpop.xlane.xlu0 %3262
        %v3264 = vsel %vm1379, %v3246, -inf
        %3265 = vmax.xlane.f32.xlu0 %v3264
        %v3266 = vpop.xlane.xlu0 %3265
        %v3267 = vsel %vm1379, %v3247, -inf
        %3268 = vmax.xlane.f32.xlu0 %v3267
        %v3269 = vpop.xlane.xlu0 %3268
        %v3270 = vsel %vm1379, %v3248, -inf
        %3271 = vmax.xlane.f32.xlu0 %v3270
        %v3272 = vpop.xlane.xlu0 %3271
        %v3273 = vsel %vm1379, %v3249, -inf
        %3274 = vmax.xlane.f32.xlu0 %v3273
        %v3275 = vpop.xlane.xlu0 %3274
        %v3276 = vsel %vm1379, %v3250, -inf
        %3277 = vmax.xlane.f32.xlu0 %v3276
        %v3278 = vpop.xlane.xlu0 %3277
        %v3279 = vsel %vm1379, %v3251, -inf
        %3280 = vmax.xlane.f32.xlu0 %v3279
        %v3281 = vpop.xlane.xlu0 %3280
        %v3282 = vsel %vm1379, %v3252, -inf
        %3283 = vmax.xlane.f32.xlu0 %v3282
        %v3284 = vpop.xlane.xlu0 %3283
        %v3285 = vsel %vm1379, %v3253, -inf
        %3286 = vmax.xlane.f32.xlu0 %v3285
        %v3287 = vpop.xlane.xlu0 %3286
        %v3288 = vsel %vm1379, %v3254, -inf
        %3289 = vmax.xlane.f32.xlu0 %v3288
        %v3290 = vpop.xlane.xlu0 %3289
        %v3291 = vsel %vm1379, %v3255, -inf
        %3292 = vmax.xlane.f32.xlu0 %v3291
        %v3293 = vpop.xlane.xlu0 %3292
        %v3294 = vsel %vm1379, %v3256, -inf
        %3295 = vmax.xlane.f32.xlu0 %v3294
        %v3296 = vpop.xlane.xlu0 %3295
        %v3297 = vsel %vm1379, %v3257, -inf
        %3298 = vmax.xlane.f32.xlu0 %v3297
        %v3299 = vpop.xlane.xlu0 %3298
        %v3300 = vsel %vm1379, %v3258, -inf
        %3301 = vmax.xlane.f32.xlu0 %v3300
        %v3302 = vpop.xlane.xlu0 %3301
        %v3303 = vsel %vm1379, %v3259, -inf
        %3304 = vmax.xlane.f32.xlu0 %v3303
        %v3305 = vpop.xlane.xlu0 %3304
        %v3306 = vsel %vm1379, %v3260, -inf
        %3307 = vmax.xlane.f32.xlu0 %v3306
        %v3308 = vpop.xlane.xlu0 %3307
        %v3309 = vsub.f32 %v3245, %v3263
        %v3310 = vsub.f32 %v3246, %v3266
        %v3311 = vsub.f32 %v3247, %v3269
        %v3312 = vsub.f32 %v3248, %v3272
        %v3313 = vsub.f32 %v3249, %v3275
        %v3314 = vsub.f32 %v3250, %v3278
        %v3315 = vsub.f32 %v3251, %v3281
        %v3316 = vsub.f32 %v3252, %v3284
        %v3317 = vsub.f32 %v3253, %v3287
        %v3318 = vsub.f32 %v3254, %v3290
        %v3319 = vsub.f32 %v3255, %v3293
        %v3320 = vsub.f32 %v3256, %v3296
        %v3321 = vsub.f32 %v3257, %v3299
        %v3322 = vsub.f32 %v3258, %v3302
        %v3323 = vsub.f32 %v3259, %v3305
        %v3324 = vsub.f32 %v3260, %v3308
        %v3325 = vmul.f32 %v3309, 1.442695
        %v3326 = vpow.pop %v3325
        %v3327 = vmul.f32 %v3310, 1.442695
        %v3328 = vpow.pop %v3327
        %v3329 = vmul.f32 %v3311, 1.442695
        %v3330 = vpow.pop %v3329
        %v3331 = vmul.f32 %v3312, 1.442695
        %v3332 = vpow.pop %v3331
        %v3333 = vmul.f32 %v3313, 1.442695
        %v3334 = vpow.pop %v3333
        %v3335 = vmul.f32 %v3314, 1.442695
        %v3336 = vpow.pop %v3335
        %v3337 = vmul.f32 %v3315, 1.442695
        %v3338 = vpow.pop %v3337
        %v3339 = vmul.f32 %v3316, 1.442695
        %v3340 = vpow.pop %v3339
        %v3341 = vmul.f32 %v3317, 1.442695
        %v3342 = vpow.pop %v3341
        %v3343 = vmul.f32 %v3318, 1.442695
        %v3344 = vpow.pop %v3343
        %v3345 = vmul.f32 %v3319, 1.442695
        %v3346 = vpow.pop %v3345
        %v3347 = vmul.f32 %v3320, 1.442695
        %v3348 = vpow.pop %v3347
        %v3349 = vmul.f32 %v3321, 1.442695
        %v3350 = vpow.pop %v3349
        %v3351 = vmul.f32 %v3322, 1.442695
        %v3352 = vpow.pop %v3351
        %v3353 = vmul.f32 %v3323, 1.442695
        %v3354 = vpow.pop %v3353
        %v3355 = vmul.f32 %v3324, 1.442695
        %v3356 = vpow.pop %v3355
        %v3357 = vsel %vm1379, %v3326, 0.0
        %3358 = vadd.xlane.f32.xlu0 %v3357
        %v3359 = vpop.xlane.xlu0 %3358
        %v3360 = vsel %vm1379, %v3328, 0.0
        %3361 = vadd.xlane.f32.xlu0 %v3360
        %v3362 = vpop.xlane.xlu0 %3361
        %v3363 = vsel %vm1379, %v3330, 0.0
        %3364 = vadd.xlane.f32.xlu0 %v3363
        %v3365 = vpop.xlane.xlu0 %3364
        %v3366 = vsel %vm1379, %v3332, 0.0
        %3367 = vadd.xlane.f32.xlu0 %v3366
        %v3368 = vpop.xlane.xlu0 %3367
        %v3369 = vsel %vm1379, %v3334, 0.0
        %3370 = vadd.xlane.f32.xlu0 %v3369
        %v3371 = vpop.xlane.xlu0 %3370
        %v3372 = vsel %vm1379, %v3336, 0.0
        %3373 = vadd.xlane.f32.xlu0 %v3372
        %v3374 = vpop.xlane.xlu0 %3373
        %v3375 = vsel %vm1379, %v3338, 0.0
        %3376 = vadd.xlane.f32.xlu0 %v3375
        %v3377 = vpop.xlane.xlu0 %3376
        %v3378 = vsel %vm1379, %v3340, 0.0
        %3379 = vadd.xlane.f32.xlu0 %v3378
        %v3380 = vpop.xlane.xlu0 %3379
        %v3381 = vsel %vm1379, %v3342, 0.0
        %3382 = vadd.xlane.f32.xlu0 %v3381
        %v3383 = vpop.xlane.xlu0 %3382
        %v3384 = vsel %vm1379, %v3344, 0.0
        %3385 = vadd.xlane.f32.xlu0 %v3384
        %v3386 = vpop.xlane.xlu0 %3385
        %v3387 = vsel %vm1379, %v3346, 0.0
        %3388 = vadd.xlane.f32.xlu0 %v3387
        %v3389 = vpop.xlane.xlu0 %3388
        %v3390 = vsel %vm1379, %v3348, 0.0
        %3391 = vadd.xlane.f32.xlu0 %v3390
        %v3392 = vpop.xlane.xlu0 %3391
        %v3393 = vsel %vm1379, %v3350, 0.0
        %3394 = vadd.xlane.f32.xlu0 %v3393
        %v3395 = vpop.xlane.xlu0 %3394
        %v3396 = vsel %vm1379, %v3352, 0.0
        %3397 = vadd.xlane.f32.xlu0 %v3396
        %v3398 = vpop.xlane.xlu0 %3397
        %v3399 = vsel %vm1379, %v3354, 0.0
        %3400 = vadd.xlane.f32.xlu0 %v3399
        %v3401 = vpop.xlane.xlu0 %3400
        %v3402 = vsel %vm1379, %v3356, 0.0
        %3403 = vadd.xlane.f32.xlu0 %v3402
        %v3404 = vpop.xlane.xlu0 %3403
        %v3405 = vrcp.pop %v3359
        %v3406 = vrcp.pop %v3362
        %v3407 = vrcp.pop %v3365
        %v3408 = vrcp.pop %v3368
        %v3409 = vrcp.pop %v3371
        %v3410 = vrcp.pop %v3374
        %v3411 = vrcp.pop %v3377
        %v3412 = vrcp.pop %v3380
        %v3413 = vrcp.pop %v3383
        %v3414 = vrcp.pop %v3386
        %v3415 = vrcp.pop %v3389
        %v3416 = vrcp.pop %v3392
        %v3417 = vrcp.pop %v3395
        %v3418 = vrcp.pop %v3398
        %v3419 = vrcp.pop %v3401
        %v3420 = vrcp.pop %v3404
        %v3421 = vmul.f32 %v3326, %v3405
        %v3422 = vmul.f32 %v3328, %v3406
        %v3423 = vmul.f32 %v3330, %v3407
        %v3424 = vmul.f32 %v3332, %v3408
        %v3425 = vmul.f32 %v3334, %v3409
        %v3426 = vmul.f32 %v3336, %v3410
        %v3427 = vmul.f32 %v3338, %v3411
        %v3428 = vmul.f32 %v3340, %v3412
        %v3429 = vmul.f32 %v3342, %v3413
        %v3430 = vmul.f32 %v3344, %v3414
        %v3431 = vmul.f32 %v3346, %v3415
        %v3432 = vmul.f32 %v3348, %v3416
        %v3433 = vmul.f32 %v3350, %v3417
        %v3434 = vmul.f32 %v3352, %v3418
        %v3435 = vmul.f32 %v3354, %v3419
        %v3436 = vmul.f32 %v3356, %v3420
        %v3437 = vpack.c.bf16 %v3422, %v3421
        %v3438 = vpack.c.bf16 %v3424, %v3423
        %v3439 = vpack.c.bf16 %v3426, %v3425
        %v3440 = vpack.c.bf16 %v3428, %v3427
        %v3441 = vpack.c.bf16 %v3430, %v3429
        %v3442 = vpack.c.bf16 %v3432, %v3431
        %v3443 = vpack.c.bf16 %v3434, %v3433
        %v3444 = vpack.c.bf16 %v3436, %v3435
        %3445 = vrot.lane.b32.xlu0 %v3035, 64
        %v3446 = vpop.permute.xlu0 %3445
        %3447 = vrot.lane.b32.xlu0 %v3036, 64
        %v3448 = vpop.permute.xlu0 %3447
        %3449 = vrot.lane.b32.xlu0 %v3037, 64
        %v3450 = vpop.permute.xlu0 %3449
        %3451 = vrot.lane.b32.xlu0 %v3038, 64
        %v3452 = vpop.permute.xlu0 %3451
        %v3458 = vsel %vm1379, %v3437, 0
        %v3461 = vsel %vm1379, %v3438, 0
        %v3464 = vsel %vm1379, %v3439, 0
        %v3467 = vsel %vm1379, %v3440, 0
        %3469 = vmatprep.subr.bf16.mxu0 0
        %3470 = vmatpush1.bf16.msra.mxu0 0
        %3471 = vmatprep.subr.bf16.mxu0 0
        %3472 = vmatpush1.bf16.msra.mxu0 0
        %3473 = vmatprep.subr.bf16.mxu0 0
        %3474 = vmatpush1.bf16.msra.mxu0 0
        %3475 = vmatprep.subr.bf16.mxu0 0
        %3476 = vmatpush1.bf16.msra.mxu0 0
        %3477 = vmatprep.subr.bf16.mxu0 0
        %3478 = vmatpush1.bf16.msra.mxu0 %v3452
        %3479 = vmatprep.subr.bf16.mxu0 0
        %3480 = vmatpush1.bf16.msra.mxu0 %v3450
        %3481 = vmatprep.subr.bf16.mxu0 0
        %3482 = vmatpush1.bf16.msra.mxu0 %v3448
        %3483 = vmatprep.subr.bf16.mxu0 0
        %3484 = vmatpush1.bf16.msra.mxu0 %v3446
        %3485 = vmatprep.subr.bf16.mxu0 0
        %3486 = vmatpush2.bf16.msra.mxu0 0
        %3487 = vmatprep.subr.bf16.mxu0 0
        %3488 = vmatpush2.bf16.msra.mxu0 0
        %3489 = vmatprep.subr.bf16.mxu0 0
        %3490 = vmatpush2.bf16.msra.mxu0 0
        %3491 = vmatprep.subr.bf16.mxu0 0
        %3492 = vmatpush2.bf16.msra.mxu0 0
        %3493 = vmatprep.subr.bf16.mxu0 0
        %3494 = vmatpush2.bf16.msra.mxu0 0
        %3495 = vmatprep.subr.bf16.mxu0 0
        %3496 = vmatpush2.bf16.msra.mxu0 0
        %3497 = vmatprep.subr.bf16.mxu0 0
        %3498 = vmatpush2.bf16.msra.mxu0 0
        %3499 = vmatprep.subr.bf16.mxu0 0
        %3500 = vmatpush2.bf16.msra.mxu0 0
        %3501 = vmatprep.mubr.bf16.mxu0 0
        %3502 = vmatmul.mubr.bf16.gmra.mxu0 %v3458
        %v3503 = vpop.f32.mrf.mxu0
        %v3504 = vadd.f32 0.0, %v3503
        %v3505 = vpop.f32.mrf.mxu0
        %v3506 = vpop.f32.mrf.mxu0
        %v3507 = vadd.f32 0.0, %v3506
        %v3508 = vpop.f32.mrf.mxu0
        %3509 = vmatprep.mubr.bf16.mxu0 0
        %3510 = vmatmul.mubr.bf16.gmra.mxu0 %v3461
        %v3511 = vpop.f32.mrf.mxu0
        %v3512 = vadd.f32 0.0, %v3511
        %v3513 = vpop.f32.mrf.mxu0
        %v3514 = vpop.f32.mrf.mxu0
        %v3515 = vadd.f32 0.0, %v3514
        %v3516 = vpop.f32.mrf.mxu0
        %3517 = vmatprep.mubr.bf16.mxu0 0
        %3518 = vmatmul.mubr.bf16.gmra.mxu0 %v3464
        %v3519 = vpop.f32.mrf.mxu0
        %v3520 = vadd.f32 0.0, %v3519
        %v3521 = vpop.f32.mrf.mxu0
        %v3522 = vpop.f32.mrf.mxu0
        %v3523 = vadd.f32 0.0, %v3522
        %v3524 = vpop.f32.mrf.mxu0
        %3525 = vmatprep.mubr.bf16.mxu0 0
        %3526 = vmatmul.mubr.bf16.gmra.mxu0 %v3467
        %v3527 = vpop.f32.mrf.mxu0
        %v3528 = vadd.f32 0.0, %v3527
        %v3529 = vpop.f32.mrf.mxu0
        %v3530 = vpop.f32.mrf.mxu0
        %v3531 = vadd.f32 0.0, %v3530
        %v3532 = vpop.f32.mrf.mxu0
        %3533 = vdwg.mxu0
        %3534 = vrot.lane.b32.xlu0 %v3039, 64
        %v3535 = vpop.permute.xlu0 %3534
        %3536 = vrot.lane.b32.xlu0 %v3040, 64
        %v3537 = vpop.permute.xlu0 %3536
        %3538 = vrot.lane.b32.xlu0 %v3041, 64
        %v3539 = vpop.permute.xlu0 %3538
        %3540 = vrot.lane.b32.xlu0 %v3042, 64
        %v3541 = vpop.permute.xlu0 %3540
        %v3547 = vsel %vm1379, %v3441, 0
        %v3550 = vsel %vm1379, %v3442, 0
        %v3553 = vsel %vm1379, %v3443, 0
        %v3556 = vsel %vm1379, %v3444, 0
        %3558 = vmatprep.subr.bf16.mxu0 0
        %3559 = vmatpush1.bf16.msra.mxu0 0
        %3560 = vmatprep.subr.bf16.mxu0 0
        %3561 = vmatpush1.bf16.msra.mxu0 0
        %3562 = vmatprep.subr.bf16.mxu0 0
        %3563 = vmatpush1.bf16.msra.mxu0 0
        %3564 = vmatprep.subr.bf16.mxu0 0
        %3565 = vmatpush1.bf16.msra.mxu0 0
        %3566 = vmatprep.subr.bf16.mxu0 0
        %3567 = vmatpush1.bf16.msra.mxu0 %v3541
        %3568 = vmatprep.subr.bf16.mxu0 0
        %3569 = vmatpush1.bf16.msra.mxu0 %v3539
        %3570 = vmatprep.subr.bf16.mxu0 0
        %3571 = vmatpush1.bf16.msra.mxu0 %v3537
        %3572 = vmatprep.subr.bf16.mxu0 0
        %3573 = vmatpush1.bf16.msra.mxu0 %v3535
        %3574 = vmatprep.subr.bf16.mxu0 0
        %3575 = vmatpush2.bf16.msra.mxu0 0
        %3576 = vmatprep.subr.bf16.mxu0 0
        %3577 = vmatpush2.bf16.msra.mxu0 0
        %3578 = vmatprep.subr.bf16.mxu0 0
        %3579 = vmatpush2.bf16.msra.mxu0 0
        %3580 = vmatprep.subr.bf16.mxu0 0
        %3581 = vmatpush2.bf16.msra.mxu0 0
        %3582 = vmatprep.subr.bf16.mxu0 0
        %3583 = vmatpush2.bf16.msra.mxu0 0
        %3584 = vmatprep.subr.bf16.mxu0 0
        %3585 = vmatpush2.bf16.msra.mxu0 0
        %3586 = vmatprep.subr.bf16.mxu0 0
        %3587 = vmatpush2.bf16.msra.mxu0 0
        %3588 = vmatprep.subr.bf16.mxu0 0
        %3589 = vmatpush2.bf16.msra.mxu0 0
        %3590 = vmatprep.mubr.bf16.mxu0 0
        %3591 = vmatmul.mubr.bf16.gmra.mxu0 %v3547
        %v3592 = vpop.f32.mrf.mxu0
        %v3593 = vadd.f32 0.0, %v3592
        %v3594 = vpop.f32.mrf.mxu0
        %v3595 = vpop.f32.mrf.mxu0
        %v3596 = vadd.f32 0.0, %v3595
        %v3597 = vpop.f32.mrf.mxu0
        %3598 = vmatprep.mubr.bf16.mxu0 0
        %3599 = vmatmul.mubr.bf16.gmra.mxu0 %v3550
        %v3600 = vpop.f32.mrf.mxu0
        %v3601 = vadd.f32 0.0, %v3600
        %v3602 = vpop.f32.mrf.mxu0
        %v3603 = vpop.f32.mrf.mxu0
        %v3604 = vadd.f32 0.0, %v3603
        %v3605 = vpop.f32.mrf.mxu0
        %3606 = vmatprep.mubr.bf16.mxu0 0
        %3607 = vmatmul.mubr.bf16.gmra.mxu0 %v3553
        %v3608 = vpop.f32.mrf.mxu0
        %v3609 = vadd.f32 0.0, %v3608
        %v3610 = vpop.f32.mrf.mxu0
        %v3611 = vpop.f32.mrf.mxu0
        %v3612 = vadd.f32 0.0, %v3611
        %v3613 = vpop.f32.mrf.mxu0
        %3614 = vmatprep.mubr.bf16.mxu0 0
        %3615 = vmatmul.mubr.bf16.gmra.mxu0 %v3556
        %v3616 = vpop.f32.mrf.mxu0
        %v3617 = vadd.f32 0.0, %v3616
        %v3618 = vpop.f32.mrf.mxu0
        %v3619 = vpop.f32.mrf.mxu0
        %v3620 = vadd.f32 0.0, %v3619
        %v3621 = vpop.f32.mrf.mxu0
        %3622 = vdwg.mxu0
        %v3623 = vpack.c.bf16 %v3507, %v3504
        %v3624 = vpack.c.bf16 %v3515, %v3512
        %v3625 = vpack.c.bf16 %v3523, %v3520
        %v3626 = vpack.c.bf16 %v3531, %v3528
        %v3627 = vpack.c.bf16 %v3596, %v3593
        %v3628 = vpack.c.bf16 %v3604, %v3601
        %v3629 = vpack.c.bf16 %v3612, %v3609
        %v3630 = vpack.c.bf16 %v3620, %v3617
        %3631 = vrot.lane.b32.xlu0 %v3035, 112
        %v3632 = vpop.permute.xlu0 %3631
        %3633 = vrot.lane.b32.xlu0 %v3036, 112
        %v3634 = vpop.permute.xlu0 %3633
        %3635 = vrot.lane.b32.xlu0 %v3037, 112
        %v3636 = vpop.permute.xlu0 %3635
        %3637 = vrot.lane.b32.xlu0 %v3038, 112
        %v3638 = vpop.permute.xlu0 %3637
        %3639 = vrot.lane.b32.xlu0 %v3035, 80
        %v3640 = vpop.permute.xlu0 %3639
        %3641 = vrot.lane.b32.xlu0 %v3036, 80
        %v3642 = vpop.permute.xlu0 %3641
        %3643 = vrot.lane.b32.xlu0 %v3037, 80
        %v3644 = vpop.permute.xlu0 %3643
        %3645 = vrot.lane.b32.xlu0 %v3038, 80
        %v3646 = vpop.permute.xlu0 %3645
        %v3648 = vsel %vm1172, %v3632, 0
        %v3651 = vsel %vm1172, %v3634, 0
        %v3654 = vsel %vm1172, %v3636, 0
        %v3657 = vsel %vm1172, %v3638, 0
        %v3660 = vsel %vm1172, %v3640, 0
        %v3663 = vsel %vm1172, %v3642, 0
        %v3666 = vsel %vm1172, %v3644, 0
        %v3669 = vsel %vm1172, %v3646, 0
        %3671 = vmatprep.subr.bf16.mxu0 0
        %3672 = vmatpush1.bf16.xpose.msra.mxu0 0
        %3673 = vmatprep.subr.bf16.mxu0 0
        %3674 = vmatpush1.bf16.xpose.msra.mxu0 0
        %3675 = vmatprep.subr.bf16.mxu0 0
        %3676 = vmatpush1.bf16.xpose.msra.mxu0 0
        %3677 = vmatprep.subr.bf16.mxu0 0
        %3678 = vmatpush1.bf16.xpose.msra.mxu0 0
        %3679 = vmatprep.subr.bf16.mxu0 0
        %3680 = vmatpush1.bf16.xpose.msra.mxu0 %v3669
        %3681 = vmatprep.subr.bf16.mxu0 0
        %3682 = vmatpush1.bf16.xpose.msra.mxu0 %v3666
        %3683 = vmatprep.subr.bf16.mxu0 0
        %3684 = vmatpush1.bf16.xpose.msra.mxu0 %v3663
        %3685 = vmatprep.subr.bf16.mxu0 0
        %3686 = vmatpush1.bf16.xpose.msra.mxu0 %v3660
        %3687 = vmatprep.subr.bf16.mxu0 0
        %3688 = vmatpush2.bf16.xpose.msra.mxu0 0
        %3689 = vmatprep.subr.bf16.mxu0 0
        %3690 = vmatpush2.bf16.xpose.msra.mxu0 0
        %3691 = vmatprep.subr.bf16.mxu0 0
        %3692 = vmatpush2.bf16.xpose.msra.mxu0 0
        %3693 = vmatprep.subr.bf16.mxu0 0
        %3694 = vmatpush2.bf16.xpose.msra.mxu0 0
        %3695 = vmatprep.subr.bf16.mxu0 0
        %3696 = vmatpush2.bf16.xpose.msra.mxu0 0
        %3697 = vmatprep.subr.bf16.mxu0 0
        %3698 = vmatpush2.bf16.xpose.msra.mxu0 0
        %3699 = vmatprep.subr.bf16.mxu0 0
        %3700 = vmatpush2.bf16.xpose.msra.mxu0 0
        %3701 = vmatprep.subr.bf16.mxu0 0
        %3702 = vmatpush2.bf16.xpose.msra.mxu0 0
        %3703 = vmatprep.mubr.bf16.mxu0 0
        %3704 = vmatmul.mubr.bf16.gmra.mxu0 %v3648
        %v3705 = vpop.f32.mrf.mxu0
        %v3706 = vadd.f32 0.0, %v3705
        %v3707 = vpop.f32.mrf.mxu0
        %v3708 = vpop.f32.mrf.mxu0
        %v3709 = vadd.f32 0.0, %v3708
        %v3710 = vpop.f32.mrf.mxu0
        %3711 = vmatprep.mubr.bf16.mxu0 0
        %3712 = vmatmul.mubr.bf16.gmra.mxu0 %v3651
        %v3713 = vpop.f32.mrf.mxu0
        %v3714 = vadd.f32 0.0, %v3713
        %v3715 = vpop.f32.mrf.mxu0
        %v3716 = vpop.f32.mrf.mxu0
        %v3717 = vadd.f32 0.0, %v3716
        %v3718 = vpop.f32.mrf.mxu0
        %3719 = vmatprep.mubr.bf16.mxu0 0
        %3720 = vmatmul.mubr.bf16.gmra.mxu0 %v3654
        %v3721 = vpop.f32.mrf.mxu0
        %v3722 = vadd.f32 0.0, %v3721
        %v3723 = vpop.f32.mrf.mxu0
        %v3724 = vpop.f32.mrf.mxu0
        %v3725 = vadd.f32 0.0, %v3724
        %v3726 = vpop.f32.mrf.mxu0
        %3727 = vmatprep.mubr.bf16.mxu0 0
        %3728 = vmatmul.mubr.bf16.gmra.mxu0 %v3657
        %v3729 = vpop.f32.mrf.mxu0
        %v3730 = vadd.f32 0.0, %v3729
        %v3731 = vpop.f32.mrf.mxu0
        %v3732 = vpop.f32.mrf.mxu0
        %v3733 = vadd.f32 0.0, %v3732
        %v3734 = vpop.f32.mrf.mxu0
        %3735 = vdwg.mxu0
        %3736 = vrot.lane.b32.xlu0 %v3039, 112
        %v3737 = vpop.permute.xlu0 %3736
        %3738 = vrot.lane.b32.xlu0 %v3040, 112
        %v3739 = vpop.permute.xlu0 %3738
        %3740 = vrot.lane.b32.xlu0 %v3041, 112
        %v3741 = vpop.permute.xlu0 %3740
        %3742 = vrot.lane.b32.xlu0 %v3042, 112
        %v3743 = vpop.permute.xlu0 %3742
        %3744 = vrot.lane.b32.xlu0 %v3039, 80
        %v3745 = vpop.permute.xlu0 %3744
        %3746 = vrot.lane.b32.xlu0 %v3040, 80
        %v3747 = vpop.permute.xlu0 %3746
        %3748 = vrot.lane.b32.xlu0 %v3041, 80
        %v3749 = vpop.permute.xlu0 %3748
        %3750 = vrot.lane.b32.xlu0 %v3042, 80
        %v3751 = vpop.permute.xlu0 %3750
        %v3753 = vsel %vm1172, %v3737, 0
        %v3756 = vsel %vm1172, %v3739, 0
        %v3759 = vsel %vm1172, %v3741, 0
        %v3762 = vsel %vm1172, %v3743, 0
        %v3765 = vsel %vm1172, %v3745, 0
        %v3768 = vsel %vm1172, %v3747, 0
        %v3771 = vsel %vm1172, %v3749, 0
        %v3774 = vsel %vm1172, %v3751, 0
        %3776 = vmatprep.subr.bf16.mxu0 0
        %3777 = vmatpush1.bf16.xpose.msra.mxu0 0
        %3778 = vmatprep.subr.bf16.mxu0 0
        %3779 = vmatpush1.bf16.xpose.msra.mxu0 0
        %3780 = vmatprep.subr.bf16.mxu0 0
        %3781 = vmatpush1.bf16.xpose.msra.mxu0 0
        %3782 = vmatprep.subr.bf16.mxu0 0
        %3783 = vmatpush1.bf16.xpose.msra.mxu0 0
        %3784 = vmatprep.subr.bf16.mxu0 0
        %3785 = vmatpush1.bf16.xpose.msra.mxu0 %v3774
        %3786 = vmatprep.subr.bf16.mxu0 0
        %3787 = vmatpush1.bf16.xpose.msra.mxu0 %v3771
        %3788 = vmatprep.subr.bf16.mxu0 0
        %3789 = vmatpush1.bf16.xpose.msra.mxu0 %v3768
        %3790 = vmatprep.subr.bf16.mxu0 0
        %3791 = vmatpush1.bf16.xpose.msra.mxu0 %v3765
        %3792 = vmatprep.subr.bf16.mxu0 0
        %3793 = vmatpush2.bf16.xpose.msra.mxu0 0
        %3794 = vmatprep.subr.bf16.mxu0 0
        %3795 = vmatpush2.bf16.xpose.msra.mxu0 0
        %3796 = vmatprep.subr.bf16.mxu0 0
        %3797 = vmatpush2.bf16.xpose.msra.mxu0 0
        %3798 = vmatprep.subr.bf16.mxu0 0
        %3799 = vmatpush2.bf16.xpose.msra.mxu0 0
        %3800 = vmatprep.subr.bf16.mxu0 0
        %3801 = vmatpush2.bf16.xpose.msra.mxu0 0
        %3802 = vmatprep.subr.bf16.mxu0 0
        %3803 = vmatpush2.bf16.xpose.msra.mxu0 0
        %3804 = vmatprep.subr.bf16.mxu0 0
        %3805 = vmatpush2.bf16.xpose.msra.mxu0 0
        %3806 = vmatprep.subr.bf16.mxu0 0
        %3807 = vmatpush2.bf16.xpose.msra.mxu0 0
        %3808 = vmatprep.mubr.bf16.mxu0 0
        %3809 = vmatmul.mubr.bf16.gmra.mxu0 %v3753
        %v3810 = vpop.f32.mrf.mxu0
        %v3811 = vadd.f32 0.0, %v3810
        %v3812 = vpop.f32.mrf.mxu0
        %v3813 = vpop.f32.mrf.mxu0
        %v3814 = vadd.f32 0.0, %v3813
        %v3815 = vpop.f32.mrf.mxu0
        %3816 = vmatprep.mubr.bf16.mxu0 0
        %3817 = vmatmul.mubr.bf16.gmra.mxu0 %v3756
        %v3818 = vpop.f32.mrf.mxu0
        %v3819 = vadd.f32 0.0, %v3818
        %v3820 = vpop.f32.mrf.mxu0
        %v3821 = vpop.f32.mrf.mxu0
        %v3822 = vadd.f32 0.0, %v3821
        %v3823 = vpop.f32.mrf.mxu0
        %3824 = vmatprep.mubr.bf16.mxu0 0
        %3825 = vmatmul.mubr.bf16.gmra.mxu0 %v3759
        %v3826 = vpop.f32.mrf.mxu0
        %v3827 = vadd.f32 0.0, %v3826
        %v3828 = vpop.f32.mrf.mxu0
        %v3829 = vpop.f32.mrf.mxu0
        %v3830 = vadd.f32 0.0, %v3829
        %v3831 = vpop.f32.mrf.mxu0
        %3832 = vmatprep.mubr.bf16.mxu0 0
        %3833 = vmatmul.mubr.bf16.gmra.mxu0 %v3762
        %v3834 = vpop.f32.mrf.mxu0
        %v3835 = vadd.f32 0.0, %v3834
        %v3836 = vpop.f32.mrf.mxu0
        %v3837 = vpop.f32.mrf.mxu0
        %v3838 = vadd.f32 0.0, %v3837
        %v3839 = vpop.f32.mrf.mxu0
        %3840 = vdwg.mxu0
        %v3841 = vmul.f32 %v3706, 0.25
        %v3842 = vmul.f32 %v3709, 0.25
        %v3843 = vmul.f32 %v3714, 0.25
        %v3844 = vmul.f32 %v3717, 0.25
        %v3845 = vmul.f32 %v3722, 0.25
        %v3846 = vmul.f32 %v3725, 0.25
        %v3847 = vmul.f32 %v3730, 0.25
        %v3848 = vmul.f32 %v3733, 0.25
        %v3849 = vmul.f32 %v3811, 0.25
        %v3850 = vmul.f32 %v3814, 0.25
        %v3851 = vmul.f32 %v3819, 0.25
        %v3852 = vmul.f32 %v3822, 0.25
        %v3853 = vmul.f32 %v3827, 0.25
        %v3854 = vmul.f32 %v3830, 0.25
        %v3855 = vmul.f32 %v3835, 0.25
        %v3856 = vmul.f32 %v3838, 0.25
        %v3857 = vsel %vm1379, %v3841, -inf
        %3858 = vmax.xlane.f32.xlu0 %v3857
        %v3859 = vpop.xlane.xlu0 %3858
        %v3860 = vsel %vm1379, %v3842, -inf
        %3861 = vmax.xlane.f32.xlu0 %v3860
        %v3862 = vpop.xlane.xlu0 %3861
        %v3863 = vsel %vm1379, %v3843, -inf
        %3864 = vmax.xlane.f32.xlu0 %v3863
        %v3865 = vpop.xlane.xlu0 %3864
        %v3866 = vsel %vm1379, %v3844, -inf
        %3867 = vmax.xlane.f32.xlu0 %v3866
        %v3868 = vpop.xlane.xlu0 %3867
        %v3869 = vsel %vm1379, %v3845, -inf
        %3870 = vmax.xlane.f32.xlu0 %v3869
        %v3871 = vpop.xlane.xlu0 %3870
        %v3872 = vsel %vm1379, %v3846, -inf
        %3873 = vmax.xlane.f32.xlu0 %v3872
        %v3874 = vpop.xlane.xlu0 %3873
        %v3875 = vsel %vm1379, %v3847, -inf
        %3876 = vmax.xlane.f32.xlu0 %v3875
        %v3877 = vpop.xlane.xlu0 %3876
        %v3878 = vsel %vm1379, %v3848, -inf
        %3879 = vmax.xlane.f32.xlu0 %v3878
        %v3880 = vpop.xlane.xlu0 %3879
        %v3881 = vsel %vm1379, %v3849, -inf
        %3882 = vmax.xlane.f32.xlu0 %v3881
        %v3883 = vpop.xlane.xlu0 %3882
        %v3884 = vsel %vm1379, %v3850, -inf
        %3885 = vmax.xlane.f32.xlu0 %v3884
        %v3886 = vpop.xlane.xlu0 %3885
        %v3887 = vsel %vm1379, %v3851, -inf
        %3888 = vmax.xlane.f32.xlu0 %v3887
        %v3889 = vpop.xlane.xlu0 %3888
        %v3890 = vsel %vm1379, %v3852, -inf
        %3891 = vmax.xlane.f32.xlu0 %v3890
        %v3892 = vpop.xlane.xlu0 %3891
        %v3893 = vsel %vm1379, %v3853, -inf
        %3894 = vmax.xlane.f32.xlu0 %v3893
        %v3895 = vpop.xlane.xlu0 %3894
        %v3896 = vsel %vm1379, %v3854, -inf
        %3897 = vmax.xlane.f32.xlu0 %v3896
        %v3898 = vpop.xlane.xlu0 %3897
        %v3899 = vsel %vm1379, %v3855, -inf
        %3900 = vmax.xlane.f32.xlu0 %v3899
        %v3901 = vpop.xlane.xlu0 %3900
        %v3902 = vsel %vm1379, %v3856, -inf
        %3903 = vmax.xlane.f32.xlu0 %v3902
        %v3904 = vpop.xlane.xlu0 %3903
        %v3905 = vsub.f32 %v3841, %v3859
        %v3906 = vsub.f32 %v3842, %v3862
        %v3907 = vsub.f32 %v3843, %v3865
        %v3908 = vsub.f32 %v3844, %v3868
        %v3909 = vsub.f32 %v3845, %v3871
        %v3910 = vsub.f32 %v3846, %v3874
        %v3911 = vsub.f32 %v3847, %v3877
        %v3912 = vsub.f32 %v3848, %v3880
        %v3913 = vsub.f32 %v3849, %v3883
        %v3914 = vsub.f32 %v3850, %v3886
        %v3915 = vsub.f32 %v3851, %v3889
        %v3916 = vsub.f32 %v3852, %v3892
        %v3917 = vsub.f32 %v3853, %v3895
        %v3918 = vsub.f32 %v3854, %v3898
        %v3919 = vsub.f32 %v3855, %v3901
        %v3920 = vsub.f32 %v3856, %v3904
        %v3921 = vmul.f32 %v3905, 1.442695
        %v3922 = vpow.pop %v3921
        %v3923 = vmul.f32 %v3906, 1.442695
        %v3924 = vpow.pop %v3923
        %v3925 = vmul.f32 %v3907, 1.442695
        %v3926 = vpow.pop %v3925
        %v3927 = vmul.f32 %v3908, 1.442695
        %v3928 = vpow.pop %v3927
        %v3929 = vmul.f32 %v3909, 1.442695
        %v3930 = vpow.pop %v3929
        %v3931 = vmul.f32 %v3910, 1.442695
        %v3932 = vpow.pop %v3931
        %v3933 = vmul.f32 %v3911, 1.442695
        %v3934 = vpow.pop %v3933
        %v3935 = vmul.f32 %v3912, 1.442695
        %v3936 = vpow.pop %v3935
        %v3937 = vmul.f32 %v3913, 1.442695
        %v3938 = vpow.pop %v3937
        %v3939 = vmul.f32 %v3914, 1.442695
        %v3940 = vpow.pop %v3939
        %v3941 = vmul.f32 %v3915, 1.442695
        %v3942 = vpow.pop %v3941
        %v3943 = vmul.f32 %v3916, 1.442695
        %v3944 = vpow.pop %v3943
        %v3945 = vmul.f32 %v3917, 1.442695
        %v3946 = vpow.pop %v3945
        %v3947 = vmul.f32 %v3918, 1.442695
        %v3948 = vpow.pop %v3947
        %v3949 = vmul.f32 %v3919, 1.442695
        %v3950 = vpow.pop %v3949
        %v3951 = vmul.f32 %v3920, 1.442695
        %v3952 = vpow.pop %v3951
        %v3953 = vsel %vm1379, %v3922, 0.0
        %3954 = vadd.xlane.f32.xlu0 %v3953
        %v3955 = vpop.xlane.xlu0 %3954
        %v3956 = vsel %vm1379, %v3924, 0.0
        %3957 = vadd.xlane.f32.xlu0 %v3956
        %v3958 = vpop.xlane.xlu0 %3957
        %v3959 = vsel %vm1379, %v3926, 0.0
        %3960 = vadd.xlane.f32.xlu0 %v3959
        %v3961 = vpop.xlane.xlu0 %3960
        %v3962 = vsel %vm1379, %v3928, 0.0
        %3963 = vadd.xlane.f32.xlu0 %v3962
        %v3964 = vpop.xlane.xlu0 %3963
        %v3965 = vsel %vm1379, %v3930, 0.0
        %3966 = vadd.xlane.f32.xlu0 %v3965
        %v3967 = vpop.xlane.xlu0 %3966
        %v3968 = vsel %vm1379, %v3932, 0.0
        %3969 = vadd.xlane.f32.xlu0 %v3968
        %v3970 = vpop.xlane.xlu0 %3969
        %v3971 = vsel %vm1379, %v3934, 0.0
        %3972 = vadd.xlane.f32.xlu0 %v3971
        %v3973 = vpop.xlane.xlu0 %3972
        %v3974 = vsel %vm1379, %v3936, 0.0
        %3975 = vadd.xlane.f32.xlu0 %v3974
        %v3976 = vpop.xlane.xlu0 %3975
        %v3977 = vsel %vm1379, %v3938, 0.0
        %3978 = vadd.xlane.f32.xlu0 %v3977
        %v3979 = vpop.xlane.xlu0 %3978
        %v3980 = vsel %vm1379, %v3940, 0.0
        %3981 = vadd.xlane.f32.xlu0 %v3980
        %v3982 = vpop.xlane.xlu0 %3981
        %v3983 = vsel %vm1379, %v3942, 0.0
        %3984 = vadd.xlane.f32.xlu0 %v3983
        %v3985 = vpop.xlane.xlu0 %3984
        %v3986 = vsel %vm1379, %v3944, 0.0
        %3987 = vadd.xlane.f32.xlu0 %v3986
        %v3988 = vpop.xlane.xlu0 %3987
        %v3989 = vsel %vm1379, %v3946, 0.0
        %3990 = vadd.xlane.f32.xlu0 %v3989
        %v3991 = vpop.xlane.xlu0 %3990
        %v3992 = vsel %vm1379, %v3948, 0.0
        %3993 = vadd.xlane.f32.xlu0 %v3992
        %v3994 = vpop.xlane.xlu0 %3993
        %v3995 = vsel %vm1379, %v3950, 0.0
        %3996 = vadd.xlane.f32.xlu0 %v3995
        %v3997 = vpop.xlane.xlu0 %3996
        %v3998 = vsel %vm1379, %v3952, 0.0
        %3999 = vadd.xlane.f32.xlu0 %v3998
        %v4000 = vpop.xlane.xlu0 %3999
        %v4001 = vrcp.pop %v3955
        %v4002 = vrcp.pop %v3958
        %v4003 = vrcp.pop %v3961
        %v4004 = vrcp.pop %v3964
        %v4005 = vrcp.pop %v3967
        %v4006 = vrcp.pop %v3970
        %v4007 = vrcp.pop %v3973
        %v4008 = vrcp.pop %v3976
        %v4009 = vrcp.pop %v3979
        %v4010 = vrcp.pop %v3982
        %v4011 = vrcp.pop %v3985
        %v4012 = vrcp.pop %v3988
        %v4013 = vrcp.pop %v3991
        %v4014 = vrcp.pop %v3994
        %v4015 = vrcp.pop %v3997
        %v4016 = vrcp.pop %v4000
        %v4017 = vmul.f32 %v3922, %v4001
        %v4018 = vmul.f32 %v3924, %v4002
        %v4019 = vmul.f32 %v3926, %v4003
        %v4020 = vmul.f32 %v3928, %v4004
        %v4021 = vmul.f32 %v3930, %v4005
        %v4022 = vmul.f32 %v3932, %v4006
        %v4023 = vmul.f32 %v3934, %v4007
        %v4024 = vmul.f32 %v3936, %v4008
        %v4025 = vmul.f32 %v3938, %v4009
        %v4026 = vmul.f32 %v3940, %v4010
        %v4027 = vmul.f32 %v3942, %v4011
        %v4028 = vmul.f32 %v3944, %v4012
        %v4029 = vmul.f32 %v3946, %v4013
        %v4030 = vmul.f32 %v3948, %v4014
        %v4031 = vmul.f32 %v3950, %v4015
        %v4032 = vmul.f32 %v3952, %v4016
        %v4033 = vpack.c.bf16 %v4018, %v4017
        %v4034 = vpack.c.bf16 %v4020, %v4019
        %v4035 = vpack.c.bf16 %v4022, %v4021
        %v4036 = vpack.c.bf16 %v4024, %v4023
        %v4037 = vpack.c.bf16 %v4026, %v4025
        %v4038 = vpack.c.bf16 %v4028, %v4027
        %v4039 = vpack.c.bf16 %v4030, %v4029
        %v4040 = vpack.c.bf16 %v4032, %v4031
        %4041 = vrot.lane.b32.xlu0 %v3035, 48
        %v4042 = vpop.permute.xlu0 %4041
        %4043 = vrot.lane.b32.xlu0 %v3036, 48
        %v4044 = vpop.permute.xlu0 %4043
        %4045 = vrot.lane.b32.xlu0 %v3037, 48
        %v4046 = vpop.permute.xlu0 %4045
        %4047 = vrot.lane.b32.xlu0 %v3038, 48
        %v4048 = vpop.permute.xlu0 %4047
        %v4054 = vsel %vm1379, %v4033, 0
        %v4057 = vsel %vm1379, %v4034, 0
        %v4060 = vsel %vm1379, %v4035, 0
        %v4063 = vsel %vm1379, %v4036, 0
        %4065 = vmatprep.subr.bf16.mxu0 0
        %4066 = vmatpush1.bf16.msra.mxu0 0
        %4067 = vmatprep.subr.bf16.mxu0 0
        %4068 = vmatpush1.bf16.msra.mxu0 0
        %4069 = vmatprep.subr.bf16.mxu0 0
        %4070 = vmatpush1.bf16.msra.mxu0 0
        %4071 = vmatprep.subr.bf16.mxu0 0
        %4072 = vmatpush1.bf16.msra.mxu0 0
        %4073 = vmatprep.subr.bf16.mxu0 0
        %4074 = vmatpush1.bf16.msra.mxu0 %v4048
        %4075 = vmatprep.subr.bf16.mxu0 0
        %4076 = vmatpush1.bf16.msra.mxu0 %v4046
        %4077 = vmatprep.subr.bf16.mxu0 0
        %4078 = vmatpush1.bf16.msra.mxu0 %v4044
        %4079 = vmatprep.subr.bf16.mxu0 0
        %4080 = vmatpush1.bf16.msra.mxu0 %v4042
        %4081 = vmatprep.subr.bf16.mxu0 0
        %4082 = vmatpush2.bf16.msra.mxu0 0
        %4083 = vmatprep.subr.bf16.mxu0 0
        %4084 = vmatpush2.bf16.msra.mxu0 0
        %4085 = vmatprep.subr.bf16.mxu0 0
        %4086 = vmatpush2.bf16.msra.mxu0 0
        %4087 = vmatprep.subr.bf16.mxu0 0
        %4088 = vmatpush2.bf16.msra.mxu0 0
        %4089 = vmatprep.subr.bf16.mxu0 0
        %4090 = vmatpush2.bf16.msra.mxu0 0
        %4091 = vmatprep.subr.bf16.mxu0 0
        %4092 = vmatpush2.bf16.msra.mxu0 0
        %4093 = vmatprep.subr.bf16.mxu0 0
        %4094 = vmatpush2.bf16.msra.mxu0 0
        %4095 = vmatprep.subr.bf16.mxu0 0
        %4096 = vmatpush2.bf16.msra.mxu0 0
        %4097 = vmatprep.mubr.bf16.mxu0 0
        %4098 = vmatmul.mubr.bf16.gmra.mxu0 %v4054
        %v4099 = vpop.f32.mrf.mxu0
        %v4100 = vadd.f32 0.0, %v4099
        %v4101 = vpop.f32.mrf.mxu0
        %v4102 = vpop.f32.mrf.mxu0
        %v4103 = vadd.f32 0.0, %v4102
        %v4104 = vpop.f32.mrf.mxu0
        %4105 = vmatprep.mubr.bf16.mxu0 0
        %4106 = vmatmul.mubr.bf16.gmra.mxu0 %v4057
        %v4107 = vpop.f32.mrf.mxu0
        %v4108 = vadd.f32 0.0, %v4107
        %v4109 = vpop.f32.mrf.mxu0
        %v4110 = vpop.f32.mrf.mxu0
        %v4111 = vadd.f32 0.0, %v4110
        %v4112 = vpop.f32.mrf.mxu0
        %4113 = vmatprep.mubr.bf16.mxu0 0
        %4114 = vmatmul.mubr.bf16.gmra.mxu0 %v4060
        %v4115 = vpop.f32.mrf.mxu0
        %v4116 = vadd.f32 0.0, %v4115
        %v4117 = vpop.f32.mrf.mxu0
        %v4118 = vpop.f32.mrf.mxu0
        %v4119 = vadd.f32 0.0, %v4118
        %v4120 = vpop.f32.mrf.mxu0
        %4121 = vmatprep.mubr.bf16.mxu0 0
        %4122 = vmatmul.mubr.bf16.gmra.mxu0 %v4063
        %v4123 = vpop.f32.mrf.mxu0
        %v4124 = vadd.f32 0.0, %v4123
        %v4125 = vpop.f32.mrf.mxu0
        %v4126 = vpop.f32.mrf.mxu0
        %v4127 = vadd.f32 0.0, %v4126
        %v4128 = vpop.f32.mrf.mxu0
        %4129 = vdwg.mxu0
        %4130 = vrot.lane.b32.xlu0 %v3039, 48
        %v4131 = vpop.permute.xlu0 %4130
        %4132 = vrot.lane.b32.xlu0 %v3040, 48
        %v4133 = vpop.permute.xlu0 %4132
        %4134 = vrot.lane.b32.xlu0 %v3041, 48
        %v4135 = vpop.permute.xlu0 %4134
        %4136 = vrot.lane.b32.xlu0 %v3042, 48
        %v4137 = vpop.permute.xlu0 %4136
        %v4143 = vsel %vm1379, %v4037, 0
        %v4146 = vsel %vm1379, %v4038, 0
        %v4149 = vsel %vm1379, %v4039, 0
        %v4152 = vsel %vm1379, %v4040, 0
        %4154 = vmatprep.subr.bf16.mxu0 0
        %4155 = vmatpush1.bf16.msra.mxu0 0
        %4156 = vmatprep.subr.bf16.mxu0 0
        %4157 = vmatpush1.bf16.msra.mxu0 0
        %4158 = vmatprep.subr.bf16.mxu0 0
        %4159 = vmatpush1.bf16.msra.mxu0 0
        %4160 = vmatprep.subr.bf16.mxu0 0
        %4161 = vmatpush1.bf16.msra.mxu0 0
        %4162 = vmatprep.subr.bf16.mxu0 0
        %4163 = vmatpush1.bf16.msra.mxu0 %v4137
        %4164 = vmatprep.subr.bf16.mxu0 0
        %4165 = vmatpush1.bf16.msra.mxu0 %v4135
        %4166 = vmatprep.subr.bf16.mxu0 0
        %4167 = vmatpush1.bf16.msra.mxu0 %v4133
        %4168 = vmatprep.subr.bf16.mxu0 0
        %4169 = vmatpush1.bf16.msra.mxu0 %v4131
        %4170 = vmatprep.subr.bf16.mxu0 0
        %4171 = vmatpush2.bf16.msra.mxu0 0
        %4172 = vmatprep.subr.bf16.mxu0 0
        %4173 = vmatpush2.bf16.msra.mxu0 0
        %4174 = vmatprep.subr.bf16.mxu0 0
        %4175 = vmatpush2.bf16.msra.mxu0 0
        %4176 = vmatprep.subr.bf16.mxu0 0
        %4177 = vmatpush2.bf16.msra.mxu0 0
        %4178 = vmatprep.subr.bf16.mxu0 0
        %4179 = vmatpush2.bf16.msra.mxu0 0
        %4180 = vmatprep.subr.bf16.mxu0 0
        %4181 = vmatpush2.bf16.msra.mxu0 0
        %4182 = vmatprep.subr.bf16.mxu0 0
        %4183 = vmatpush2.bf16.msra.mxu0 0
        %4184 = vmatprep.subr.bf16.mxu0 0
        %4185 = vmatpush2.bf16.msra.mxu0 0
        %4186 = vmatprep.mubr.bf16.mxu0 0
        %4187 = vmatmul.mubr.bf16.gmra.mxu0 %v4143
        %v4188 = vpop.f32.mrf.mxu0
        %v4189 = vadd.f32 0.0, %v4188
        %v4190 = vpop.f32.mrf.mxu0
        %v4191 = vpop.f32.mrf.mxu0
        %v4192 = vadd.f32 0.0, %v4191
        %v4193 = vpop.f32.mrf.mxu0
        %4194 = vmatprep.mubr.bf16.mxu0 0
        %4195 = vmatmul.mubr.bf16.gmra.mxu0 %v4146
        %v4196 = vpop.f32.mrf.mxu0
        %v4197 = vadd.f32 0.0, %v4196
        %v4198 = vpop.f32.mrf.mxu0
        %v4199 = vpop.f32.mrf.mxu0
        %v4200 = vadd.f32 0.0, %v4199
        %v4201 = vpop.f32.mrf.mxu0
        %4202 = vmatprep.mubr.bf16.mxu0 0
        %4203 = vmatmul.mubr.bf16.gmra.mxu0 %v4149
        %v4204 = vpop.f32.mrf.mxu0
        %v4205 = vadd.f32 0.0, %v4204
        %v4206 = vpop.f32.mrf.mxu0
        %v4207 = vpop.f32.mrf.mxu0
        %v4208 = vadd.f32 0.0, %v4207
        %v4209 = vpop.f32.mrf.mxu0
        %4210 = vmatprep.mubr.bf16.mxu0 0
        %4211 = vmatmul.mubr.bf16.gmra.mxu0 %v4152
        %v4212 = vpop.f32.mrf.mxu0
        %v4213 = vadd.f32 0.0, %v4212
        %v4214 = vpop.f32.mrf.mxu0
        %v4215 = vpop.f32.mrf.mxu0
        %v4216 = vadd.f32 0.0, %v4215
        %v4217 = vpop.f32.mrf.mxu0
        %4218 = vdwg.mxu0
        %v4219 = vpack.c.bf16 %v4103, %v4100
        %v4220 = vpack.c.bf16 %v4111, %v4108
        %v4221 = vpack.c.bf16 %v4119, %v4116
        %v4222 = vpack.c.bf16 %v4127, %v4124
        %v4223 = vpack.c.bf16 %v4192, %v4189
        %v4224 = vpack.c.bf16 %v4200, %v4197
        %v4225 = vpack.c.bf16 %v4208, %v4205
        %v4226 = vpack.c.bf16 %v4216, %v4213
        %v4229 = vunpack.c.l.b16 %v2892
        %v4230 = vunpack.c.l.b16 %v2893
        %v4231 = vpack.c.b16 %v4230, %v4229
        %v4234 = vsel %vm1172, %v4219, 0
        %v4237 = vsel %vm1172, %v4220, 0
        %v4240 = vsel %vm1172, %v4221, 0
        %v4243 = vsel %vm1172, %v4222, 0
        %v4246 = vsel %vm1172, %v4223, 0
        %v4249 = vsel %vm1172, %v4224, 0
        %v4252 = vsel %vm1172, %v4225, 0
        %v4255 = vsel %vm1172, %v4226, 0
        %4257 = vmatprep.subr.bf16.mxu0 0
        %4258 = vmatpush1.bf16.msra.mxu0 0
        %4259 = vmatprep.subr.bf16.mxu0 0
        %4260 = vmatpush1.bf16.msra.mxu0 0
        %4261 = vmatprep.subr.bf16.mxu0 0
        %4262 = vmatpush1.bf16.msra.mxu0 0
        %4263 = vmatprep.subr.bf16.mxu0 0
        %4264 = vmatpush1.bf16.msra.mxu0 0
        %4265 = vmatprep.subr.bf16.mxu0 0
        %4266 = vmatpush1.bf16.msra.mxu0 0
        %4267 = vmatprep.subr.bf16.mxu0 0
        %4268 = vmatpush1.bf16.msra.mxu0 0
        %4269 = vmatprep.subr.bf16.mxu0 0
        %4270 = vmatpush1.bf16.msra.mxu0 0
        %4271 = vmatprep.subr.bf16.mxu0 0
        %4272 = vmatpush1.bf16.msra.mxu0 %v4231
        %4273 = vmatprep.subr.bf16.mxu0 0
        %4274 = vmatpush2.bf16.msra.mxu0 0
        %4275 = vmatprep.subr.bf16.mxu0 0
        %4276 = vmatpush2.bf16.msra.mxu0 0
        %4277 = vmatprep.subr.bf16.mxu0 0
        %4278 = vmatpush2.bf16.msra.mxu0 0
        %4279 = vmatprep.subr.bf16.mxu0 0
        %4280 = vmatpush2.bf16.msra.mxu0 0
        %4281 = vmatprep.subr.bf16.mxu0 0
        %4282 = vmatpush2.bf16.msra.mxu0 0
        %4283 = vmatprep.subr.bf16.mxu0 0
        %4284 = vmatpush2.bf16.msra.mxu0 0
        %4285 = vmatprep.subr.bf16.mxu0 0
        %4286 = vmatpush2.bf16.msra.mxu0 0
        %4287 = vmatprep.subr.bf16.mxu0 0
        %4288 = vmatpush2.bf16.msra.mxu0 0
        %4289 = vmatprep.mubr.bf16.mxu0 0
        %4290 = vmatmul.mubr.bf16.gmra.mxu0 %v4234
        %v4291 = vpop.f32.mrf.mxu0
        %v4292 = vadd.f32 0.0, %v4291
        %v4293 = vpop.f32.mrf.mxu0
        %v4294 = vpop.f32.mrf.mxu0
        %v4295 = vadd.f32 0.0, %v4294
        %v4296 = vpop.f32.mrf.mxu0
        %4297 = vmatprep.mubr.bf16.mxu0 0
        %4298 = vmatmul.mubr.bf16.gmra.mxu0 %v4237
        %v4299 = vpop.f32.mrf.mxu0
        %v4300 = vadd.f32 0.0, %v4299
        %v4301 = vpop.f32.mrf.mxu0
        %v4302 = vpop.f32.mrf.mxu0
        %v4303 = vadd.f32 0.0, %v4302
        %v4304 = vpop.f32.mrf.mxu0
        %4305 = vmatprep.mubr.bf16.mxu0 0
        %4306 = vmatmul.mubr.bf16.gmra.mxu0 %v4240
        %v4307 = vpop.f32.mrf.mxu0
        %v4308 = vadd.f32 0.0, %v4307
        %v4309 = vpop.f32.mrf.mxu0
        %v4310 = vpop.f32.mrf.mxu0
        %v4311 = vadd.f32 0.0, %v4310
        %v4312 = vpop.f32.mrf.mxu0
        %4313 = vmatprep.mubr.bf16.mxu0 0
        %4314 = vmatmul.mubr.bf16.gmra.mxu0 %v4243
        %v4315 = vpop.f32.mrf.mxu0
        %v4316 = vadd.f32 0.0, %v4315
        %v4317 = vpop.f32.mrf.mxu0
        %v4318 = vpop.f32.mrf.mxu0
        %v4319 = vadd.f32 0.0, %v4318
        %v4320 = vpop.f32.mrf.mxu0
        %4321 = vmatprep.mubr.bf16.mxu0 0
        %4322 = vmatmul.mubr.bf16.gmra.mxu0 %v4246
        %v4323 = vpop.f32.mrf.mxu0
        %v4324 = vadd.f32 0.0, %v4323
        %v4325 = vpop.f32.mrf.mxu0
        %v4326 = vpop.f32.mrf.mxu0
        %v4327 = vadd.f32 0.0, %v4326
        %v4328 = vpop.f32.mrf.mxu0
        %4329 = vmatprep.mubr.bf16.mxu0 0
        %4330 = vmatmul.mubr.bf16.gmra.mxu0 %v4249
        %v4331 = vpop.f32.mrf.mxu0
        %v4332 = vadd.f32 0.0, %v4331
        %v4333 = vpop.f32.mrf.mxu0
        %v4334 = vpop.f32.mrf.mxu0
        %v4335 = vadd.f32 0.0, %v4334
        %v4336 = vpop.f32.mrf.mxu0
        %4337 = vmatprep.mubr.bf16.mxu0 0
        %4338 = vmatmul.mubr.bf16.gmra.mxu0 %v4252
        %v4339 = vpop.f32.mrf.mxu0
        %v4340 = vadd.f32 0.0, %v4339
        %v4341 = vpop.f32.mrf.mxu0
        %v4342 = vpop.f32.mrf.mxu0
        %v4343 = vadd.f32 0.0, %v4342
        %v4344 = vpop.f32.mrf.mxu0
        %4345 = vmatprep.mubr.bf16.mxu0 0
        %4346 = vmatmul.mubr.bf16.gmra.mxu0 %v4255
        %v4347 = vpop.f32.mrf.mxu0
        %v4348 = vadd.f32 0.0, %v4347
        %v4349 = vpop.f32.mrf.mxu0
        %v4350 = vpop.f32.mrf.mxu0
        %v4351 = vadd.f32 0.0, %v4350
        %v4352 = vpop.f32.mrf.mxu0
        %4353 = vdwg.mxu0
        %v4356 = vunpack.c.l.b16 %v2890
        %v4357 = vunpack.c.l.b16 %v2891
        %v4358 = vpack.c.b16 %v4357, %v4356
        %v4361 = vsel %vm1172, %v3623, 0
        %v4364 = vsel %vm1172, %v3624, 0
        %v4367 = vsel %vm1172, %v3625, 0
        %v4370 = vsel %vm1172, %v3626, 0
        %v4373 = vsel %vm1172, %v3627, 0
        %v4376 = vsel %vm1172, %v3628, 0
        %v4379 = vsel %vm1172, %v3629, 0
        %v4382 = vsel %vm1172, %v3630, 0
        %4384 = vmatprep.subr.bf16.mxu0 0
        %4385 = vmatpush1.bf16.msra.mxu0 0
        %4386 = vmatprep.subr.bf16.mxu0 0
        %4387 = vmatpush1.bf16.msra.mxu0 0
        %4388 = vmatprep.subr.bf16.mxu0 0
        %4389 = vmatpush1.bf16.msra.mxu0 0
        %4390 = vmatprep.subr.bf16.mxu0 0
        %4391 = vmatpush1.bf16.msra.mxu0 0
        %4392 = vmatprep.subr.bf16.mxu0 0
        %4393 = vmatpush1.bf16.msra.mxu0 0
        %4394 = vmatprep.subr.bf16.mxu0 0
        %4395 = vmatpush1.bf16.msra.mxu0 0
        %4396 = vmatprep.subr.bf16.mxu0 0
        %4397 = vmatpush1.bf16.msra.mxu0 0
        %4398 = vmatprep.subr.bf16.mxu0 0
        %4399 = vmatpush1.bf16.msra.mxu0 %v4358
        %4400 = vmatprep.subr.bf16.mxu0 0
        %4401 = vmatpush2.bf16.msra.mxu0 0
        %4402 = vmatprep.subr.bf16.mxu0 0
        %4403 = vmatpush2.bf16.msra.mxu0 0
        %4404 = vmatprep.subr.bf16.mxu0 0
        %4405 = vmatpush2.bf16.msra.mxu0 0
        %4406 = vmatprep.subr.bf16.mxu0 0
        %4407 = vmatpush2.bf16.msra.mxu0 0
        %4408 = vmatprep.subr.bf16.mxu0 0
        %4409 = vmatpush2.bf16.msra.mxu0 0
        %4410 = vmatprep.subr.bf16.mxu0 0
        %4411 = vmatpush2.bf16.msra.mxu0 0
        %4412 = vmatprep.subr.bf16.mxu0 0
        %4413 = vmatpush2.bf16.msra.mxu0 0
        %4414 = vmatprep.subr.bf16.mxu0 0
        %4415 = vmatpush2.bf16.msra.mxu0 0
        %4416 = vmatprep.mubr.bf16.mxu0 0
        %4417 = vmatmul.mubr.bf16.gmra.mxu0 %v4361
        %v4418 = vpop.f32.mrf.mxu0
        %v4419 = vadd.f32 %v4292, %v4418
        %v4420 = vpop.f32.mrf.mxu0
        %v4421 = vpop.f32.mrf.mxu0
        %v4422 = vadd.f32 %v4295, %v4421
        %v4423 = vpop.f32.mrf.mxu0
        %4424 = vmatprep.mubr.bf16.mxu0 0
        %4425 = vmatmul.mubr.bf16.gmra.mxu0 %v4364
        %v4426 = vpop.f32.mrf.mxu0
        %v4427 = vadd.f32 %v4300, %v4426
        %v4428 = vpop.f32.mrf.mxu0
        %v4429 = vpop.f32.mrf.mxu0
        %v4430 = vadd.f32 %v4303, %v4429
        %v4431 = vpop.f32.mrf.mxu0
        %4432 = vmatprep.mubr.bf16.mxu0 0
        %4433 = vmatmul.mubr.bf16.gmra.mxu0 %v4367
        %v4434 = vpop.f32.mrf.mxu0
        %v4435 = vadd.f32 %v4308, %v4434
        %v4436 = vpop.f32.mrf.mxu0
        %v4437 = vpop.f32.mrf.mxu0
        %v4438 = vadd.f32 %v4311, %v4437
        %v4439 = vpop.f32.mrf.mxu0
        %4440 = vmatprep.mubr.bf16.mxu0 0
        %4441 = vmatmul.mubr.bf16.gmra.mxu0 %v4370
        %v4442 = vpop.f32.mrf.mxu0
        %v4443 = vadd.f32 %v4316, %v4442
        %v4444 = vpop.f32.mrf.mxu0
        %v4445 = vpop.f32.mrf.mxu0
        %v4446 = vadd.f32 %v4319, %v4445
        %v4447 = vpop.f32.mrf.mxu0
        %4448 = vmatprep.mubr.bf16.mxu0 0
        %4449 = vmatmul.mubr.bf16.gmra.mxu0 %v4373
        %v4450 = vpop.f32.mrf.mxu0
        %v4451 = vadd.f32 %v4324, %v4450
        %v4452 = vpop.f32.mrf.mxu0
        %v4453 = vpop.f32.mrf.mxu0
        %v4454 = vadd.f32 %v4327, %v4453
        %v4455 = vpop.f32.mrf.mxu0
        %4456 = vmatprep.mubr.bf16.mxu0 0
        %4457 = vmatmul.mubr.bf16.gmra.mxu0 %v4376
        %v4458 = vpop.f32.mrf.mxu0
        %v4459 = vadd.f32 %v4332, %v4458
        %v4460 = vpop.f32.mrf.mxu0
        %v4461 = vpop.f32.mrf.mxu0
        %v4462 = vadd.f32 %v4335, %v4461
        %v4463 = vpop.f32.mrf.mxu0
        %4464 = vmatprep.mubr.bf16.mxu0 0
        %4465 = vmatmul.mubr.bf16.gmra.mxu0 %v4379
        %v4466 = vpop.f32.mrf.mxu0
        %v4467 = vadd.f32 %v4340, %v4466
        %v4468 = vpop.f32.mrf.mxu0
        %v4469 = vpop.f32.mrf.mxu0
        %v4470 = vadd.f32 %v4343, %v4469
        %v4471 = vpop.f32.mrf.mxu0
        %4472 = vmatprep.mubr.bf16.mxu0 0
        %4473 = vmatmul.mubr.bf16.gmra.mxu0 %v4382
        %v4474 = vpop.f32.mrf.mxu0
        %v4475 = vadd.f32 %v4348, %v4474
        %v4476 = vpop.f32.mrf.mxu0
        %v4477 = vpop.f32.mrf.mxu0
        %v4478 = vadd.f32 %v4351, %v4477
        %v4479 = vpop.f32.mrf.mxu0
        %4480 = vdwg.mxu0
        %v4481 = vlaneseq
        %v4482 = vshrl.u32 %v4481, 7
        %v4483 = vsub.s32 0, %v4482
        %v4484 = vrot.slane %v416, %v4483
        %v4485 = vadd.f32 %v4419, %v4484
        %v4486 = vadd.f32 %v4422, %v4484
        %v4487 = vadd.f32 %v4427, %v4484
        %v4488 = vadd.f32 %v4430, %v4484
        %v4489 = vadd.f32 %v4435, %v4484
        %v4490 = vadd.f32 %v4438, %v4484
        %v4491 = vadd.f32 %v4443, %v4484
        %v4492 = vadd.f32 %v4446, %v4484
        %v4493 = vadd.f32 %v4451, %v4484
        %v4494 = vadd.f32 %v4454, %v4484
        %v4495 = vadd.f32 %v4459, %v4484
        %v4496 = vadd.f32 %v4462, %v4484
        %v4497 = vadd.f32 %v4467, %v4484
        %v4498 = vadd.f32 %v4470, %v4484
        %v4499 = vadd.f32 %v4475, %v4484
        %v4500 = vadd.f32 %v4478, %v4484
        %v4501 = vadd.f32 %v2620, %v4485
        %v4502 = vadd.f32 %v2621, %v4486
        %v4503 = vadd.f32 %v2622, %v4487
        %v4504 = vadd.f32 %v2623, %v4488
        %v4505 = vadd.f32 %v2624, %v4489
        %v4506 = vadd.f32 %v2625, %v4490
        %v4507 = vadd.f32 %v2626, %v4491
        %v4508 = vadd.f32 %v2627, %v4492
        %v4509 = vadd.f32 %v2628, %v4493
        %v4510 = vadd.f32 %v2629, %v4494
        %v4511 = vadd.f32 %v2630, %v4495
        %v4512 = vadd.f32 %v2631, %v4496
        %v4513 = vadd.f32 %v2632, %v4497
        %v4514 = vadd.f32 %v2633, %v4498
        %v4515 = vadd.f32 %v2634, %v4499
        %v4516 = vadd.f32 %v2635, %v4500
        %v4517 = vsel %vm417, %v4501, 0.0
        %4518 = vadd.xlane.f32.xlu0 %v4517
        %v4519 = vpop.xlane.xlu0 %4518
        %v4520 = vsel %vm417, %v4502, 0.0
        %4521 = vadd.xlane.f32.xlu0 %v4520
        %v4522 = vpop.xlane.xlu0 %4521
        %v4523 = vsel %vm417, %v4503, 0.0
        %4524 = vadd.xlane.f32.xlu0 %v4523
        %v4525 = vpop.xlane.xlu0 %4524
        %v4526 = vsel %vm417, %v4504, 0.0
        %4527 = vadd.xlane.f32.xlu0 %v4526
        %v4528 = vpop.xlane.xlu0 %4527
        %v4529 = vsel %vm417, %v4505, 0.0
        %4530 = vadd.xlane.f32.xlu0 %v4529
        %v4531 = vpop.xlane.xlu0 %4530
        %v4532 = vsel %vm417, %v4506, 0.0
        %4533 = vadd.xlane.f32.xlu0 %v4532
        %v4534 = vpop.xlane.xlu0 %4533
        %v4535 = vsel %vm417, %v4507, 0.0
        %4536 = vadd.xlane.f32.xlu0 %v4535
        %v4537 = vpop.xlane.xlu0 %4536
        %v4538 = vsel %vm417, %v4508, 0.0
        %4539 = vadd.xlane.f32.xlu0 %v4538
        %v4540 = vpop.xlane.xlu0 %4539
        %v4541 = vsel %vm417, %v4509, 0.0
        %4542 = vadd.xlane.f32.xlu0 %v4541
        %v4543 = vpop.xlane.xlu0 %4542
        %v4544 = vsel %vm417, %v4510, 0.0
        %4545 = vadd.xlane.f32.xlu0 %v4544
        %v4546 = vpop.xlane.xlu0 %4545
        %v4547 = vsel %vm417, %v4511, 0.0
        %4548 = vadd.xlane.f32.xlu0 %v4547
        %v4549 = vpop.xlane.xlu0 %4548
        %v4550 = vsel %vm417, %v4512, 0.0
        %4551 = vadd.xlane.f32.xlu0 %v4550
        %v4552 = vpop.xlane.xlu0 %4551
        %v4553 = vsel %vm417, %v4513, 0.0
        %4554 = vadd.xlane.f32.xlu0 %v4553
        %v4555 = vpop.xlane.xlu0 %4554
        %v4556 = vsel %vm417, %v4514, 0.0
        %4557 = vadd.xlane.f32.xlu0 %v4556
        %v4558 = vpop.xlane.xlu0 %4557
        %v4559 = vsel %vm417, %v4515, 0.0
        %4560 = vadd.xlane.f32.xlu0 %v4559
        %v4561 = vpop.xlane.xlu0 %4560
        %v4562 = vsel %vm417, %v4516, 0.0
        %4563 = vadd.xlane.f32.xlu0 %v4562
        %v4564 = vpop.xlane.xlu0 %4563
        %v4565 = vmul.f32 %v4519, %v802
        %v4566 = vmul.f32 %v4522, %v802
        %v4567 = vmul.f32 %v4525, %v802
        %v4568 = vmul.f32 %v4528, %v802
        %v4569 = vmul.f32 %v4531, %v802
        %v4570 = vmul.f32 %v4534, %v802
        %v4571 = vmul.f32 %v4537, %v802
        %v4572 = vmul.f32 %v4540, %v802
        %v4573 = vmul.f32 %v4543, %v802
        %v4574 = vmul.f32 %v4546, %v802
        %v4575 = vmul.f32 %v4549, %v802
        %v4576 = vmul.f32 %v4552, %v802
        %v4577 = vmul.f32 %v4555, %v802
        %v4578 = vmul.f32 %v4558, %v802
        %v4579 = vmul.f32 %v4561, %v802
        %v4580 = vmul.f32 %v4564, %v802
        %v4581 = vsub.f32 %v4501, %v4565
        %v4582 = vsub.f32 %v4502, %v4566
        %v4583 = vsub.f32 %v4503, %v4567
        %v4584 = vsub.f32 %v4504, %v4568
        %v4585 = vsub.f32 %v4505, %v4569
        %v4586 = vsub.f32 %v4506, %v4570
        %v4587 = vsub.f32 %v4507, %v4571
        %v4588 = vsub.f32 %v4508, %v4572
        %v4589 = vsub.f32 %v4509, %v4573
        %v4590 = vsub.f32 %v4510, %v4574
        %v4591 = vsub.f32 %v4511, %v4575
        %v4592 = vsub.f32 %v4512, %v4576
        %v4593 = vsub.f32 %v4513, %v4577
        %v4594 = vsub.f32 %v4514, %v4578
        %v4595 = vsub.f32 %v4515, %v4579
        %v4596 = vsub.f32 %v4516, %v4580
        %v4597 = vmul.f32 %v4581, %v4581
        %v4598 = vmul.f32 %v4582, %v4582
        %v4599 = vmul.f32 %v4583, %v4583
        %v4600 = vmul.f32 %v4584, %v4584
        %v4601 = vmul.f32 %v4585, %v4585
        %v4602 = vmul.f32 %v4586, %v4586
        %v4603 = vmul.f32 %v4587, %v4587
        %v4604 = vmul.f32 %v4588, %v4588
        %v4605 = vmul.f32 %v4589, %v4589
        %v4606 = vmul.f32 %v4590, %v4590
        %v4607 = vmul.f32 %v4591, %v4591
        %v4608 = vmul.f32 %v4592, %v4592
        %v4609 = vmul.f32 %v4593, %v4593
        %v4610 = vmul.f32 %v4594, %v4594
        %v4611 = vmul.f32 %v4595, %v4595
        %v4612 = vmul.f32 %v4596, %v4596
        %v4613 = vsel %vm417, %v4597, 0.0
        %4614 = vadd.xlane.f32.xlu0 %v4613
        %v4615 = vpop.xlane.xlu0 %4614
        %v4616 = vsel %vm417, %v4598, 0.0
        %4617 = vadd.xlane.f32.xlu0 %v4616
        %v4618 = vpop.xlane.xlu0 %4617
        %v4619 = vsel %vm417, %v4599, 0.0
        %4620 = vadd.xlane.f32.xlu0 %v4619
        %v4621 = vpop.xlane.xlu0 %4620
        %v4622 = vsel %vm417, %v4600, 0.0
        %4623 = vadd.xlane.f32.xlu0 %v4622
        %v4624 = vpop.xlane.xlu0 %4623
        %v4625 = vsel %vm417, %v4601, 0.0
        %4626 = vadd.xlane.f32.xlu0 %v4625
        %v4627 = vpop.xlane.xlu0 %4626
        %v4628 = vsel %vm417, %v4602, 0.0
        %4629 = vadd.xlane.f32.xlu0 %v4628
        %v4630 = vpop.xlane.xlu0 %4629
        %v4631 = vsel %vm417, %v4603, 0.0
        %4632 = vadd.xlane.f32.xlu0 %v4631
        %v4633 = vpop.xlane.xlu0 %4632
        %v4634 = vsel %vm417, %v4604, 0.0
        %4635 = vadd.xlane.f32.xlu0 %v4634
        %v4636 = vpop.xlane.xlu0 %4635
        %v4637 = vsel %vm417, %v4605, 0.0
        %4638 = vadd.xlane.f32.xlu0 %v4637
        %v4639 = vpop.xlane.xlu0 %4638
        %v4640 = vsel %vm417, %v4606, 0.0
        %4641 = vadd.xlane.f32.xlu0 %v4640
        %v4642 = vpop.xlane.xlu0 %4641
        %v4643 = vsel %vm417, %v4607, 0.0
        %4644 = vadd.xlane.f32.xlu0 %v4643
        %v4645 = vpop.xlane.xlu0 %4644
        %v4646 = vsel %vm417, %v4608, 0.0
        %4647 = vadd.xlane.f32.xlu0 %v4646
        %v4648 = vpop.xlane.xlu0 %4647
        %v4649 = vsel %vm417, %v4609, 0.0
        %4650 = vadd.xlane.f32.xlu0 %v4649
        %v4651 = vpop.xlane.xlu0 %4650
        %v4652 = vsel %vm417, %v4610, 0.0
        %4653 = vadd.xlane.f32.xlu0 %v4652
        %v4654 = vpop.xlane.xlu0 %4653
        %v4655 = vsel %vm417, %v4611, 0.0
        %4656 = vadd.xlane.f32.xlu0 %v4655
        %v4657 = vpop.xlane.xlu0 %4656
        %v4658 = vsel %vm417, %v4612, 0.0
        %4659 = vadd.xlane.f32.xlu0 %v4658
        %v4660 = vpop.xlane.xlu0 %4659
        %v4661 = vmul.f32 %v4615, %v802
        %v4662 = vmul.f32 %v4618, %v802
        %v4663 = vmul.f32 %v4621, %v802
        %v4664 = vmul.f32 %v4624, %v802
        %v4665 = vmul.f32 %v4627, %v802
        %v4666 = vmul.f32 %v4630, %v802
        %v4667 = vmul.f32 %v4633, %v802
        %v4668 = vmul.f32 %v4636, %v802
        %v4669 = vmul.f32 %v4639, %v802
        %v4670 = vmul.f32 %v4642, %v802
        %v4671 = vmul.f32 %v4645, %v802
        %v4672 = vmul.f32 %v4648, %v802
        %v4673 = vmul.f32 %v4651, %v802
        %v4674 = vmul.f32 %v4654, %v802
        %v4675 = vmul.f32 %v4657, %v802
        %v4676 = vmul.f32 %v4660, %v802
        %v4677 = vadd.f32 %v4661, 1e-05
        %v4678 = vadd.f32 %v4662, 1e-05
        %v4679 = vadd.f32 %v4663, 1e-05
        %v4680 = vadd.f32 %v4664, 1e-05
        %v4681 = vadd.f32 %v4665, 1e-05
        %v4682 = vadd.f32 %v4666, 1e-05
        %v4683 = vadd.f32 %v4667, 1e-05
        %v4684 = vadd.f32 %v4668, 1e-05
        %v4685 = vadd.f32 %v4669, 1e-05
        %v4686 = vadd.f32 %v4670, 1e-05
        %v4687 = vadd.f32 %v4671, 1e-05
        %v4688 = vadd.f32 %v4672, 1e-05
        %v4689 = vadd.f32 %v4673, 1e-05
        %v4690 = vadd.f32 %v4674, 1e-05
        %v4691 = vadd.f32 %v4675, 1e-05
        %v4692 = vadd.f32 %v4676, 1e-05
        %v4693 = vrsqrt.pop %v4677
        %v4694 = vrsqrt.pop %v4678
        %v4695 = vrsqrt.pop %v4679
        %v4696 = vrsqrt.pop %v4680
        %v4697 = vrsqrt.pop %v4681
        %v4698 = vrsqrt.pop %v4682
        %v4699 = vrsqrt.pop %v4683
        %v4700 = vrsqrt.pop %v4684
        %v4701 = vrsqrt.pop %v4685
        %v4702 = vrsqrt.pop %v4686
        %v4703 = vrsqrt.pop %v4687
        %v4704 = vrsqrt.pop %v4688
        %v4705 = vrsqrt.pop %v4689
        %v4706 = vrsqrt.pop %v4690
        %v4707 = vrsqrt.pop %v4691
        %v4708 = vrsqrt.pop %v4692
        %v4709 = vmul.f32 %v4581, %v4693
        %v4710 = vmul.f32 %v4582, %v4694
        %v4711 = vmul.f32 %v4583, %v4695
        %v4712 = vmul.f32 %v4584, %v4696
        %v4713 = vmul.f32 %v4585, %v4697
        %v4714 = vmul.f32 %v4586, %v4698
        %v4715 = vmul.f32 %v4587, %v4699
        %v4716 = vmul.f32 %v4588, %v4700
        %v4717 = vmul.f32 %v4589, %v4701
        %v4718 = vmul.f32 %v4590, %v4702
        %v4719 = vmul.f32 %v4591, %v4703
        %v4720 = vmul.f32 %v4592, %v4704
        %v4721 = vmul.f32 %v4593, %v4705
        %v4722 = vmul.f32 %v4594, %v4706
        %v4723 = vmul.f32 %v4595, %v4707
        %v4724 = vmul.f32 %v4596, %v4708
        %v4725 = vlaneseq
        %v4726 = vshrl.u32 %v4725, 7
        %v4727 = vsub.s32 1, %v4726
        %v4728 = vrot.slane %v416, %v4727
        %v4729 = vmul.f32 %v4709, %v4728
        %v4730 = vmul.f32 %v4710, %v4728
        %v4731 = vmul.f32 %v4711, %v4728
        %v4732 = vmul.f32 %v4712, %v4728
        %v4733 = vmul.f32 %v4713, %v4728
        %v4734 = vmul.f32 %v4714, %v4728
        %v4735 = vmul.f32 %v4715, %v4728
        %v4736 = vmul.f32 %v4716, %v4728
        %v4737 = vmul.f32 %v4717, %v4728
        %v4738 = vmul.f32 %v4718, %v4728
        %v4739 = vmul.f32 %v4719, %v4728
        %v4740 = vmul.f32 %v4720, %v4728
        %v4741 = vmul.f32 %v4721, %v4728
        %v4742 = vmul.f32 %v4722, %v4728
        %v4743 = vmul.f32 %v4723, %v4728
        %v4744 = vmul.f32 %v4724, %v4728
        %v4745 = vlaneseq
        %v4746 = vshrl.u32 %v4745, 7
        %v4747 = vsub.s32 2, %v4746
        %v4748 = vrot.slane %v416, %v4747
        %v4749 = vadd.f32 %v4729, %v4748
        %v4750 = vadd.f32 %v4730, %v4748
        %v4751 = vadd.f32 %v4731, %v4748
        %v4752 = vadd.f32 %v4732, %v4748
        %v4753 = vadd.f32 %v4733, %v4748
        %v4754 = vadd.f32 %v4734, %v4748
        %v4755 = vadd.f32 %v4735, %v4748
        %v4756 = vadd.f32 %v4736, %v4748
        %v4757 = vadd.f32 %v4737, %v4748
        %v4758 = vadd.f32 %v4738, %v4748
        %v4759 = vadd.f32 %v4739, %v4748
        %v4760 = vadd.f32 %v4740, %v4748
        %v4761 = vadd.f32 %v4741, %v4748
        %v4762 = vadd.f32 %v4742, %v4748
        %v4763 = vadd.f32 %v4743, %v4748
        %v4764 = vadd.f32 %v4744, %v4748
        %v4765 = vpack.c.bf16 %v4750, %v4749
        %v4766 = vpack.c.bf16 %v4752, %v4751
        %v4767 = vpack.c.bf16 %v4754, %v4753
        %v4768 = vpack.c.bf16 %v4756, %v4755
        %v4769 = vpack.c.bf16 %v4758, %v4757
        %v4770 = vpack.c.bf16 %v4760, %v4759
        %v4771 = vpack.c.bf16 %v4762, %v4761
        %v4772 = vpack.c.bf16 %v4764, %v4763
        %v4773 = vld [vmem:[#allocation7] sm:$0xff]
        %v4774 = vld [vmem:[#allocation7 + $0x8] sm:$0xff]
        %v4775 = vld [vmem:[#allocation7 + $0x10] sm:$0xff]
        %v4776 = vld [vmem:[#allocation7 + $0x18] sm:$0xff]
        %v4777 = vld [vmem:[%s2] sm:$0x3]
        %v4779 = vlaneseq
        %v4780 = vshrl.u32 %v4779, 7
        %v4781 = vsub.s32 0, %v4780
        %v4782 = vrot.slane %v4777, %v4781
        %v4783 = vlaneseq
        %v4784 = vshrl.u32 %v4783, 7
        %v4785 = vsub.s32 1, %v4784
        %v4786 = vrot.slane %v4777, %v4785
        %v4793 = vunpack.c.l.b16 %v4773
        %v4794 = vunpack.c.h.b16 %v4773
        %v4795 = vunpack.c.l.b16 %v4774
        %v4796 = vunpack.c.h.b16 %v4774
        %v4797 = vunpack.c.l.b16 %v4775
        %v4798 = vunpack.c.h.b16 %v4775
        %v4799 = vunpack.c.l.b16 %v4776
        %v4800 = vunpack.c.h.b16 %v4776
        %v4801 = vpack.c.b16 %v4795, %v4793
        %v4802 = vpack.c.b16 %v4796, %v4794
        %v4803 = vpack.c.b16 %v4799, %v4797
        %v4804 = vpack.c.b16 %v4800, %v4798
        %v4810 = vsel %vm417, %v4765, 0
        %v4813 = vsel %vm417, %v4766, 0
        %v4816 = vsel %vm417, %v4767, 0
        %v4819 = vsel %vm417, %v4768, 0
        %v4822 = vsel %vm417, %v4769, 0
        %v4825 = vsel %vm417, %v4770, 0
        %v4828 = vsel %vm417, %v4771, 0
        %v4831 = vsel %vm417, %v4772, 0
        %4833 = vmatprep.subr.bf16.mxu0 0
        %4834 = vmatpush1.bf16.msra.mxu0 0
        %4835 = vmatprep.subr.bf16.mxu0 0
        %4836 = vmatpush1.bf16.msra.mxu0 0
        %4837 = vmatprep.subr.bf16.mxu0 0
        %4838 = vmatpush1.bf16.msra.mxu0 0
        %4839 = vmatprep.subr.bf16.mxu0 0
        %4840 = vmatpush1.bf16.msra.mxu0 0
        %4841 = vmatprep.subr.bf16.mxu0 0
        %4842 = vmatpush1.bf16.msra.mxu0 0
        %4843 = vmatprep.subr.bf16.mxu0 0
        %4844 = vmatpush1.bf16.msra.mxu0 0
        %4845 = vmatprep.subr.bf16.mxu0 %v4804
        %4846 = vmatpush1.bf16.msra.mxu0 %v4803
        %4847 = vmatprep.subr.bf16.mxu0 %v4802
        %4848 = vmatpush1.bf16.msra.mxu0 %v4801
        %4849 = vmatprep.subr.bf16.mxu0 0
        %4850 = vmatpush2.bf16.msra.mxu0 0
        %4851 = vmatprep.subr.bf16.mxu0 0
        %4852 = vmatpush2.bf16.msra.mxu0 0
        %4853 = vmatprep.subr.bf16.mxu0 0
        %4854 = vmatpush2.bf16.msra.mxu0 0
        %4855 = vmatprep.subr.bf16.mxu0 0
        %4856 = vmatpush2.bf16.msra.mxu0 0
        %4857 = vmatprep.subr.bf16.mxu0 0
        %4858 = vmatpush2.bf16.msra.mxu0 0
        %4859 = vmatprep.subr.bf16.mxu0 0
        %4860 = vmatpush2.bf16.msra.mxu0 0
        %4861 = vmatprep.subr.bf16.mxu0 0
        %4862 = vmatpush2.bf16.msra.mxu0 0
        %4863 = vmatprep.subr.bf16.mxu0 0
        %4864 = vmatpush2.bf16.msra.mxu0 0
        %4865 = vmatprep.mubr.bf16.mxu0 0
        %4866 = vmatmul.mubr.bf16.gmra.mxu0 %v4810
        %v4867 = vpop.f32.mrf.mxu0
        %v4868 = vadd.f32 %v4782, %v4867
        %v4869 = vpop.f32.mrf.mxu0
        %v4870 = vadd.f32 %v4786, %v4869
        %v4871 = vpop.f32.mrf.mxu0
        %v4872 = vadd.f32 %v4782, %v4871
        %v4873 = vpop.f32.mrf.mxu0
        %v4874 = vadd.f32 %v4786, %v4873
        %4875 = vmatprep.mubr.bf16.mxu0 0
        %4876 = vmatmul.mubr.bf16.gmra.mxu0 %v4813
        %v4877 = vpop.f32.mrf.mxu0
        %v4878 = vadd.f32 %v4782, %v4877
        %v4879 = vpop.f32.mrf.mxu0
        %v4880 = vadd.f32 %v4786, %v4879
        %v4881 = vpop.f32.mrf.mxu0
        %v4882 = vadd.f32 %v4782, %v4881
        %v4883 = vpop.f32.mrf.mxu0
        %v4884 = vadd.f32 %v4786, %v4883
        %4885 = vmatprep.mubr.bf16.mxu0 0
        %4886 = vmatmul.mubr.bf16.gmra.mxu0 %v4816
        %v4887 = vpop.f32.mrf.mxu0
        %v4888 = vadd.f32 %v4782, %v4887
        %v4889 = vpop.f32.mrf.mxu0
        %v4890 = vadd.f32 %v4786, %v4889
        %v4891 = vpop.f32.mrf.mxu0
        %v4892 = vadd.f32 %v4782, %v4891
        %v4893 = vpop.f32.mrf.mxu0
        %v4894 = vadd.f32 %v4786, %v4893
        %4895 = vmatprep.mubr.bf16.mxu0 0
        %4896 = vmatmul.mubr.bf16.gmra.mxu0 %v4819
        %v4897 = vpop.f32.mrf.mxu0
        %v4898 = vadd.f32 %v4782, %v4897
        %v4899 = vpop.f32.mrf.mxu0
        %v4900 = vadd.f32 %v4786, %v4899
        %v4901 = vpop.f32.mrf.mxu0
        %v4902 = vadd.f32 %v4782, %v4901
        %v4903 = vpop.f32.mrf.mxu0
        %v4904 = vadd.f32 %v4786, %v4903
        %4905 = vmatprep.mubr.bf16.mxu0 0
        %4906 = vmatmul.mubr.bf16.gmra.mxu0 %v4822
        %v4907 = vpop.f32.mrf.mxu0
        %v4908 = vadd.f32 %v4782, %v4907
        %v4909 = vpop.f32.mrf.mxu0
        %v4910 = vadd.f32 %v4786, %v4909
        %v4911 = vpop.f32.mrf.mxu0
        %v4912 = vadd.f32 %v4782, %v4911
        %v4913 = vpop.f32.mrf.mxu0
        %v4914 = vadd.f32 %v4786, %v4913
        %4915 = vmatprep.mubr.bf16.mxu0 0
        %4916 = vmatmul.mubr.bf16.gmra.mxu0 %v4825
        %v4917 = vpop.f32.mrf.mxu0
        %v4918 = vadd.f32 %v4782, %v4917
        %v4919 = vpop.f32.mrf.mxu0
        %v4920 = vadd.f32 %v4786, %v4919
        %v4921 = vpop.f32.mrf.mxu0
        %v4922 = vadd.f32 %v4782, %v4921
        %v4923 = vpop.f32.mrf.mxu0
        %v4924 = vadd.f32 %v4786, %v4923
        %4925 = vmatprep.mubr.bf16.mxu0 0
        %4926 = vmatmul.mubr.bf16.gmra.mxu0 %v4828
        %v4927 = vpop.f32.mrf.mxu0
        %v4928 = vadd.f32 %v4782, %v4927
        %v4929 = vpop.f32.mrf.mxu0
        %v4930 = vadd.f32 %v4786, %v4929
        %v4931 = vpop.f32.mrf.mxu0
        %v4932 = vadd.f32 %v4782, %v4931
        %v4933 = vpop.f32.mrf.mxu0
        %v4934 = vadd.f32 %v4786, %v4933
        %4935 = vmatprep.mubr.bf16.mxu0 0
        %4936 = vmatmul.mubr.bf16.gmra.mxu0 %v4831
        %v4937 = vpop.f32.mrf.mxu0
        %v4938 = vadd.f32 %v4782, %v4937
        %v4939 = vpop.f32.mrf.mxu0
        %v4940 = vadd.f32 %v4786, %v4939
        %v4941 = vpop.f32.mrf.mxu0
        %v4942 = vadd.f32 %v4782, %v4941
        %v4943 = vpop.f32.mrf.mxu0
        %v4944 = vadd.f32 %v4786, %v4943
        %4945 = vdwg.mxu0
        %v4946 = vmul.f32 %v4870, 0.5
        %v4947 = vmul.f32 %v4874, 0.5
        %v4948 = vmul.f32 %v4880, 0.5
        %v4949 = vmul.f32 %v4884, 0.5
        %v4950 = vmul.f32 %v4890, 0.5
        %v4951 = vmul.f32 %v4894, 0.5
        %v4952 = vmul.f32 %v4900, 0.5
        %v4953 = vmul.f32 %v4904, 0.5
        %v4954 = vmul.f32 %v4910, 0.5
        %v4955 = vmul.f32 %v4914, 0.5
        %v4956 = vmul.f32 %v4920, 0.5
        %v4957 = vmul.f32 %v4924, 0.5
        %v4958 = vmul.f32 %v4930, 0.5
        %v4959 = vmul.f32 %v4934, 0.5
        %v4960 = vmul.f32 %v4940, 0.5
        %v4961 = vmul.f32 %v4944, 0.5
        %v4962 = vmul.f32 %v4870, 0.70710677
        %v4963 = vmul.f32 %v4874, 0.70710677
        %v4964 = vmul.f32 %v4880, 0.70710677
        %v4965 = vmul.f32 %v4884, 0.70710677
        %v4966 = vmul.f32 %v4890, 0.70710677
        %v4967 = vmul.f32 %v4894, 0.70710677
        %v4968 = vmul.f32 %v4900, 0.70710677
        %v4969 = vmul.f32 %v4904, 0.70710677
        %v4970 = vmul.f32 %v4910, 0.70710677
        %v4971 = vmul.f32 %v4914, 0.70710677
        %v4972 = vmul.f32 %v4920, 0.70710677
        %v4973 = vmul.f32 %v4924, 0.70710677
        %v4974 = vmul.f32 %v4930, 0.70710677
        %v4975 = vmul.f32 %v4934, 0.70710677
        %v4976 = vmul.f32 %v4940, 0.70710677
        %v4977 = vmul.f32 %v4944, 0.70710677
        %v4978 = verf.f32.pop %v4962
        %v4979 = verf.f32.pop %v4963
        %v4980 = verf.f32.pop %v4964
        %v4981 = verf.f32.pop %v4965
        %v4982 = verf.f32.pop %v4966
        %v4983 = verf.f32.pop %v4967
        %v4984 = verf.f32.pop %v4968
        %v4985 = verf.f32.pop %v4969
        %v4986 = verf.f32.pop %v4970
        %v4987 = verf.f32.pop %v4971
        %v4988 = verf.f32.pop %v4972
        %v4989 = verf.f32.pop %v4973
        %v4990 = verf.f32.pop %v4974
        %v4991 = verf.f32.pop %v4975
        %v4992 = verf.f32.pop %v4976
        %v4993 = verf.f32.pop %v4977
        %v4994 = vadd.f32 %v4978, 1.0
        %v4995 = vadd.f32 %v4979, 1.0
        %v4996 = vadd.f32 %v4980, 1.0
        %v4997 = vadd.f32 %v4981, 1.0
        %v4998 = vadd.f32 %v4982, 1.0
        %v4999 = vadd.f32 %v4983, 1.0
        %v5000 = vadd.f32 %v4984, 1.0
        %v5001 = vadd.f32 %v4985, 1.0
        %v5002 = vadd.f32 %v4986, 1.0
        %v5003 = vadd.f32 %v4987, 1.0
        %v5004 = vadd.f32 %v4988, 1.0
        %v5005 = vadd.f32 %v4989, 1.0
        %v5006 = vadd.f32 %v4990, 1.0
        %v5007 = vadd.f32 %v4991, 1.0
        %v5008 = vadd.f32 %v4992, 1.0
        %v5009 = vadd.f32 %v4993, 1.0
        %v5010 = vmul.f32 %v4946, %v4994
        %v5011 = vmul.f32 %v4947, %v4995
        %v5012 = vmul.f32 %v4948, %v4996
        %v5013 = vmul.f32 %v4949, %v4997
        %v5014 = vmul.f32 %v4950, %v4998
        %v5015 = vmul.f32 %v4951, %v4999
        %v5016 = vmul.f32 %v4952, %v5000
        %v5017 = vmul.f32 %v4953, %v5001
        %v5018 = vmul.f32 %v4954, %v5002
        %v5019 = vmul.f32 %v4955, %v5003
        %v5020 = vmul.f32 %v4956, %v5004
        %v5021 = vmul.f32 %v4957, %v5005
        %v5022 = vmul.f32 %v4958, %v5006
        %v5023 = vmul.f32 %v4959, %v5007
        %v5024 = vmul.f32 %v4960, %v5008
        %v5025 = vmul.f32 %v4961, %v5009
        %v5026 = vmul.f32 %v4868, %v5010
        %v5027 = vmul.f32 %v4872, %v5011
        %v5028 = vmul.f32 %v4878, %v5012
        %v5029 = vmul.f32 %v4882, %v5013
        %v5030 = vmul.f32 %v4888, %v5014
        %v5031 = vmul.f32 %v4892, %v5015
        %v5032 = vmul.f32 %v4898, %v5016
        %v5033 = vmul.f32 %v4902, %v5017
        %v5034 = vmul.f32 %v4908, %v5018
        %v5035 = vmul.f32 %v4912, %v5019
        %v5036 = vmul.f32 %v4918, %v5020
        %v5037 = vmul.f32 %v4922, %v5021
        %v5038 = vmul.f32 %v4928, %v5022
        %v5039 = vmul.f32 %v4932, %v5023
        %v5040 = vmul.f32 %v4938, %v5024
        %v5041 = vmul.f32 %v4942, %v5025
        %v5042 = vpack.c.bf16 %v5027, %v5026
        %v5043 = vpack.c.bf16 %v5029, %v5028
        %v5044 = vpack.c.bf16 %v5031, %v5030
        %v5045 = vpack.c.bf16 %v5033, %v5032
        %v5046 = vpack.c.bf16 %v5035, %v5034
        %v5047 = vpack.c.bf16 %v5037, %v5036
        %v5048 = vpack.c.bf16 %v5039, %v5038
        %v5049 = vpack.c.bf16 %v5041, %v5040
        %v5050 = vld [vmem:[%s7] sm:$0xf]
        %v5051 = vld [vmem:[%s7 + $0x4] sm:$0xf]
        %v5052 = vld [vmem:[%s7 + $0x8] sm:$0xf]
        %v5053 = vld [vmem:[%s7 + $0xc] sm:$0xf]
        %v5054 = vld [vmem:[%s7 + $0x10] sm:$0xf]
        %v5055 = vld [vmem:[%s7 + $0x14] sm:$0xf]
        %v5056 = vld [vmem:[%s7 + $0x18] sm:$0xf]
        %v5057 = vld [vmem:[%s7 + $0x1c] sm:$0xf]
        %v5058 = vld [vmem:[%s7 + $0x20] sm:$0xf]
        %v5059 = vld [vmem:[%s7 + $0x24] sm:$0xf]
        %v5060 = vld [vmem:[%s7 + $0x28] sm:$0xf]
        %v5061 = vld [vmem:[%s7 + $0x2c] sm:$0xf]
        %v5062 = vld [vmem:[%s7 + $0x30] sm:$0xf]
        %v5063 = vld [vmem:[%s7 + $0x34] sm:$0xf]
        %v5064 = vld [vmem:[%s7 + $0x38] sm:$0xf]
        %v5065 = vld [vmem:[%s7 + $0x3c] sm:$0xf]
        %v5066 = vlaneseq
        %v5067 = vshrl.u32 %v5066, 7
        %v5068 = vsub.s32 3, %v5067
        %v5069 = vrot.slane %v416, %v5068
        %v5086 = vunpack.c.l.b16 %v5050
        %v5087 = vunpack.c.l.b16 %v5051
        %v5088 = vunpack.c.l.b16 %v5052
        %v5089 = vunpack.c.l.b16 %v5053
        %v5090 = vunpack.c.l.b16 %v5054
        %v5091 = vunpack.c.l.b16 %v5055
        %v5092 = vunpack.c.l.b16 %v5056
        %v5093 = vunpack.c.l.b16 %v5057
        %v5094 = vunpack.c.l.b16 %v5058
        %v5095 = vunpack.c.l.b16 %v5059
        %v5096 = vunpack.c.l.b16 %v5060
        %v5097 = vunpack.c.l.b16 %v5061
        %v5098 = vunpack.c.l.b16 %v5062
        %v5099 = vunpack.c.l.b16 %v5063
        %v5100 = vunpack.c.l.b16 %v5064
        %v5101 = vunpack.c.l.b16 %v5065
        %v5102 = vpack.c.b16 %v5087, %v5086
        %v5103 = vpack.c.b16 %v5089, %v5088
        %v5104 = vpack.c.b16 %v5091, %v5090
        %v5105 = vpack.c.b16 %v5093, %v5092
        %v5106 = vpack.c.b16 %v5095, %v5094
        %v5107 = vpack.c.b16 %v5097, %v5096
        %v5108 = vpack.c.b16 %v5099, %v5098
        %v5109 = vpack.c.b16 %v5101, %v5100
        %5118 = vmatprep.subr.bf16.mxu0 0
        %5119 = vmatpush1.bf16.msra.mxu0 %v5109
        %5120 = vmatprep.subr.bf16.mxu0 0
        %5121 = vmatpush1.bf16.msra.mxu0 %v5108
        %5122 = vmatprep.subr.bf16.mxu0 0
        %5123 = vmatpush1.bf16.msra.mxu0 %v5107
        %5124 = vmatprep.subr.bf16.mxu0 0
        %5125 = vmatpush1.bf16.msra.mxu0 %v5106
        %5126 = vmatprep.subr.bf16.mxu0 0
        %5127 = vmatpush1.bf16.msra.mxu0 %v5105
        %5128 = vmatprep.subr.bf16.mxu0 0
        %5129 = vmatpush1.bf16.msra.mxu0 %v5104
        %5130 = vmatprep.subr.bf16.mxu0 0
        %5131 = vmatpush1.bf16.msra.mxu0 %v5103
        %5132 = vmatprep.subr.bf16.mxu0 0
        %5133 = vmatpush1.bf16.msra.mxu0 %v5102
        %5134 = vmatprep.subr.bf16.mxu0 0
        %5135 = vmatpush2.bf16.msra.mxu0 0
        %5136 = vmatprep.subr.bf16.mxu0 0
        %5137 = vmatpush2.bf16.msra.mxu0 0
        %5138 = vmatprep.subr.bf16.mxu0 0
        %5139 = vmatpush2.bf16.msra.mxu0 0
        %5140 = vmatprep.subr.bf16.mxu0 0
        %5141 = vmatpush2.bf16.msra.mxu0 0
        %5142 = vmatprep.subr.bf16.mxu0 0
        %5143 = vmatpush2.bf16.msra.mxu0 0
        %5144 = vmatprep.subr.bf16.mxu0 0
        %5145 = vmatpush2.bf16.msra.mxu0 0
        %5146 = vmatprep.subr.bf16.mxu0 0
        %5147 = vmatpush2.bf16.msra.mxu0 0
        %5148 = vmatprep.subr.bf16.mxu0 0
        %5149 = vmatpush2.bf16.msra.mxu0 0
        %5150 = vmatprep.mubr.bf16.mxu0 0
        %5151 = vmatmul.mubr.bf16.gmra.mxu0 %v5042
        %v5152 = vpop.f32.mrf.mxu0
        %v5153 = vadd.f32 %v5069, %v5152
        %v5154 = vpop.f32.mrf.mxu0
        %v5155 = vpop.f32.mrf.mxu0
        %v5156 = vadd.f32 %v5069, %v5155
        %v5157 = vpop.f32.mrf.mxu0
        %5158 = vmatprep.mubr.bf16.mxu0 0
        %5159 = vmatmul.mubr.bf16.gmra.mxu0 %v5043
        %v5160 = vpop.f32.mrf.mxu0
        %v5161 = vadd.f32 %v5069, %v5160
        %v5162 = vpop.f32.mrf.mxu0
        %v5163 = vpop.f32.mrf.mxu0
        %v5164 = vadd.f32 %v5069, %v5163
        %v5165 = vpop.f32.mrf.mxu0
        %5166 = vmatprep.mubr.bf16.mxu0 0
        %5167 = vmatmul.mubr.bf16.gmra.mxu0 %v5044
        %v5168 = vpop.f32.mrf.mxu0
        %v5169 = vadd.f32 %v5069, %v5168
        %v5170 = vpop.f32.mrf.mxu0
        %v5171 = vpop.f32.mrf.mxu0
        %v5172 = vadd.f32 %v5069, %v5171
        %v5173 = vpop.f32.mrf.mxu0
        %5174 = vmatprep.mubr.bf16.mxu0 0
        %5175 = vmatmul.mubr.bf16.gmra.mxu0 %v5045
        %v5176 = vpop.f32.mrf.mxu0
        %v5177 = vadd.f32 %v5069, %v5176
        %v5178 = vpop.f32.mrf.mxu0
        %v5179 = vpop.f32.mrf.mxu0
        %v5180 = vadd.f32 %v5069, %v5179
        %v5181 = vpop.f32.mrf.mxu0
        %5182 = vmatprep.mubr.bf16.mxu0 0
        %5183 = vmatmul.mubr.bf16.gmra.mxu0 %v5046
        %v5184 = vpop.f32.mrf.mxu0
        %v5185 = vadd.f32 %v5069, %v5184
        %v5186 = vpop.f32.mrf.mxu0
        %v5187 = vpop.f32.mrf.mxu0
        %v5188 = vadd.f32 %v5069, %v5187
        %v5189 = vpop.f32.mrf.mxu0
        %5190 = vmatprep.mubr.bf16.mxu0 0
        %5191 = vmatmul.mubr.bf16.gmra.mxu0 %v5047
        %v5192 = vpop.f32.mrf.mxu0
        %v5193 = vadd.f32 %v5069, %v5192
        %v5194 = vpop.f32.mrf.mxu0
        %v5195 = vpop.f32.mrf.mxu0
        %v5196 = vadd.f32 %v5069, %v5195
        %v5197 = vpop.f32.mrf.mxu0
        %5198 = vmatprep.mubr.bf16.mxu0 0
        %5199 = vmatmul.mubr.bf16.gmra.mxu0 %v5048
        %v5200 = vpop.f32.mrf.mxu0
        %v5201 = vadd.f32 %v5069, %v5200
        %v5202 = vpop.f32.mrf.mxu0
        %v5203 = vpop.f32.mrf.mxu0
        %v5204 = vadd.f32 %v5069, %v5203
        %v5205 = vpop.f32.mrf.mxu0
        %5206 = vmatprep.mubr.bf16.mxu0 0
        %5207 = vmatmul.mubr.bf16.gmra.mxu0 %v5049
        %v5208 = vpop.f32.mrf.mxu0
        %v5209 = vadd.f32 %v5069, %v5208
        %v5210 = vpop.f32.mrf.mxu0
        %v5211 = vpop.f32.mrf.mxu0
        %v5212 = vadd.f32 %v5069, %v5211
        %v5213 = vpop.f32.mrf.mxu0
        %5214 = vdwg.mxu0
        %v5215 = vadd.f32 %v4501, %v5153
        %v5216 = vadd.f32 %v4502, %v5156
        %v5217 = vadd.f32 %v4503, %v5161
        %v5218 = vadd.f32 %v4504, %v5164
        %v5219 = vadd.f32 %v4505, %v5169
        %v5220 = vadd.f32 %v4506, %v5172
        %v5221 = vadd.f32 %v4507, %v5177
        %v5222 = vadd.f32 %v4508, %v5180
        %v5223 = vadd.f32 %v4509, %v5185
        %v5224 = vadd.f32 %v4510, %v5188
        %v5225 = vadd.f32 %v4511, %v5193
        %v5226 = vadd.f32 %v4512, %v5196
        %v5227 = vadd.f32 %v4513, %v5201
        %v5228 = vadd.f32 %v4514, %v5204
        %v5229 = vadd.f32 %v4515, %v5209
        %v5230 = vadd.f32 %v4516, %v5212
        %v5231 = vpack.c.bf16 %v5216, %v5215
        %v5232 = vpack.c.bf16 %v5218, %v5217
        %v5233 = vpack.c.bf16 %v5220, %v5219
        %v5234 = vpack.c.bf16 %v5222, %v5221
        %v5235 = vpack.c.bf16 %v5224, %v5223
        %v5236 = vpack.c.bf16 %v5226, %v5225
        %v5237 = vpack.c.bf16 %v5228, %v5227
        %v5238 = vpack.c.bf16 %v5230, %v5229
        %v5239 = vld [vmem:[#allocation8] sm:$0xf]
        %v5240 = vld [vmem:[#allocation8 + $0x4] sm:$0xf]
        %v5241 = vld [vmem:[#allocation8 + $0x8] sm:$0xf]
        %v5242 = vld [vmem:[#allocation8 + $0xc] sm:$0xf]
        %v5243 = vlaneseq
        %v5244 = vshrl.u32 %v5243, 7
        %v5245 = vsub.s32 4, %v5244
        %v5246 = vrot.slane %v416, %v5245
        %v5251 = vunpack.c.l.b16 %v5239
        %v5252 = vunpack.c.l.b16 %v5240
        %v5253 = vunpack.c.l.b16 %v5241
        %v5254 = vunpack.c.l.b16 %v5242
        %v5255 = vpack.c.b16 %v5252, %v5251
        %v5256 = vpack.c.b16 %v5254, %v5253
        %v5260 = vsel %vm417, %v5231, 0
        %v5263 = vsel %vm417, %v5232, 0
        %v5266 = vsel %vm417, %v5233, 0
        %v5269 = vsel %vm417, %v5234, 0
        %v5272 = vsel %vm417, %v5235, 0
        %v5275 = vsel %vm417, %v5236, 0
        %v5278 = vsel %vm417, %v5237, 0
        %v5281 = vsel %vm417, %v5238, 0
        %5283 = vmatprep.subr.bf16.mxu0 0
        %5284 = vmatpush1.bf16.msra.mxu0 0
        %5285 = vmatprep.subr.bf16.mxu0 0
        %5286 = vmatpush1.bf16.msra.mxu0 0
        %5287 = vmatprep.subr.bf16.mxu0 0
        %5288 = vmatpush1.bf16.msra.mxu0 0
        %5289 = vmatprep.subr.bf16.mxu0 0
        %5290 = vmatpush1.bf16.msra.mxu0 0
        %5291 = vmatprep.subr.bf16.mxu0 0
        %5292 = vmatpush1.bf16.msra.mxu0 0
        %5293 = vmatprep.subr.bf16.mxu0 0
        %5294 = vmatpush1.bf16.msra.mxu0 0
        %5295 = vmatprep.subr.bf16.mxu0 0
        %5296 = vmatpush1.bf16.msra.mxu0 %v5256
        %5297 = vmatprep.subr.bf16.mxu0 0
        %5298 = vmatpush1.bf16.msra.mxu0 %v5255
        %5299 = vmatprep.subr.bf16.mxu0 0
        %5300 = vmatpush2.bf16.msra.mxu0 0
        %5301 = vmatprep.subr.bf16.mxu0 0
        %5302 = vmatpush2.bf16.msra.mxu0 0
        %5303 = vmatprep.subr.bf16.mxu0 0
        %5304 = vmatpush2.bf16.msra.mxu0 0
        %5305 = vmatprep.subr.bf16.mxu0 0
        %5306 = vmatpush2.bf16.msra.mxu0 0
        %5307 = vmatprep.subr.bf16.mxu0 0
        %5308 = vmatpush2.bf16.msra.mxu0 0
        %5309 = vmatprep.subr.bf16.mxu0 0
        %5310 = vmatpush2.bf16.msra.mxu0 0
        %5311 = vmatprep.subr.bf16.mxu0 0
        %5312 = vmatpush2.bf16.msra.mxu0 0
        %5313 = vmatprep.subr.bf16.mxu0 0
        %5314 = vmatpush2.bf16.msra.mxu0 0
        %5315 = vmatprep.mubr.bf16.mxu0 0
        %5316 = vmatmul.mubr.bf16.gmra.mxu0 %v5260
        %v5317 = vpop.f32.mrf.mxu0
        %v5318 = vadd.f32 %v5246, %v5317
        %v5319 = vpop.f32.mrf.mxu0
        %v5320 = vpop.f32.mrf.mxu0
        %v5321 = vadd.f32 %v5246, %v5320
        %v5322 = vpop.f32.mrf.mxu0
        %5323 = vmatprep.mubr.bf16.mxu0 0
        %5324 = vmatmul.mubr.bf16.gmra.mxu0 %v5263
        %v5325 = vpop.f32.mrf.mxu0
        %v5326 = vadd.f32 %v5246, %v5325
        %v5327 = vpop.f32.mrf.mxu0
        %v5328 = vpop.f32.mrf.mxu0
        %v5329 = vadd.f32 %v5246, %v5328
        %v5330 = vpop.f32.mrf.mxu0
        %5331 = vmatprep.mubr.bf16.mxu0 0
        %5332 = vmatmul.mubr.bf16.gmra.mxu0 %v5266
        %v5333 = vpop.f32.mrf.mxu0
        %v5334 = vadd.f32 %v5246, %v5333
        %v5335 = vpop.f32.mrf.mxu0
        %v5336 = vpop.f32.mrf.mxu0
        %v5337 = vadd.f32 %v5246, %v5336
        %v5338 = vpop.f32.mrf.mxu0
        %5339 = vmatprep.mubr.bf16.mxu0 0
        %5340 = vmatmul.mubr.bf16.gmra.mxu0 %v5269
        %v5341 = vpop.f32.mrf.mxu0
        %v5342 = vadd.f32 %v5246, %v5341
        %v5343 = vpop.f32.mrf.mxu0
        %v5344 = vpop.f32.mrf.mxu0
        %v5345 = vadd.f32 %v5246, %v5344
        %v5346 = vpop.f32.mrf.mxu0
        %5347 = vmatprep.mubr.bf16.mxu0 0
        %5348 = vmatmul.mubr.bf16.gmra.mxu0 %v5272
        %v5349 = vpop.f32.mrf.mxu0
        %v5350 = vadd.f32 %v5246, %v5349
        %v5351 = vpop.f32.mrf.mxu0
        %v5352 = vpop.f32.mrf.mxu0
        %v5353 = vadd.f32 %v5246, %v5352
        %v5354 = vpop.f32.mrf.mxu0
        %5355 = vmatprep.mubr.bf16.mxu0 0
        %5356 = vmatmul.mubr.bf16.gmra.mxu0 %v5275
        %v5357 = vpop.f32.mrf.mxu0
        %v5358 = vadd.f32 %v5246, %v5357
        %v5359 = vpop.f32.mrf.mxu0
        %v5360 = vpop.f32.mrf.mxu0
        %v5361 = vadd.f32 %v5246, %v5360
        %v5362 = vpop.f32.mrf.mxu0
        %5363 = vmatprep.mubr.bf16.mxu0 0
        %5364 = vmatmul.mubr.bf16.gmra.mxu0 %v5278
        %v5365 = vpop.f32.mrf.mxu0
        %v5366 = vadd.f32 %v5246, %v5365
        %v5367 = vpop.f32.mrf.mxu0
        %v5368 = vpop.f32.mrf.mxu0
        %v5369 = vadd.f32 %v5246, %v5368
        %v5370 = vpop.f32.mrf.mxu0
        %5371 = vmatprep.mubr.bf16.mxu0 0
        %5372 = vmatmul.mubr.bf16.gmra.mxu0 %v5281
        %v5373 = vpop.f32.mrf.mxu0
        %v5374 = vadd.f32 %v5246, %v5373
        %v5375 = vpop.f32.mrf.mxu0
        %v5376 = vpop.f32.mrf.mxu0
        %v5377 = vadd.f32 %v5246, %v5376
        %v5378 = vpop.f32.mrf.mxu0
        %5379 = vdwg.mxu0
        %v5380 = vadd.f32 %v5318, %v399
        %v5381 = vadd.f32 %v5321, %v400
        %v5382 = vadd.f32 %v5326, %v401
        %v5383 = vadd.f32 %v5329, %v402
        %v5384 = vadd.f32 %v5334, %v403
        %v5385 = vadd.f32 %v5337, %v404
        %v5386 = vadd.f32 %v5342, %v405
        %v5387 = vadd.f32 %v5345, %v406
        %v5388 = vadd.f32 %v5350, %v407
        %v5389 = vadd.f32 %v5353, %v408
        %v5390 = vadd.f32 %v5358, %v409
        %v5391 = vadd.f32 %v5361, %v410
        %v5392 = vadd.f32 %v5366, %v411
        %v5393 = vadd.f32 %v5369, %v412
        %v5394 = vadd.f32 %v5374, %v413
        %v5395 = vadd.f32 %v5377, %v414
        %5396 = vst.msk [vmem:[%s395] sm:$0xff] %vm417, %v5380
        %5397 = vst.msk [vmem:[%s395 + $0x8] sm:$0xff] %vm417, %v5381
        %5398 = vst.msk [vmem:[%s395 + $0x10] sm:$0xff] %vm417, %v5382
        %5399 = vst.msk [vmem:[%s395 + $0x18] sm:$0xff] %vm417, %v5383
        %5400 = vst.msk [vmem:[%s395 + $0x20] sm:$0xff] %vm417, %v5384
        %5401 = vst.msk [vmem:[%s395 + $0x28] sm:$0xff] %vm417, %v5385
        %5402 = vst.msk [vmem:[%s395 + $0x30] sm:$0xff] %vm417, %v5386
        %5403 = vst.msk [vmem:[%s395 + $0x38] sm:$0xff] %vm417, %v5387
        %5404 = vst.msk [vmem:[%s395 + $0x40] sm:$0xff] %vm417, %v5388
        %5405 = vst.msk [vmem:[%s395 + $0x48] sm:$0xff] %vm417, %v5389
        %5406 = vst.msk [vmem:[%s395 + $0x50] sm:$0xff] %vm417, %v5390
        %5407 = vst.msk [vmem:[%s395 + $0x58] sm:$0xff] %vm417, %v5391
        %5408 = vst.msk [vmem:[%s395 + $0x60] sm:$0xff] %vm417, %v5392
        %5409 = vst.msk [vmem:[%s395 + $0x68] sm:$0xff] %vm417, %v5393
        %5410 = vst.msk [vmem:[%s395 + $0x70] sm:$0xff] %vm417, %v5394
        %5411 = vst.msk [vmem:[%s395 + $0x78] sm:$0xff] %vm417, %v5395
        %s5412 = sand.u32 %s230, 1
        %s5413 = scalar_lea.sflag [#allocation4], %s5412
        %s5414 = sand.u32 %s230, 1
        %s5415 = smul.addr %s5414, 128
        %s5416 = scalar_lea.vmem [#allocation10], %s5415
        // Predicated region
        $region73: #{_lambda_.1} parent=55 // pred_check
          %p5417 = pneg %p240
        $region74: #{_lambda_.1} parent=55 // pred_check_branch
          %5419 = sbr.rel (%p5417) target = $region76
        $region75: #{_lambda_.1} parent=55 // pred_region
          %s5420 = smul.u32 2, %s28
          %s5422 = ssub.s32 2048, 2048
          %5423 = vsyncadd %s5413, %s5422
          %s5424 = smul.addr %s5420, 8
          %s5425 = smul.addr %s5424, 128
          %s5426 = scalar_lea.hbm %s9, %s5425
          %s5427 = sshll.u32 %s5416, 4
          %s5428 = int_to_ptr.vmem [resolvable:$true] %s5427
          %5433 = dma.vmem_to_hbm [thread:$0]  %s5428, 2048, %s5426, %s5413, 128, 128, 8
        $region76: #{_lambda_.1} parent=55 // pred_fallthru
          _
      $region56: #{_lambda_.1} parent=5 // pred_fallthru
        _
      %p5434 = scmp.le.s32.totalorder 2, %s23
      // Predicated region
      $region77: #{_lambda_.1} parent=5 // pred_check
        %p5435 = pneg %p5434
      $region78: #{_lambda_.1} parent=5 // pred_check_branch
        %5437 = sbr.rel (%p5435) target = $region80
      $region79: #{_lambda_.1} parent=5 // pred_region
        %s5438 = ssub.s32 %s23, 2
        // Predicated region
        $region81: #{_lambda_.1} parent=79 // pred_check
          %p5439 = pneg %p246
        $region82: #{_lambda_.1} parent=79 // pred_check_branch
          %5441 = sbr.rel (%p5439) target = $region84
        $region83: #{_lambda_.1} parent=79 // pred_region
          %s5442 = sand.u32 %s231, 1
          %s5443 = scalar_lea.sflag [#allocation4], %s5442
          %s5444 = sand.u32 %s231, 1
          %s5445 = smul.addr %s5444, 128
          %s5446 = scalar_lea.vmem [#allocation10], %s5445
          %5447 = dma.done %s5443, 2048
        $region84: #{_lambda_.1} parent=79 // pred_fallthru
          _
      $region80: #{_lambda_.1} parent=5 // pred_fallthru
        _
    $region6: #{_lambda_.1} parent=1 // loop_footer
      %s27 = sadd.s32 1, %s23
    $region7: #{_lambda_.1} parent=1 // loop_footer_branch
      %22 = sbr.rel target = $region3
    $region8: #{_lambda_.1} parent=1 // loop_exit
      _
    %5448 = vsyncpa [#allocation3], 1
    %s5449 = scalar_lea.sflag [#allocation3], 1
    %5450 = vsyncpa %s5449, 1
    %5451 = vsyncpa [#allocation6], 1
    %5452 = vsyncpa [#allocation9], 1
    %5453 = vsyncpa [#allocation4], 1
    %s5454 = scalar_lea.sflag [#allocation4], 1
    %5455 = vsyncpa %s5454, 1

</llo_original>
